<compile_context>
chip_gen: v5e
topology: v5e:2x2
jax: 0.10.0
libtpu: 0.0.40
codegen_flags: <defaults>
</compile_context>

<pallas_src>
import functools
import math

import jax
import jax.numpy as jnp
from jax.experimental import pallas as pl
from jax.experimental.pallas import tpu as pltpu

# Module-consistent (small) dimensions: d_model/d_ff/n_head/d_qkv match the
# PyTorch defaults; n_layers/batch/seq kept small for a quick run.
D_MODEL = 256
D_FF = 1024
N_HEAD = 4
D_QKV = 32
N_LAYERS = 2
BATCH = 2
SEQ = 16


def _layernorm(x, gamma, beta, eps):
    mu = jnp.mean(x, axis=-1, keepdims=True)
    xc = x - mu
    var = jnp.mean(xc * xc, axis=-1, keepdims=True)
    return xc * jax.lax.rsqrt(var + eps) * gamma + beta


def encoder_kernel(x_ref, bias_ref, wqkv_ref, wo_ref, ln1g_ref, ln1b_ref,
                   w1_ref, b1_ref, w2_ref, b2_ref, ln2g_ref, ln2b_ref, o_ref,
                   *, n_layers, n_head, d_qkv, seq):
    hd = n_head * d_qkv

    x = x_ref[0]                                           # [L, D] f32

    # Hoist the mask broadcast once; reused n_head * n_layers times
    # (JAX does not CSE broadcast_in_dim inside loops).
    bias = jnp.broadcast_to(bias_ref[0], (seq, seq))       # [L, L] f32

    # Shared lane-dense bf16 weights -- read once, reused by every layer.
    wqkv = wqkv_ref[...]                                   # [D, 3*hd] bf16 (Q pre-scaled)
    wo = wo_ref[...]                                       # [hd, D]   bf16
    w1 = w1_ref[...]                                       # [D, F]    bf16
    w2 = w2_ref[...]                                       # [F, D]    bf16
    ln1g = ln1g_ref[...]
    ln1b = ln1b_ref[...]
    ln2g = ln2g_ref[...]
    ln2b = ln2b_ref[...]
    b1 = b1_ref[...]
    b2 = b2_ref[...]

    for _ in range(n_layers):     # layers reuse the SAME weights (module spec)
        # ---- fused QKV projection: one 128-lane-dense MXU matmul.
        qkv = jnp.dot(x.astype(jnp.bfloat16), wqkv,
                      preferred_element_type=jnp.float32)  # [L, 3*hd] f32
        q = qkv[:, :hd].astype(jnp.bfloat16)
        k = qkv[:, hd:2 * hd].astype(jnp.bfloat16)
        v = qkv[:, 2 * hd:].astype(jnp.bfloat16)

        # ---- per-head score/softmax (inherently [L, L]); heads static-unrolled.
        heads = []
        for h in range(n_head):
            sl = slice(h * d_qkv, (h + 1) * d_qkv)
            s = jax.lax.dot_general(                        # q_h @ k_h^T
                q[:, sl], k[:, sl],
                dimension_numbers=(((1,), (1,)), ((), ())),
                preferred_element_type=jnp.float32) + bias  # scale folded into Wq
            m = jnp.max(s, axis=-1, keepdims=True)
            p = jnp.exp(s - m)
            inv = pl.reciprocal(jnp.sum(p, axis=-1, keepdims=True), approx=True)
            attn = p * inv
            heads.append(jnp.dot(attn.astype(jnp.bfloat16), v[:, sl],
                                 preferred_element_type=jnp.float32))
        prob = jnp.concatenate(heads, axis=-1)              # [L, hd] f32

        # ---- fused output projection + residual + LayerNorm (eps=1e-5).
        mc = jnp.dot(prob.astype(jnp.bfloat16), wo,
                     preferred_element_type=jnp.float32)    # [L, D] f32
        h1 = _layernorm(mc + x, ln1g, ln1b, 1e-5)

        # ---- position-wise FFN + residual + LayerNorm (eps=1e-6).
        f1 = jnp.maximum(
            jnp.dot(h1.astype(jnp.bfloat16), w1,
                    preferred_element_type=jnp.float32) + b1, 0.0)
        f2 = jnp.dot(f1.astype(jnp.bfloat16), w2,
                     preferred_element_type=jnp.float32) + b2
        x = _layernorm(f2 + h1, ln2g, ln2b, 1e-6)

    o_ref[0] = x


def transformer_encoder(x, mask, params, n_layers=N_LAYERS):
    """Full encoder: one pallas_call running all layers, grid over the batch."""
    (wq, wk, wv, wo, ln1g, ln1b, w1t, b1, w2t, b2, ln2g, ln2b) = params
    b, l, d = x.shape
    hd = N_HEAD * D_QKV
    scale = 1.0 / math.sqrt(D_QKV)

    # Fuse heads into lane-dense 2-D weights (128-wide MXU feeds) and fold the
    # 1/sqrt(d_qkv) score scale into the Q weights (done once, on weights).
    def fuse(w):                                   # [H, D, dq] -> [D, H*dq]
        return jnp.transpose(w, (1, 0, 2)).reshape(d, hd)

    wqkv = jnp.concatenate([fuse(wq) * scale, fuse(wk), fuse(wv)],
                           axis=1).astype(jnp.bfloat16)      # [D, 3*hd]
    wo2d = wo.reshape(hd, d).astype(jnp.bfloat16)            # [hd, D]
    w1b = w1t.astype(jnp.bfloat16)                           # [D, F]
    w2b = w2t.astype(jnp.bfloat16)                           # [F, D]

    # Additive padding-mask bias (matches masked_fill(mask == 0, -1e9)).
    bias = jnp.where(mask == 0, -1e9, 0.0).astype(jnp.float32)[:, None, :]

    weights = (wqkv, wo2d, ln1g, ln1b, w1b, b1, w2b, b2, ln2g, ln2b)

    def full_spec(arr):
        nd = arr.ndim
        return pl.BlockSpec(arr.shape, lambda i, _nd=nd: (0,) * _nd)

    in_specs = [
        pl.BlockSpec((1, l, d), lambda i: (i, 0, 0)),        # x
        pl.BlockSpec((1, 1, l), lambda i: (i, 0, 0)),        # mask bias
    ] + [full_spec(p) for p in weights]

    kernel = functools.partial(encoder_kernel, n_layers=n_layers,
                               n_head=N_HEAD, d_qkv=D_QKV, seq=l)

    return pl.pallas_call(
        kernel,
        out_shape=jax.ShapeDtypeStruct((b, l, d), jnp.float32),
        grid_spec=pltpu.PrefetchScalarGridSpec(
            num_scalar_prefetch=0,
            grid=(b,),
            in_specs=in_specs,
            out_specs=pl.BlockSpec((1, l, d), lambda i: (i, 0, 0)),
        ),
        compiler_params=pltpu.CompilerParams(
            dimension_semantics=("parallel",)),  # v7x: 2 TCs split the batch
    )(x, bias, *weights)


# ----------------------------- pure-JAX reference ---------------------------
def reference_encoder(x, mask, params, n_layers=N_LAYERS):
    (wq, wk, wv, wo, ln1g, ln1b, w1t, b1, w2t, b2, ln2g, ln2b) = params
    bias = jnp.where(mask == 0, -1e9, 0.0).astype(jnp.float32)[:, None, None, :]
    for _ in range(n_layers):
        q = jnp.einsum('blc,hcf->bhlf', x, wq)
        k = jnp.einsum('blc,hcf->bhlf', x, wk)
        v = jnp.einsum('blc,hcf->bhlf', x, wv)
        logits = jnp.einsum('bhqd,bhkd->bhqk', q, k) / math.sqrt(D_QKV) + bias
        attn = jax.nn.softmax(logits, axis=-1)
        prob = jnp.einsum('bhqk,bhkd->bhqd', attn, v)
        mc = jnp.einsum('bhqd,hdm->bqm', prob, wo)
        h1 = _layernorm(mc + x, ln1g, ln1b, 1e-5)
        f1 = jax.nn.relu(h1 @ w1t + b1)
        f2 = f1 @ w2t + b2
        x = _layernorm(f2 + h1, ln2g, ln2b, 1e-6)
    return x


# ----------------------------- parameter init -------------------------------
def init_params(key):
    ks = jax.random.split(key, 8)

    def xavier(k, shape, fan_in, fan_out):
        std = math.sqrt(2.0 / (fan_in + fan_out))
        return (std * jax.random.normal(k, shape)).astype(jnp.float32)

    wq = xavier(ks[0], (N_HEAD, D_MODEL, D_QKV), D_MODEL * D_QKV, N_HEAD * D_QKV)
    wk = xavier(ks[1], (N_HEAD, D_MODEL, D_QKV), D_MODEL * D_QKV, N_HEAD * D_QKV)
    wv = xavier(ks[2], (N_HEAD, D_MODEL, D_QKV), D_MODEL * D_QKV, N_HEAD * D_QKV)
    wo = xavier(ks[3], (N_HEAD, D_QKV, D_MODEL), D_QKV * D_MODEL, N_HEAD * D_MODEL)

    ln1g = jnp.ones((1, D_MODEL), jnp.float32)
    ln1b = jnp.zeros((1, D_MODEL), jnp.float32)
    ln2g = jnp.ones((1, D_MODEL), jnp.float32)
    ln2b = jnp.zeros((1, D_MODEL), jnp.float32)

    # nn.Linear stores weight as [out, in]; we pass the transposed [in, out].
    w1t = (jax.random.normal(ks[4], (D_MODEL, D_FF)) / math.sqrt(D_MODEL)
           ).astype(jnp.float32)
    b1 = (0.01 * jax.random.normal(ks[5], (1, D_FF))).astype(jnp.float32)
    w2t = (jax.random.normal(ks[6], (D_FF, D_MODEL)) / math.sqrt(D_FF)
           ).astype(jnp.float32)
    b2 = (0.01 * jax.random.normal(ks[7], (1, D_MODEL))).astype(jnp.float32)

    return (wq, wk, wv, wo, ln1g, ln1b, w1t, b1, w2t, b2, ln2g, ln2b)


if __name__ == "__main__":
    key = jax.random.PRNGKey(0)
    k_x, k_p = jax.random.split(key)

    x = jax.random.normal(k_x, (BATCH, SEQ, D_MODEL), jnp.float32)
    # padding mask: 1 = real token, 0 = pad (second sequence has 4 pad tokens)
    mask = jnp.ones((BATCH, SEQ), jnp.int32)
    mask = mask.at[1, SEQ - 4:].set(0)

    params = init_params(k_p)

    out = jax.block_until_ready(transformer_encoder(x, mask, params))
    ref = reference_encoder(x, mask, params)

    assert out.shape == (BATCH, SEQ, D_MODEL)
    # Tolerance accounts for bf16 MXU operands (f32 accumulation) vs the
    # pure-f32 reference.
    assert jnp.allclose(out, ref, rtol=5e-2, atol=5e-2), (
        "mismatch vs pure-JAX reference")

    print("KERNEL_OK")
</pallas_src>

<mosaic_0001>
module attributes {stable_mosaic.version = 11 : i64} {
  func.func @encoder_kernel(%arg0: i32, %arg1: memref<1x16x256xf32, #tpu.memory_space<vmem>>, %arg2: memref<1x1x16xf32, #tpu.memory_space<vmem>>, %arg3: memref<256x384xbf16, #tpu.memory_space<vmem>>, %arg4: memref<128x256xbf16, #tpu.memory_space<vmem>>, %arg5: memref<1x256xf32, #tpu.memory_space<vmem>>, %arg6: memref<1x256xf32, #tpu.memory_space<vmem>>, %arg7: memref<256x1024xbf16, #tpu.memory_space<vmem>>, %arg8: memref<1x1024xf32, #tpu.memory_space<vmem>>, %arg9: memref<1024x256xbf16, #tpu.memory_space<vmem>>, %arg10: memref<1x256xf32, #tpu.memory_space<vmem>>, %arg11: memref<1x256xf32, #tpu.memory_space<vmem>>, %arg12: memref<1x256xf32, #tpu.memory_space<vmem>>, %arg13: memref<1x16x256xf32, #tpu.memory_space<vmem>>) attributes {dimension_semantics = [#tpu.dimension_semantics<parallel>], iteration_bounds = array<i64: 2>, scalar_prefetch = 0 : i64, scratch_operands = 0 : i64, tpu.core_type = #tpu.core_type<tc>, window_params = [{transform_indices = @transform_0, window_bounds = array<i64: 1, 16, 256>}, {transform_indices = @transform_1, window_bounds = array<i64: 1, 1, 16>}, {pipeline_mode = #tpu.pipeline_mode<synchronous>, transform_indices = @transform_2, window_bounds = array<i64: 256, 384>}, {pipeline_mode = #tpu.pipeline_mode<synchronous>, transform_indices = @transform_3, window_bounds = array<i64: 128, 256>}, {pipeline_mode = #tpu.pipeline_mode<synchronous>, transform_indices = @transform_4, window_bounds = array<i64: 1, 256>}, {pipeline_mode = #tpu.pipeline_mode<synchronous>, transform_indices = @transform_5, window_bounds = array<i64: 1, 256>}, {pipeline_mode = #tpu.pipeline_mode<synchronous>, transform_indices = @transform_6, window_bounds = array<i64: 256, 1024>}, {pipeline_mode = #tpu.pipeline_mode<synchronous>, transform_indices = @transform_7, window_bounds = array<i64: 1, 1024>}, {pipeline_mode = #tpu.pipeline_mode<synchronous>, transform_indices = @transform_8, window_bounds = array<i64: 1024, 256>}, {pipeline_mode = #tpu.pipeline_mode<synchronous>, transform_indices = @transform_9, window_bounds = array<i64: 1, 256>}, {pipeline_mode = #tpu.pipeline_mode<synchronous>, transform_indices = @transform_10, window_bounds = array<i64: 1, 256>}, {pipeline_mode = #tpu.pipeline_mode<synchronous>, transform_indices = @transform_11, window_bounds = array<i64: 1, 256>}, {transform_indices = @transform_12, window_bounds = array<i64: 1, 16, 256>}]} {
    %c0 = arith.constant 0 : index
    %c0_0 = arith.constant 0 : index
    %c0_1 = arith.constant 0 : index
    %0 = vector.load %arg1[%c0, %c0_0, %c0_1] : memref<1x16x256xf32, #tpu.memory_space<vmem>>, vector<1x16x256xf32>
    %1 = vector.shape_cast %0 : vector<1x16x256xf32> to vector<16x256xf32>
    %c0_2 = arith.constant 0 : index
    %c0_3 = arith.constant 0 : index
    %c0_4 = arith.constant 0 : index
    %2 = vector.load %arg2[%c0_2, %c0_3, %c0_4] : memref<1x1x16xf32, #tpu.memory_space<vmem>>, vector<1x1x16xf32>
    %3 = vector.shape_cast %2 : vector<1x1x16xf32> to vector<1x16xf32>
    %4 = vector.shape_cast %3 : vector<1x16xf32> to vector<1x16xf32>
    %5 = vector.broadcast %4 : vector<1x16xf32> to vector<16x16xf32>
    %c0_5 = arith.constant 0 : index
    %c0_6 = arith.constant 0 : index
    %6 = vector.load %arg3[%c0_5, %c0_6] : memref<256x384xbf16, #tpu.memory_space<vmem>>, vector<256x384xbf16>
    %c0_7 = arith.constant 0 : index
    %c0_8 = arith.constant 0 : index
    %7 = vector.load %arg4[%c0_7, %c0_8] : memref<128x256xbf16, #tpu.memory_space<vmem>>, vector<128x256xbf16>
    %c0_9 = arith.constant 0 : index
    %c0_10 = arith.constant 0 : index
    %8 = vector.load %arg7[%c0_9, %c0_10] : memref<256x1024xbf16, #tpu.memory_space<vmem>>, vector<256x1024xbf16>
    %c0_11 = arith.constant 0 : index
    %c0_12 = arith.constant 0 : index
    %9 = vector.load %arg9[%c0_11, %c0_12] : memref<1024x256xbf16, #tpu.memory_space<vmem>>, vector<1024x256xbf16>
    %c0_13 = arith.constant 0 : index
    %c0_14 = arith.constant 0 : index
    %10 = vector.load %arg5[%c0_13, %c0_14] : memref<1x256xf32, #tpu.memory_space<vmem>>, vector<1x256xf32>
    %c0_15 = arith.constant 0 : index
    %c0_16 = arith.constant 0 : index
    %11 = vector.load %arg6[%c0_15, %c0_16] : memref<1x256xf32, #tpu.memory_space<vmem>>, vector<1x256xf32>
    %c0_17 = arith.constant 0 : index
    %c0_18 = arith.constant 0 : index
    %12 = vector.load %arg11[%c0_17, %c0_18] : memref<1x256xf32, #tpu.memory_space<vmem>>, vector<1x256xf32>
    %c0_19 = arith.constant 0 : index
    %c0_20 = arith.constant 0 : index
    %13 = vector.load %arg12[%c0_19, %c0_20] : memref<1x256xf32, #tpu.memory_space<vmem>>, vector<1x256xf32>
    %c0_21 = arith.constant 0 : index
    %c0_22 = arith.constant 0 : index
    %14 = vector.load %arg8[%c0_21, %c0_22] : memref<1x1024xf32, #tpu.memory_space<vmem>>, vector<1x1024xf32>
    %c0_23 = arith.constant 0 : index
    %c0_24 = arith.constant 0 : index
    %15 = vector.load %arg10[%c0_23, %c0_24] : memref<1x256xf32, #tpu.memory_space<vmem>>, vector<1x256xf32>
    %16 = arith.truncf %1 : vector<16x256xf32> to vector<16x256xbf16>
    %cst = arith.constant dense<0.000000e+00> : vector<16x384xf32>
    %17 = tpu.matmul %16, %6, %cst {dimension_numbers = #tpu.dot_dimension_numbers<[1], [0], [0], [1], [0, 0, 1, 1], [], []>} : vector<16x256xbf16>, vector<256x384xbf16>, vector<16x384xf32> -> vector<16x384xf32>
    %18 = vector.extract_strided_slice %17 {offsets = [0, 0], sizes = [16, 128], strides = [1, 1]} : vector<16x384xf32> to vector<16x128xf32>
    %19 = arith.truncf %18 : vector<16x128xf32> to vector<16x128xbf16>
    %20 = vector.extract_strided_slice %17 {offsets = [0, 128], sizes = [16, 128], strides = [1, 1]} : vector<16x384xf32> to vector<16x128xf32>
    %21 = arith.truncf %20 : vector<16x128xf32> to vector<16x128xbf16>
    %22 = vector.extract_strided_slice %17 {offsets = [0, 256], sizes = [16, 128], strides = [1, 1]} : vector<16x384xf32> to vector<16x128xf32>
    %23 = arith.truncf %22 : vector<16x128xf32> to vector<16x128xbf16>
    %24 = vector.extract_strided_slice %19 {offsets = [0, 0], sizes = [16, 32], strides = [1, 1]} : vector<16x128xbf16> to vector<16x32xbf16>
    %25 = vector.extract_strided_slice %21 {offsets = [0, 0], sizes = [16, 32], strides = [1, 1]} : vector<16x128xbf16> to vector<16x32xbf16>
    %cst_25 = arith.constant dense<0.000000e+00> : vector<16x16xf32>
    %26 = tpu.matmul %24, %25, %cst_25 {dimension_numbers = #tpu.dot_dimension_numbers<[1], [1], [0], [0], [0, 0, 1, 0], [], []>} : vector<16x32xbf16>, vector<16x32xbf16>, vector<16x16xf32> -> vector<16x16xf32>
    %27 = arith.addf %26, %5 : vector<16x16xf32>
    %cst_26 = arith.constant dense<0xFF800000> : vector<16xf32>
    %28 = vector.multi_reduction <maximumf>, %27, %cst_26 [1] : vector<16x16xf32> to vector<16xf32>
    %29 = vector.shape_cast %28 : vector<16xf32> to vector<16x1xf32>
    %30 = vector.broadcast %29 : vector<16x1xf32> to vector<16x16xf32>
    %31 = arith.subf %27, %30 : vector<16x16xf32>
    %32 = math.exp %31 : vector<16x16xf32>
    %cst_27 = arith.constant dense<0.000000e+00> : vector<16xf32>
    %33 = vector.multi_reduction <add>, %32, %cst_27 [1] : vector<16x16xf32> to vector<16xf32>
    %34 = vector.shape_cast %33 : vector<16xf32> to vector<16x1xf32>
    %35 = tpu.reciprocal %34 {approx = true} : vector<16x1xf32> -> vector<16x1xf32>
    %36 = vector.broadcast %35 : vector<16x1xf32> to vector<16x16xf32>
    %37 = arith.mulf %32, %36 : vector<16x16xf32>
    %38 = arith.truncf %37 : vector<16x16xf32> to vector<16x16xbf16>
    %39 = vector.extract_strided_slice %23 {offsets = [0, 0], sizes = [16, 32], strides = [1, 1]} : vector<16x128xbf16> to vector<16x32xbf16>
    %cst_28 = arith.constant dense<0.000000e+00> : vector<16x32xf32>
    %40 = tpu.matmul %38, %39, %cst_28 {dimension_numbers = #tpu.dot_dimension_numbers<[1], [0], [0], [1], [0, 0, 1, 1], [], []>} : vector<16x16xbf16>, vector<16x32xbf16>, vector<16x32xf32> -> vector<16x32xf32>
    %41 = vector.extract_strided_slice %19 {offsets = [0, 32], sizes = [16, 32], strides = [1, 1]} : vector<16x128xbf16> to vector<16x32xbf16>
    %42 = vector.extract_strided_slice %21 {offsets = [0, 32], sizes = [16, 32], strides = [1, 1]} : vector<16x128xbf16> to vector<16x32xbf16>
    %cst_29 = arith.constant dense<0.000000e+00> : vector<16x16xf32>
    %43 = tpu.matmul %41, %42, %cst_29 {dimension_numbers = #tpu.dot_dimension_numbers<[1], [1], [0], [0], [0, 0, 1, 0], [], []>} : vector<16x32xbf16>, vector<16x32xbf16>, vector<16x16xf32> -> vector<16x16xf32>
    %44 = arith.addf %43, %5 : vector<16x16xf32>
    %cst_30 = arith.constant dense<0xFF800000> : vector<16xf32>
    %45 = vector.multi_reduction <maximumf>, %44, %cst_30 [1] : vector<16x16xf32> to vector<16xf32>
    %46 = vector.shape_cast %45 : vector<16xf32> to vector<16x1xf32>
    %47 = vector.broadcast %46 : vector<16x1xf32> to vector<16x16xf32>
    %48 = arith.subf %44, %47 : vector<16x16xf32>
    %49 = math.exp %48 : vector<16x16xf32>
    %cst_31 = arith.constant dense<0.000000e+00> : vector<16xf32>
    %50 = vector.multi_reduction <add>, %49, %cst_31 [1] : vector<16x16xf32> to vector<16xf32>
    %51 = vector.shape_cast %50 : vector<16xf32> to vector<16x1xf32>
    %52 = tpu.reciprocal %51 {approx = true} : vector<16x1xf32> -> vector<16x1xf32>
    %53 = vector.broadcast %52 : vector<16x1xf32> to vector<16x16xf32>
    %54 = arith.mulf %49, %53 : vector<16x16xf32>
    %55 = arith.truncf %54 : vector<16x16xf32> to vector<16x16xbf16>
    %56 = vector.extract_strided_slice %23 {offsets = [0, 32], sizes = [16, 32], strides = [1, 1]} : vector<16x128xbf16> to vector<16x32xbf16>
    %cst_32 = arith.constant dense<0.000000e+00> : vector<16x32xf32>
    %57 = tpu.matmul %55, %56, %cst_32 {dimension_numbers = #tpu.dot_dimension_numbers<[1], [0], [0], [1], [0, 0, 1, 1], [], []>} : vector<16x16xbf16>, vector<16x32xbf16>, vector<16x32xf32> -> vector<16x32xf32>
    %58 = vector.extract_strided_slice %19 {offsets = [0, 64], sizes = [16, 32], strides = [1, 1]} : vector<16x128xbf16> to vector<16x32xbf16>
    %59 = vector.extract_strided_slice %21 {offsets = [0, 64], sizes = [16, 32], strides = [1, 1]} : vector<16x128xbf16> to vector<16x32xbf16>
    %cst_33 = arith.constant dense<0.000000e+00> : vector<16x16xf32>
    %60 = tpu.matmul %58, %59, %cst_33 {dimension_numbers = #tpu.dot_dimension_numbers<[1], [1], [0], [0], [0, 0, 1, 0], [], []>} : vector<16x32xbf16>, vector<16x32xbf16>, vector<16x16xf32> -> vector<16x16xf32>
    %61 = arith.addf %60, %5 : vector<16x16xf32>
    %cst_34 = arith.constant dense<0xFF800000> : vector<16xf32>
    %62 = vector.multi_reduction <maximumf>, %61, %cst_34 [1] : vector<16x16xf32> to vector<16xf32>
    %63 = vector.shape_cast %62 : vector<16xf32> to vector<16x1xf32>
    %64 = vector.broadcast %63 : vector<16x1xf32> to vector<16x16xf32>
    %65 = arith.subf %61, %64 : vector<16x16xf32>
    %66 = math.exp %65 : vector<16x16xf32>
    %cst_35 = arith.constant dense<0.000000e+00> : vector<16xf32>
    %67 = vector.multi_reduction <add>, %66, %cst_35 [1] : vector<16x16xf32> to vector<16xf32>
    %68 = vector.shape_cast %67 : vector<16xf32> to vector<16x1xf32>
    %69 = tpu.reciprocal %68 {approx = true} : vector<16x1xf32> -> vector<16x1xf32>
    %70 = vector.broadcast %69 : vector<16x1xf32> to vector<16x16xf32>
    %71 = arith.mulf %66, %70 : vector<16x16xf32>
    %72 = arith.truncf %71 : vector<16x16xf32> to vector<16x16xbf16>
    %73 = vector.extract_strided_slice %23 {offsets = [0, 64], sizes = [16, 32], strides = [1, 1]} : vector<16x128xbf16> to vector<16x32xbf16>
    %cst_36 = arith.constant dense<0.000000e+00> : vector<16x32xf32>
    %74 = tpu.matmul %72, %73, %cst_36 {dimension_numbers = #tpu.dot_dimension_numbers<[1], [0], [0], [1], [0, 0, 1, 1], [], []>} : vector<16x16xbf16>, vector<16x32xbf16>, vector<16x32xf32> -> vector<16x32xf32>
    %75 = vector.extract_strided_slice %19 {offsets = [0, 96], sizes = [16, 32], strides = [1, 1]} : vector<16x128xbf16> to vector<16x32xbf16>
    %76 = vector.extract_strided_slice %21 {offsets = [0, 96], sizes = [16, 32], strides = [1, 1]} : vector<16x128xbf16> to vector<16x32xbf16>
    %cst_37 = arith.constant dense<0.000000e+00> : vector<16x16xf32>
    %77 = tpu.matmul %75, %76, %cst_37 {dimension_numbers = #tpu.dot_dimension_numbers<[1], [1], [0], [0], [0, 0, 1, 0], [], []>} : vector<16x32xbf16>, vector<16x32xbf16>, vector<16x16xf32> -> vector<16x16xf32>
    %78 = arith.addf %77, %5 : vector<16x16xf32>
    %cst_38 = arith.constant dense<0xFF800000> : vector<16xf32>
    %79 = vector.multi_reduction <maximumf>, %78, %cst_38 [1] : vector<16x16xf32> to vector<16xf32>
    %80 = vector.shape_cast %79 : vector<16xf32> to vector<16x1xf32>
    %81 = vector.broadcast %80 : vector<16x1xf32> to vector<16x16xf32>
    %82 = arith.subf %78, %81 : vector<16x16xf32>
    %83 = math.exp %82 : vector<16x16xf32>
    %cst_39 = arith.constant dense<0.000000e+00> : vector<16xf32>
    %84 = vector.multi_reduction <add>, %83, %cst_39 [1] : vector<16x16xf32> to vector<16xf32>
    %85 = vector.shape_cast %84 : vector<16xf32> to vector<16x1xf32>
    %86 = tpu.reciprocal %85 {approx = true} : vector<16x1xf32> -> vector<16x1xf32>
    %87 = vector.broadcast %86 : vector<16x1xf32> to vector<16x16xf32>
    %88 = arith.mulf %83, %87 : vector<16x16xf32>
    %89 = arith.truncf %88 : vector<16x16xf32> to vector<16x16xbf16>
    %90 = vector.extract_strided_slice %23 {offsets = [0, 96], sizes = [16, 32], strides = [1, 1]} : vector<16x128xbf16> to vector<16x32xbf16>
    %cst_40 = arith.constant dense<0.000000e+00> : vector<16x32xf32>
    %91 = tpu.matmul %89, %90, %cst_40 {dimension_numbers = #tpu.dot_dimension_numbers<[1], [0], [0], [1], [0, 0, 1, 1], [], []>} : vector<16x16xbf16>, vector<16x32xbf16>, vector<16x32xf32> -> vector<16x32xf32>
    %92 = tpu.concatenate %40, %57, %74, %91 in 1 : vector<16x32xf32>, vector<16x32xf32>, vector<16x32xf32>, vector<16x32xf32> -> vector<16x128xf32>
    %93 = arith.truncf %92 : vector<16x128xf32> to vector<16x128xbf16>
    %cst_41 = arith.constant dense<0.000000e+00> : vector<16x256xf32>
    %94 = tpu.matmul %93, %7, %cst_41 {dimension_numbers = #tpu.dot_dimension_numbers<[1], [0], [0], [1], [0, 0, 1, 1], [], []>} : vector<16x128xbf16>, vector<128x256xbf16>, vector<16x256xf32> -> vector<16x256xf32>
    %95 = arith.addf %94, %1 : vector<16x256xf32>
    %cst_42 = arith.constant dense<0.000000e+00> : vector<16xf32>
    %96 = vector.multi_reduction <add>, %95, %cst_42 [1] : vector<16x256xf32> to vector<16xf32>
    %97 = vector.shape_cast %96 : vector<16xf32> to vector<16x1xf32>
    %cst_43 = arith.constant 2.560000e+02 : f32
    %98 = vector.broadcast %cst_43 : f32 to vector<16x1xf32>
    %99 = arith.divf %97, %98 : vector<16x1xf32>
    %100 = vector.broadcast %99 : vector<16x1xf32> to vector<16x256xf32>
    %101 = arith.subf %95, %100 : vector<16x256xf32>
    %102 = arith.mulf %101, %101 : vector<16x256xf32>
    %cst_44 = arith.constant dense<0.000000e+00> : vector<16xf32>
    %103 = vector.multi_reduction <add>, %102, %cst_44 [1] : vector<16x256xf32> to vector<16xf32>
    %104 = vector.shape_cast %103 : vector<16xf32> to vector<16x1xf32>
    %cst_45 = arith.constant 2.560000e+02 : f32
    %105 = vector.broadcast %cst_45 : f32 to vector<16x1xf32>
    %106 = arith.divf %104, %105 : vector<16x1xf32>
    %cst_46 = arith.constant 9.99999974E-6 : f32
    %107 = vector.broadcast %cst_46 : f32 to vector<16x1xf32>
    %108 = arith.addf %106, %107 : vector<16x1xf32>
    %109 = math.rsqrt %108 : vector<16x1xf32>
    %110 = vector.broadcast %109 : vector<16x1xf32> to vector<16x256xf32>
    %111 = arith.mulf %101, %110 : vector<16x256xf32>
    %112 = vector.broadcast %10 : vector<1x256xf32> to vector<16x256xf32>
    %113 = arith.mulf %111, %112 : vector<16x256xf32>
    %114 = vector.broadcast %11 : vector<1x256xf32> to vector<16x256xf32>
    %115 = arith.addf %113, %114 : vector<16x256xf32>
    %116 = arith.truncf %115 : vector<16x256xf32> to vector<16x256xbf16>
    %cst_47 = arith.constant dense<0.000000e+00> : vector<16x1024xf32>
    %117 = tpu.matmul %116, %8, %cst_47 {dimension_numbers = #tpu.dot_dimension_numbers<[1], [0], [0], [1], [0, 0, 1, 1], [], []>} : vector<16x256xbf16>, vector<256x1024xbf16>, vector<16x1024xf32> -> vector<16x1024xf32>
    %118 = vector.broadcast %14 : vector<1x1024xf32> to vector<16x1024xf32>
    %119 = arith.addf %117, %118 : vector<16x1024xf32>
    %cst_48 = arith.constant 0.000000e+00 : f32
    %120 = vector.broadcast %cst_48 : f32 to vector<16x1024xf32>
    %121 = arith.maximumf %119, %120 : vector<16x1024xf32>
    %122 = arith.truncf %121 : vector<16x1024xf32> to vector<16x1024xbf16>
    %cst_49 = arith.constant dense<0.000000e+00> : vector<16x256xf32>
    %123 = tpu.matmul %122, %9, %cst_49 {dimension_numbers = #tpu.dot_dimension_numbers<[1], [0], [0], [1], [0, 0, 1, 1], [], []>} : vector<16x1024xbf16>, vector<1024x256xbf16>, vector<16x256xf32> -> vector<16x256xf32>
    %124 = vector.broadcast %15 : vector<1x256xf32> to vector<16x256xf32>
    %125 = arith.addf %123, %124 : vector<16x256xf32>
    %126 = arith.addf %125, %115 : vector<16x256xf32>
    %cst_50 = arith.constant dense<0.000000e+00> : vector<16xf32>
    %127 = vector.multi_reduction <add>, %126, %cst_50 [1] : vector<16x256xf32> to vector<16xf32>
    %128 = vector.shape_cast %127 : vector<16xf32> to vector<16x1xf32>
    %cst_51 = arith.constant 2.560000e+02 : f32
    %129 = vector.broadcast %cst_51 : f32 to vector<16x1xf32>
    %130 = arith.divf %128, %129 : vector<16x1xf32>
    %131 = vector.broadcast %130 : vector<16x1xf32> to vector<16x256xf32>
    %132 = arith.subf %126, %131 : vector<16x256xf32>
    %133 = arith.mulf %132, %132 : vector<16x256xf32>
    %cst_52 = arith.constant dense<0.000000e+00> : vector<16xf32>
    %134 = vector.multi_reduction <add>, %133, %cst_52 [1] : vector<16x256xf32> to vector<16xf32>
    %135 = vector.shape_cast %134 : vector<16xf32> to vector<16x1xf32>
    %cst_53 = arith.constant 2.560000e+02 : f32
    %136 = vector.broadcast %cst_53 : f32 to vector<16x1xf32>
    %137 = arith.divf %135, %136 : vector<16x1xf32>
    %cst_54 = arith.constant 9.99999997E-7 : f32
    %138 = vector.broadcast %cst_54 : f32 to vector<16x1xf32>
    %139 = arith.addf %137, %138 : vector<16x1xf32>
    %140 = math.rsqrt %139 : vector<16x1xf32>
    %141 = vector.broadcast %140 : vector<16x1xf32> to vector<16x256xf32>
    %142 = arith.mulf %132, %141 : vector<16x256xf32>
    %143 = vector.broadcast %12 : vector<1x256xf32> to vector<16x256xf32>
    %144 = arith.mulf %142, %143 : vector<16x256xf32>
    %145 = vector.broadcast %13 : vector<1x256xf32> to vector<16x256xf32>
    %146 = arith.addf %144, %145 : vector<16x256xf32>
    %147 = arith.truncf %146 : vector<16x256xf32> to vector<16x256xbf16>
    %cst_55 = arith.constant dense<0.000000e+00> : vector<16x384xf32>
    %148 = tpu.matmul %147, %6, %cst_55 {dimension_numbers = #tpu.dot_dimension_numbers<[1], [0], [0], [1], [0, 0, 1, 1], [], []>} : vector<16x256xbf16>, vector<256x384xbf16>, vector<16x384xf32> -> vector<16x384xf32>
    %149 = vector.extract_strided_slice %148 {offsets = [0, 0], sizes = [16, 128], strides = [1, 1]} : vector<16x384xf32> to vector<16x128xf32>
    %150 = arith.truncf %149 : vector<16x128xf32> to vector<16x128xbf16>
    %151 = vector.extract_strided_slice %148 {offsets = [0, 128], sizes = [16, 128], strides = [1, 1]} : vector<16x384xf32> to vector<16x128xf32>
    %152 = arith.truncf %151 : vector<16x128xf32> to vector<16x128xbf16>
    %153 = vector.extract_strided_slice %148 {offsets = [0, 256], sizes = [16, 128], strides = [1, 1]} : vector<16x384xf32> to vector<16x128xf32>
    %154 = arith.truncf %153 : vector<16x128xf32> to vector<16x128xbf16>
    %155 = vector.extract_strided_slice %150 {offsets = [0, 0], sizes = [16, 32], strides = [1, 1]} : vector<16x128xbf16> to vector<16x32xbf16>
    %156 = vector.extract_strided_slice %152 {offsets = [0, 0], sizes = [16, 32], strides = [1, 1]} : vector<16x128xbf16> to vector<16x32xbf16>
    %cst_56 = arith.constant dense<0.000000e+00> : vector<16x16xf32>
    %157 = tpu.matmul %155, %156, %cst_56 {dimension_numbers = #tpu.dot_dimension_numbers<[1], [1], [0], [0], [0, 0, 1, 0], [], []>} : vector<16x32xbf16>, vector<16x32xbf16>, vector<16x16xf32> -> vector<16x16xf32>
    %158 = arith.addf %157, %5 : vector<16x16xf32>
    %cst_57 = arith.constant dense<0xFF800000> : vector<16xf32>
    %159 = vector.multi_reduction <maximumf>, %158, %cst_57 [1] : vector<16x16xf32> to vector<16xf32>
    %160 = vector.shape_cast %159 : vector<16xf32> to vector<16x1xf32>
    %161 = vector.broadcast %160 : vector<16x1xf32> to vector<16x16xf32>
    %162 = arith.subf %158, %161 : vector<16x16xf32>
    %163 = math.exp %162 : vector<16x16xf32>
    %cst_58 = arith.constant dense<0.000000e+00> : vector<16xf32>
    %164 = vector.multi_reduction <add>, %163, %cst_58 [1] : vector<16x16xf32> to vector<16xf32>
    %165 = vector.shape_cast %164 : vector<16xf32> to vector<16x1xf32>
    %166 = tpu.reciprocal %165 {approx = true} : vector<16x1xf32> -> vector<16x1xf32>
    %167 = vector.broadcast %166 : vector<16x1xf32> to vector<16x16xf32>
    %168 = arith.mulf %163, %167 : vector<16x16xf32>
    %169 = arith.truncf %168 : vector<16x16xf32> to vector<16x16xbf16>
    %170 = vector.extract_strided_slice %154 {offsets = [0, 0], sizes = [16, 32], strides = [1, 1]} : vector<16x128xbf16> to vector<16x32xbf16>
    %cst_59 = arith.constant dense<0.000000e+00> : vector<16x32xf32>
    %171 = tpu.matmul %169, %170, %cst_59 {dimension_numbers = #tpu.dot_dimension_numbers<[1], [0], [0], [1], [0, 0, 1, 1], [], []>} : vector<16x16xbf16>, vector<16x32xbf16>, vector<16x32xf32> -> vector<16x32xf32>
    %172 = vector.extract_strided_slice %150 {offsets = [0, 32], sizes = [16, 32], strides = [1, 1]} : vector<16x128xbf16> to vector<16x32xbf16>
    %173 = vector.extract_strided_slice %152 {offsets = [0, 32], sizes = [16, 32], strides = [1, 1]} : vector<16x128xbf16> to vector<16x32xbf16>
    %cst_60 = arith.constant dense<0.000000e+00> : vector<16x16xf32>
    %174 = tpu.matmul %172, %173, %cst_60 {dimension_numbers = #tpu.dot_dimension_numbers<[1], [1], [0], [0], [0, 0, 1, 0], [], []>} : vector<16x32xbf16>, vector<16x32xbf16>, vector<16x16xf32> -> vector<16x16xf32>
    %175 = arith.addf %174, %5 : vector<16x16xf32>
    %cst_61 = arith.constant dense<0xFF800000> : vector<16xf32>
    %176 = vector.multi_reduction <maximumf>, %175, %cst_61 [1] : vector<16x16xf32> to vector<16xf32>
    %177 = vector.shape_cast %176 : vector<16xf32> to vector<16x1xf32>
    %178 = vector.broadcast %177 : vector<16x1xf32> to vector<16x16xf32>
    %179 = arith.subf %175, %178 : vector<16x16xf32>
    %180 = math.exp %179 : vector<16x16xf32>
    %cst_62 = arith.constant dense<0.000000e+00> : vector<16xf32>
    %181 = vector.multi_reduction <add>, %180, %cst_62 [1] : vector<16x16xf32> to vector<16xf32>
    %182 = vector.shape_cast %181 : vector<16xf32> to vector<16x1xf32>
    %183 = tpu.reciprocal %182 {approx = true} : vector<16x1xf32> -> vector<16x1xf32>
    %184 = vector.broadcast %183 : vector<16x1xf32> to vector<16x16xf32>
    %185 = arith.mulf %180, %184 : vector<16x16xf32>
    %186 = arith.truncf %185 : vector<16x16xf32> to vector<16x16xbf16>
    %187 = vector.extract_strided_slice %154 {offsets = [0, 32], sizes = [16, 32], strides = [1, 1]} : vector<16x128xbf16> to vector<16x32xbf16>
    %cst_63 = arith.constant dense<0.000000e+00> : vector<16x32xf32>
    %188 = tpu.matmul %186, %187, %cst_63 {dimension_numbers = #tpu.dot_dimension_numbers<[1], [0], [0], [1], [0, 0, 1, 1], [], []>} : vector<16x16xbf16>, vector<16x32xbf16>, vector<16x32xf32> -> vector<16x32xf32>
    %189 = vector.extract_strided_slice %150 {offsets = [0, 64], sizes = [16, 32], strides = [1, 1]} : vector<16x128xbf16> to vector<16x32xbf16>
    %190 = vector.extract_strided_slice %152 {offsets = [0, 64], sizes = [16, 32], strides = [1, 1]} : vector<16x128xbf16> to vector<16x32xbf16>
    %cst_64 = arith.constant dense<0.000000e+00> : vector<16x16xf32>
    %191 = tpu.matmul %189, %190, %cst_64 {dimension_numbers = #tpu.dot_dimension_numbers<[1], [1], [0], [0], [0, 0, 1, 0], [], []>} : vector<16x32xbf16>, vector<16x32xbf16>, vector<16x16xf32> -> vector<16x16xf32>
    %192 = arith.addf %191, %5 : vector<16x16xf32>
    %cst_65 = arith.constant dense<0xFF800000> : vector<16xf32>
    %193 = vector.multi_reduction <maximumf>, %192, %cst_65 [1] : vector<16x16xf32> to vector<16xf32>
    %194 = vector.shape_cast %193 : vector<16xf32> to vector<16x1xf32>
    %195 = vector.broadcast %194 : vector<16x1xf32> to vector<16x16xf32>
    %196 = arith.subf %192, %195 : vector<16x16xf32>
    %197 = math.exp %196 : vector<16x16xf32>
    %cst_66 = arith.constant dense<0.000000e+00> : vector<16xf32>
    %198 = vector.multi_reduction <add>, %197, %cst_66 [1] : vector<16x16xf32> to vector<16xf32>
    %199 = vector.shape_cast %198 : vector<16xf32> to vector<16x1xf32>
    %200 = tpu.reciprocal %199 {approx = true} : vector<16x1xf32> -> vector<16x1xf32>
    %201 = vector.broadcast %200 : vector<16x1xf32> to vector<16x16xf32>
    %202 = arith.mulf %197, %201 : vector<16x16xf32>
    %203 = arith.truncf %202 : vector<16x16xf32> to vector<16x16xbf16>
    %204 = vector.extract_strided_slice %154 {offsets = [0, 64], sizes = [16, 32], strides = [1, 1]} : vector<16x128xbf16> to vector<16x32xbf16>
    %cst_67 = arith.constant dense<0.000000e+00> : vector<16x32xf32>
    %205 = tpu.matmul %203, %204, %cst_67 {dimension_numbers = #tpu.dot_dimension_numbers<[1], [0], [0], [1], [0, 0, 1, 1], [], []>} : vector<16x16xbf16>, vector<16x32xbf16>, vector<16x32xf32> -> vector<16x32xf32>
    %206 = vector.extract_strided_slice %150 {offsets = [0, 96], sizes = [16, 32], strides = [1, 1]} : vector<16x128xbf16> to vector<16x32xbf16>
    %207 = vector.extract_strided_slice %152 {offsets = [0, 96], sizes = [16, 32], strides = [1, 1]} : vector<16x128xbf16> to vector<16x32xbf16>
    %cst_68 = arith.constant dense<0.000000e+00> : vector<16x16xf32>
    %208 = tpu.matmul %206, %207, %cst_68 {dimension_numbers = #tpu.dot_dimension_numbers<[1], [1], [0], [0], [0, 0, 1, 0], [], []>} : vector<16x32xbf16>, vector<16x32xbf16>, vector<16x16xf32> -> vector<16x16xf32>
    %209 = arith.addf %208, %5 : vector<16x16xf32>
    %cst_69 = arith.constant dense<0xFF800000> : vector<16xf32>
    %210 = vector.multi_reduction <maximumf>, %209, %cst_69 [1] : vector<16x16xf32> to vector<16xf32>
    %211 = vector.shape_cast %210 : vector<16xf32> to vector<16x1xf32>
    %212 = vector.broadcast %211 : vector<16x1xf32> to vector<16x16xf32>
    %213 = arith.subf %209, %212 : vector<16x16xf32>
    %214 = math.exp %213 : vector<16x16xf32>
    %cst_70 = arith.constant dense<0.000000e+00> : vector<16xf32>
    %215 = vector.multi_reduction <add>, %214, %cst_70 [1] : vector<16x16xf32> to vector<16xf32>
    %216 = vector.shape_cast %215 : vector<16xf32> to vector<16x1xf32>
    %217 = tpu.reciprocal %216 {approx = true} : vector<16x1xf32> -> vector<16x1xf32>
    %218 = vector.broadcast %217 : vector<16x1xf32> to vector<16x16xf32>
    %219 = arith.mulf %214, %218 : vector<16x16xf32>
    %220 = arith.truncf %219 : vector<16x16xf32> to vector<16x16xbf16>
    %221 = vector.extract_strided_slice %154 {offsets = [0, 96], sizes = [16, 32], strides = [1, 1]} : vector<16x128xbf16> to vector<16x32xbf16>
    %cst_71 = arith.constant dense<0.000000e+00> : vector<16x32xf32>
    %222 = tpu.matmul %220, %221, %cst_71 {dimension_numbers = #tpu.dot_dimension_numbers<[1], [0], [0], [1], [0, 0, 1, 1], [], []>} : vector<16x16xbf16>, vector<16x32xbf16>, vector<16x32xf32> -> vector<16x32xf32>
    %223 = tpu.concatenate %171, %188, %205, %222 in 1 : vector<16x32xf32>, vector<16x32xf32>, vector<16x32xf32>, vector<16x32xf32> -> vector<16x128xf32>
    %224 = arith.truncf %223 : vector<16x128xf32> to vector<16x128xbf16>
    %cst_72 = arith.constant dense<0.000000e+00> : vector<16x256xf32>
    %225 = tpu.matmul %224, %7, %cst_72 {dimension_numbers = #tpu.dot_dimension_numbers<[1], [0], [0], [1], [0, 0, 1, 1], [], []>} : vector<16x128xbf16>, vector<128x256xbf16>, vector<16x256xf32> -> vector<16x256xf32>
    %226 = arith.addf %225, %146 : vector<16x256xf32>
    %cst_73 = arith.constant dense<0.000000e+00> : vector<16xf32>
    %227 = vector.multi_reduction <add>, %226, %cst_73 [1] : vector<16x256xf32> to vector<16xf32>
    %228 = vector.shape_cast %227 : vector<16xf32> to vector<16x1xf32>
    %cst_74 = arith.constant 2.560000e+02 : f32
    %229 = vector.broadcast %cst_74 : f32 to vector<16x1xf32>
    %230 = arith.divf %228, %229 : vector<16x1xf32>
    %231 = vector.broadcast %230 : vector<16x1xf32> to vector<16x256xf32>
    %232 = arith.subf %226, %231 : vector<16x256xf32>
    %233 = arith.mulf %232, %232 : vector<16x256xf32>
    %cst_75 = arith.constant dense<0.000000e+00> : vector<16xf32>
    %234 = vector.multi_reduction <add>, %233, %cst_75 [1] : vector<16x256xf32> to vector<16xf32>
    %235 = vector.shape_cast %234 : vector<16xf32> to vector<16x1xf32>
    %cst_76 = arith.constant 2.560000e+02 : f32
    %236 = vector.broadcast %cst_76 : f32 to vector<16x1xf32>
    %237 = arith.divf %235, %236 : vector<16x1xf32>
    %cst_77 = arith.constant 9.99999974E-6 : f32
    %238 = vector.broadcast %cst_77 : f32 to vector<16x1xf32>
    %239 = arith.addf %237, %238 : vector<16x1xf32>
    %240 = math.rsqrt %239 : vector<16x1xf32>
    %241 = vector.broadcast %240 : vector<16x1xf32> to vector<16x256xf32>
    %242 = arith.mulf %232, %241 : vector<16x256xf32>
    %243 = vector.broadcast %10 : vector<1x256xf32> to vector<16x256xf32>
    %244 = arith.mulf %242, %243 : vector<16x256xf32>
    %245 = vector.broadcast %11 : vector<1x256xf32> to vector<16x256xf32>
    %246 = arith.addf %244, %245 : vector<16x256xf32>
    %247 = arith.truncf %246 : vector<16x256xf32> to vector<16x256xbf16>
    %cst_78 = arith.constant dense<0.000000e+00> : vector<16x1024xf32>
    %248 = tpu.matmul %247, %8, %cst_78 {dimension_numbers = #tpu.dot_dimension_numbers<[1], [0], [0], [1], [0, 0, 1, 1], [], []>} : vector<16x256xbf16>, vector<256x1024xbf16>, vector<16x1024xf32> -> vector<16x1024xf32>
    %249 = vector.broadcast %14 : vector<1x1024xf32> to vector<16x1024xf32>
    %250 = arith.addf %248, %249 : vector<16x1024xf32>
    %cst_79 = arith.constant 0.000000e+00 : f32
    %251 = vector.broadcast %cst_79 : f32 to vector<16x1024xf32>
    %252 = arith.maximumf %250, %251 : vector<16x1024xf32>
    %253 = arith.truncf %252 : vector<16x1024xf32> to vector<16x1024xbf16>
    %cst_80 = arith.constant dense<0.000000e+00> : vector<16x256xf32>
    %254 = tpu.matmul %253, %9, %cst_80 {dimension_numbers = #tpu.dot_dimension_numbers<[1], [0], [0], [1], [0, 0, 1, 1], [], []>} : vector<16x1024xbf16>, vector<1024x256xbf16>, vector<16x256xf32> -> vector<16x256xf32>
    %255 = vector.broadcast %15 : vector<1x256xf32> to vector<16x256xf32>
    %256 = arith.addf %254, %255 : vector<16x256xf32>
    %257 = arith.addf %256, %246 : vector<16x256xf32>
    %cst_81 = arith.constant dense<0.000000e+00> : vector<16xf32>
    %258 = vector.multi_reduction <add>, %257, %cst_81 [1] : vector<16x256xf32> to vector<16xf32>
    %259 = vector.shape_cast %258 : vector<16xf32> to vector<16x1xf32>
    %cst_82 = arith.constant 2.560000e+02 : f32
    %260 = vector.broadcast %cst_82 : f32 to vector<16x1xf32>
    %261 = arith.divf %259, %260 : vector<16x1xf32>
    %262 = vector.broadcast %261 : vector<16x1xf32> to vector<16x256xf32>
    %263 = arith.subf %257, %262 : vector<16x256xf32>
    %264 = arith.mulf %263, %263 : vector<16x256xf32>
    %cst_83 = arith.constant dense<0.000000e+00> : vector<16xf32>
    %265 = vector.multi_reduction <add>, %264, %cst_83 [1] : vector<16x256xf32> to vector<16xf32>
    %266 = vector.shape_cast %265 : vector<16xf32> to vector<16x1xf32>
    %cst_84 = arith.constant 2.560000e+02 : f32
    %267 = vector.broadcast %cst_84 : f32 to vector<16x1xf32>
    %268 = arith.divf %266, %267 : vector<16x1xf32>
    %cst_85 = arith.constant 9.99999997E-7 : f32
    %269 = vector.broadcast %cst_85 : f32 to vector<16x1xf32>
    %270 = arith.addf %268, %269 : vector<16x1xf32>
    %271 = math.rsqrt %270 : vector<16x1xf32>
    %272 = vector.broadcast %271 : vector<16x1xf32> to vector<16x256xf32>
    %273 = arith.mulf %263, %272 : vector<16x256xf32>
    %274 = vector.broadcast %12 : vector<1x256xf32> to vector<16x256xf32>
    %275 = arith.mulf %273, %274 : vector<16x256xf32>
    %276 = vector.broadcast %13 : vector<1x256xf32> to vector<16x256xf32>
    %277 = arith.addf %275, %276 : vector<16x256xf32>
    %c0_86 = arith.constant 0 : index
    %c0_87 = arith.constant 0 : index
    %c0_88 = arith.constant 0 : index
    %278 = vector.load %arg13[%c0_86, %c0_87, %c0_88] : memref<1x16x256xf32, #tpu.memory_space<vmem>>, vector<1x16x256xf32>
    %279 = vector.shape_cast %278 : vector<1x16x256xf32> to vector<16x256xf32>
    %280 = vector.shape_cast %277 : vector<16x256xf32> to vector<1x16x256xf32>
    tpu.vector_store %arg13[%c0_86, %c0_87, %c0_88], %280 {strides = array<i32>} : memref<1x16x256xf32, #tpu.memory_space<vmem>>, vector<1x16x256xf32>,
    return
  }
  func.func @transform_0(%arg0: i32) -> (i32, i32, i32) {
    %c0_i32 = arith.constant 0 : i32
    %c0_i32_0 = arith.constant 0 : i32
    %c0_i32_1 = arith.constant 0 : i32
    return %arg0, %c0_i32, %c0_i32_0 : i32, i32, i32
  }
  func.func @transform_1(%arg0: i32) -> (i32, i32, i32) {
    %c0_i32 = arith.constant 0 : i32
    %c0_i32_0 = arith.constant 0 : i32
    %c0_i32_1 = arith.constant 0 : i32
    return %arg0, %c0_i32, %c0_i32_0 : i32, i32, i32
  }
  func.func @transform_2(%arg0: i32) -> (i32, i32) {
    %c0_i32 = arith.constant 0 : i32
    %c0_i32_0 = arith.constant 0 : i32
    %c0_i32_1 = arith.constant 0 : i32
    return %c0_i32, %c0_i32_0 : i32, i32
  }
  func.func @transform_3(%arg0: i32) -> (i32, i32) {
    %c0_i32 = arith.constant 0 : i32
    %c0_i32_0 = arith.constant 0 : i32
    %c0_i32_1 = arith.constant 0 : i32
    return %c0_i32, %c0_i32_0 : i32, i32
  }
  func.func @transform_4(%arg0: i32) -> (i32, i32) {
    %c0_i32 = arith.constant 0 : i32
    %c0_i32_0 = arith.constant 0 : i32
    %c0_i32_1 = arith.constant 0 : i32
    return %c0_i32, %c0_i32_0 : i32, i32
  }
  func.func @transform_5(%arg0: i32) -> (i32, i32) {
    %c0_i32 = arith.constant 0 : i32
    %c0_i32_0 = arith.constant 0 : i32
    %c0_i32_1 = arith.constant 0 : i32
    return %c0_i32, %c0_i32_0 : i32, i32
  }
  func.func @transform_6(%arg0: i32) -> (i32, i32) {
    %c0_i32 = arith.constant 0 : i32
    %c0_i32_0 = arith.constant 0 : i32
    %c0_i32_1 = arith.constant 0 : i32
    return %c0_i32, %c0_i32_0 : i32, i32
  }
  func.func @transform_7(%arg0: i32) -> (i32, i32) {
    %c0_i32 = arith.constant 0 : i32
    %c0_i32_0 = arith.constant 0 : i32
    %c0_i32_1 = arith.constant 0 : i32
    return %c0_i32, %c0_i32_0 : i32, i32
  }
  func.func @transform_8(%arg0: i32) -> (i32, i32) {
    %c0_i32 = arith.constant 0 : i32
    %c0_i32_0 = arith.constant 0 : i32
    %c0_i32_1 = arith.constant 0 : i32
    return %c0_i32, %c0_i32_0 : i32, i32
  }
  func.func @transform_9(%arg0: i32) -> (i32, i32) {
    %c0_i32 = arith.constant 0 : i32
    %c0_i32_0 = arith.constant 0 : i32
    %c0_i32_1 = arith.constant 0 : i32
    return %c0_i32, %c0_i32_0 : i32, i32
  }
  func.func @transform_10(%arg0: i32) -> (i32, i32) {
    %c0_i32 = arith.constant 0 : i32
    %c0_i32_0 = arith.constant 0 : i32
    %c0_i32_1 = arith.constant 0 : i32
    return %c0_i32, %c0_i32_0 : i32, i32
  }
  func.func @transform_11(%arg0: i32) -> (i32, i32) {
    %c0_i32 = arith.constant 0 : i32
    %c0_i32_0 = arith.constant 0 : i32
    %c0_i32_1 = arith.constant 0 : i32
    return %c0_i32, %c0_i32_0 : i32, i32
  }
  func.func @transform_12(%arg0: i32) -> (i32, i32, i32) {
    %c0_i32 = arith.constant 0 : i32
    %c0_i32_0 = arith.constant 0 : i32
    %c0_i32_1 = arith.constant 0 : i32
    return %arg0, %c0_i32, %c0_i32_0 : i32, i32, i32
  }
}

</mosaic_0001>

<llo_original>
// kernel: tpu_custom_call.1
$region0: #{tpu_custom_call.1}
  #allocation0 [shape = 'u32[]', space=smem, size = 0x4, offset = 0x4, fixed_abs, tag = 'smem constant byte address 0x4 - core index']
  #allocation1 [shape = 'u32[72,128]{1,0:T(1,128)}', space=vmem, size = 0x9000, scoped, tag = 'internal scratch']
  %s0 = inlined_call_operand.hbm [shape: f32[2,16,256], index: 0, kind: input, shape index: {}]
  %s1 = inlined_call_operand.hbm [shape: f32[2,1,16], index: 1, kind: input, shape index: {}]
  %s2 = inlined_call_operand.hbm [shape: bf16[256,384], index: 2, kind: input, shape index: {}]
  %s3 = inlined_call_operand.hbm [shape: bf16[128,256], index: 3, kind: input, shape index: {}]
  %s4 = inlined_call_operand.vmem [shape: f32[1,256], index: 4, kind: input, shape index: {}]
  %s5 = inlined_call_operand.vmem [shape: f32[1,256], index: 5, kind: input, shape index: {}]
  %s6 = inlined_call_operand.hbm [shape: bf16[256,1024], index: 6, kind: input, shape index: {}]
  %s7 = inlined_call_operand.hbm [shape: f32[1,1024], index: 7, kind: input, shape index: {}]
  %s8 = inlined_call_operand.hbm [shape: bf16[1024,256], index: 8, kind: input, shape index: {}]
  %s9 = inlined_call_operand.vmem [shape: f32[1,256], index: 9, kind: input, shape index: {}]
  %s10 = inlined_call_operand.vmem [shape: f32[1,256], index: 10, kind: input, shape index: {}]
  %s11 = inlined_call_operand.vmem [shape: f32[1,256], index: 11, kind: input, shape index: {}]
  %s12 = inlined_call_operand.hbm [shape: f32[2,16,256], index: 12, kind: output, shape index: {}]
  %s13 = sld [smem:[#allocation0]]
  $region109: #{tpu_custom_call.1} parent=0
    _
  %s15 = ssub.s32 1, %s13
  %s16 = scalar_select 0, %s15, %s13
  $region1: #{tpu_custom_call.1} parent=0
    #allocation2 [shape = 'u8[32768]{0}', space=vmem, size = 0x8000, scoped, tag = 'input window, operand 0']
    #allocation3 [shape = 's32[2]{0}', space=sflag, size = 0x8, scoped, tag = 'scoped memory for tpu_custom_call.1']
    #allocation4 [shape = 's32[2]{0}', space=sflag, size = 0x8, scoped, tag = 'scoped memory for tpu_custom_call.1']
    #allocation5 [shape = 'u8[1024]{0}', space=vmem, size = 0x400, scoped, tag = 'input window, operand 1']
    #allocation6 [shape = 's32[2]{0}', space=sflag, size = 0x8, scoped, tag = 'scoped memory for tpu_custom_call.1']
    #allocation7 [shape = 'u8[196608]{0}', space=vmem, size = 0x30000, scoped, tag = 'input window, operand 2, single buffered']
    #allocation8 [shape = 'u8[65536]{0}', space=vmem, size = 0x10000, scoped, tag = 'input window, operand 3, single buffered']
    #allocation9 [shape = 's32[1]{0}', space=sflag, size = 0x4, scoped, tag = 'scoped memory for tpu_custom_call.1']
    #allocation10 [shape = 'u8[524288]{0}', space=vmem, size = 0x80000, scoped, tag = 'input window, operand 6, single buffered']
    #allocation11 [shape = 'u8[4096]{0}', space=vmem, size = 0x1000, scoped, tag = 'input window, operand 7, single buffered']
    #allocation12 [shape = 's32[1]{0}', space=sflag, size = 0x4, scoped, tag = 'scoped memory for tpu_custom_call.1']
    #allocation13 [shape = 'u8[524288]{0}', space=vmem, size = 0x80000, scoped, tag = 'input window, operand 8, single buffered']
    #allocation14 [shape = 'u8[32768]{0}', space=vmem, size = 0x8000, scoped, tag = 'output window, operand 0']
    %17 = vsyncpa [#allocation3], 0
    %s18 = scalar_lea.sflag [#allocation3], 1
    %19 = vsyncpa %s18, 0
    %20 = vsyncpa [#allocation6], 0
    %s21 = scalar_lea.sflag [#allocation6], 1
    %22 = vsyncpa %s21, 0
    %23 = vsyncpa [#allocation9], 0
    %24 = vsyncpa [#allocation12], 0
    %25 = vsyncpa [#allocation4], 0
    %s26 = scalar_lea.sflag [#allocation4], 1
    %27 = vsyncpa %s26, 0
    loop: start=0, step=1, limit=4
    $region2: #{tpu_custom_call.1} parent=1 // loop_pre_header
      _
    $region3: #{tpu_custom_call.1} parent=1 // loop_header
      %s29 = sphi 0, %s33
      %p30 = scmp.ge.s32.totalorder %s29, 4
      %s39 = sphi 0, %s41
      %s42 = sphi 0, %s39
      %s43 = sphi 0, %s42
      %s59 = sphi 0, %s43
      %s65 = sphi 0, %s67
      %s68 = sphi 0, %s65
      %s69 = sphi 0, %s68
      %s85 = sphi 0, %s69
      %s89 = sphi 0, %s89
      %s91 = sphi 0, %s89
      %s92 = sphi 0, %s91
      %s106 = sphi 0, %s92
      %s110 = sphi 0, %s110
      %s112 = sphi 0, %s110
      %s113 = sphi 0, %s112
      %s127 = sphi 0, %s113
      %s131 = sphi 0, %s131
      %s133 = sphi 0, %s131
      %s134 = sphi 0, %s133
      %s148 = sphi 0, %s134
      %s152 = sphi 0, %s152
      %s154 = sphi 0, %s152
      %s155 = sphi 0, %s154
      %s169 = sphi 0, %s155
      %s173 = sphi 0, %s173
      %s175 = sphi 0, %s173
      %s176 = sphi 0, %s175
      %s190 = sphi 0, %s176
      %s194 = sphi 0, %s194
      %s196 = sphi 0, %s194
      %s197 = sphi 0, %s196
      %s211 = sphi 0, %s197
      %s215 = sphi 0, %s215
      %s217 = sphi 0, %s215
      %s218 = sphi 0, %s217
      %s232 = sphi 0, %s218
      %s236 = sphi 0, %s236
      %s238 = sphi 0, %s236
      %s239 = sphi 0, %s238
      %s253 = sphi 0, %s239
      %s257 = sphi 0, %s257
      %s259 = sphi 0, %s257
      %s260 = sphi 0, %s259
      %s274 = sphi 0, %s260
      %s278 = sphi 0, %s278
      %s280 = sphi 0, %s278
      %s281 = sphi 0, %s280
      %s295 = sphi 0, %s281
      %s301 = sphi 0, %s303
      %s304 = sphi 0, %s301
      %s305 = sphi 0, %s304
      %s321 = sphi 0, %s305
    $region4: #{tpu_custom_call.1} parent=1 // loop_header_branch
      %32 = sbr.rel (%p30) target = $region8
    $region5: #{tpu_custom_call.1} parent=1 // loop_body
      %s34 = ssub.s32 %s29, 1
      %s35 = ssub.s32 %s29, 2
      %s36 = sadd.s32 %s29, 1
      %s37 = ssub.s32 %s29, %s36
      %p38 = scmp.eq.s32.totalorder %s37, 0
      %s40 = sadd.s32 %s39, 1
      %s41 = scalar_select %p38, %s39, %s40
      %p44 = pneg %p38
      %p45 = scmp.eq.s32.totalorder %s29, 1
      %p46 = por %p44, %p45
      %p47 = scmp.ne.s32.totalorder %s39, %s42
      %p48 = scmp.eq.s32.totalorder %s29, 0
      %p49 = por %p47, %p48
      %p50 = scmp.ne.s32.totalorder %s39, %s42
      %p51 = scmp.eq.s32.totalorder %s34, 1
      %p52 = por %p50, %p51
      %p53 = scmp.ne.s32.totalorder %s42, %s43
      %p54 = scmp.eq.s32.totalorder %s34, 0
      %p55 = por %p53, %p54
      %p56 = scmp.ne.s32.totalorder %s42, %s43
      %p57 = scmp.eq.s32.totalorder %s35, 1
      %p58 = por %p56, %p57
      %p60 = scmp.ne.s32.totalorder %s43, %s59
      %p61 = scmp.eq.s32.totalorder %s35, 0
      %p62 = por %p60, %p61
      %s63 = ssub.s32 %s29, %s36
      %p64 = scmp.eq.s32.totalorder %s63, 0
      %s66 = sadd.s32 %s65, 1
      %s67 = scalar_select %p64, %s65, %s66
      %p70 = pneg %p64
      %p71 = scmp.eq.s32.totalorder %s29, 1
      %p72 = por %p70, %p71
      %p73 = scmp.ne.s32.totalorder %s65, %s68
      %p74 = scmp.eq.s32.totalorder %s29, 0
      %p75 = por %p73, %p74
      %p76 = scmp.ne.s32.totalorder %s65, %s68
      %p77 = scmp.eq.s32.totalorder %s34, 1
      %p78 = por %p76, %p77
      %p79 = scmp.ne.s32.totalorder %s68, %s69
      %p80 = scmp.eq.s32.totalorder %s34, 0
      %p81 = por %p79, %p80
      %p82 = scmp.ne.s32.totalorder %s68, %s69
      %p83 = scmp.eq.s32.totalorder %s35, 1
      %p84 = por %p82, %p83
      %p86 = scmp.ne.s32.totalorder %s69, %s85
      %p87 = scmp.eq.s32.totalorder %s35, 0
      %p88 = por %p86, %p87
      %s90 = sadd.s32 %s89, 1
      %p93 = scmp.eq.s32.totalorder %s29, 1
      %p94 = scmp.ne.s32.totalorder %s89, %s91
      %p95 = scmp.eq.s32.totalorder %s29, 0
      %p96 = por %p94, %p95
      %p97 = scmp.ne.s32.totalorder %s89, %s91
      %p98 = scmp.eq.s32.totalorder %s34, 1
      %p99 = por %p97, %p98
      %p100 = scmp.ne.s32.totalorder %s91, %s92
      %p101 = scmp.eq.s32.totalorder %s34, 0
      %p102 = por %p100, %p101
      %p103 = scmp.ne.s32.totalorder %s91, %s92
      %p104 = scmp.eq.s32.totalorder %s35, 1
      %p105 = por %p103, %p104
      %p107 = scmp.ne.s32.totalorder %s92, %s106
      %p108 = scmp.eq.s32.totalorder %s35, 0
      %p109 = por %p107, %p108
      %s111 = sadd.s32 %s110, 1
      %p114 = scmp.eq.s32.totalorder %s29, 1
      %p115 = scmp.ne.s32.totalorder %s110, %s112
      %p116 = scmp.eq.s32.totalorder %s29, 0
      %p117 = por %p115, %p116
      %p118 = scmp.ne.s32.totalorder %s110, %s112
      %p119 = scmp.eq.s32.totalorder %s34, 1
      %p120 = por %p118, %p119
      %p121 = scmp.ne.s32.totalorder %s112, %s113
      %p122 = scmp.eq.s32.totalorder %s34, 0
      %p123 = por %p121, %p122
      %p124 = scmp.ne.s32.totalorder %s112, %s113
      %p125 = scmp.eq.s32.totalorder %s35, 1
      %p126 = por %p124, %p125
      %p128 = scmp.ne.s32.totalorder %s113, %s127
      %p129 = scmp.eq.s32.totalorder %s35, 0
      %p130 = por %p128, %p129
      %s132 = sadd.s32 %s131, 1
      %p135 = scmp.eq.s32.totalorder %s29, 1
      %p136 = scmp.ne.s32.totalorder %s131, %s133
      %p137 = scmp.eq.s32.totalorder %s29, 0
      %p138 = por %p136, %p137
      %p139 = scmp.ne.s32.totalorder %s131, %s133
      %p140 = scmp.eq.s32.totalorder %s34, 1
      %p141 = por %p139, %p140
      %p142 = scmp.ne.s32.totalorder %s133, %s134
      %p143 = scmp.eq.s32.totalorder %s34, 0
      %p144 = por %p142, %p143
      %p145 = scmp.ne.s32.totalorder %s133, %s134
      %p146 = scmp.eq.s32.totalorder %s35, 1
      %p147 = por %p145, %p146
      %p149 = scmp.ne.s32.totalorder %s134, %s148
      %p150 = scmp.eq.s32.totalorder %s35, 0
      %p151 = por %p149, %p150
      %s153 = sadd.s32 %s152, 1
      %p156 = scmp.eq.s32.totalorder %s29, 1
      %p157 = scmp.ne.s32.totalorder %s152, %s154
      %p158 = scmp.eq.s32.totalorder %s29, 0
      %p159 = por %p157, %p158
      %p160 = scmp.ne.s32.totalorder %s152, %s154
      %p161 = scmp.eq.s32.totalorder %s34, 1
      %p162 = por %p160, %p161
      %p163 = scmp.ne.s32.totalorder %s154, %s155
      %p164 = scmp.eq.s32.totalorder %s34, 0
      %p165 = por %p163, %p164
      %p166 = scmp.ne.s32.totalorder %s154, %s155
      %p167 = scmp.eq.s32.totalorder %s35, 1
      %p168 = por %p166, %p167
      %p170 = scmp.ne.s32.totalorder %s155, %s169
      %p171 = scmp.eq.s32.totalorder %s35, 0
      %p172 = por %p170, %p171
      %s174 = sadd.s32 %s173, 1
      %p177 = scmp.eq.s32.totalorder %s29, 1
      %p178 = scmp.ne.s32.totalorder %s173, %s175
      %p179 = scmp.eq.s32.totalorder %s29, 0
      %p180 = por %p178, %p179
      %p181 = scmp.ne.s32.totalorder %s173, %s175
      %p182 = scmp.eq.s32.totalorder %s34, 1
      %p183 = por %p181, %p182
      %p184 = scmp.ne.s32.totalorder %s175, %s176
      %p185 = scmp.eq.s32.totalorder %s34, 0
      %p186 = por %p184, %p185
      %p187 = scmp.ne.s32.totalorder %s175, %s176
      %p188 = scmp.eq.s32.totalorder %s35, 1
      %p189 = por %p187, %p188
      %p191 = scmp.ne.s32.totalorder %s176, %s190
      %p192 = scmp.eq.s32.totalorder %s35, 0
      %p193 = por %p191, %p192
      %s195 = sadd.s32 %s194, 1
      %p198 = scmp.eq.s32.totalorder %s29, 1
      %p199 = scmp.ne.s32.totalorder %s194, %s196
      %p200 = scmp.eq.s32.totalorder %s29, 0
      %p201 = por %p199, %p200
      %p202 = scmp.ne.s32.totalorder %s194, %s196
      %p203 = scmp.eq.s32.totalorder %s34, 1
      %p204 = por %p202, %p203
      %p205 = scmp.ne.s32.totalorder %s196, %s197
      %p206 = scmp.eq.s32.totalorder %s34, 0
      %p207 = por %p205, %p206
      %p208 = scmp.ne.s32.totalorder %s196, %s197
      %p209 = scmp.eq.s32.totalorder %s35, 1
      %p210 = por %p208, %p209
      %p212 = scmp.ne.s32.totalorder %s197, %s211
      %p213 = scmp.eq.s32.totalorder %s35, 0
      %p214 = por %p212, %p213
      %s216 = sadd.s32 %s215, 1
      %p219 = scmp.eq.s32.totalorder %s29, 1
      %p220 = scmp.ne.s32.totalorder %s215, %s217
      %p221 = scmp.eq.s32.totalorder %s29, 0
      %p222 = por %p220, %p221
      %p223 = scmp.ne.s32.totalorder %s215, %s217
      %p224 = scmp.eq.s32.totalorder %s34, 1
      %p225 = por %p223, %p224
      %p226 = scmp.ne.s32.totalorder %s217, %s218
      %p227 = scmp.eq.s32.totalorder %s34, 0
      %p228 = por %p226, %p227
      %p229 = scmp.ne.s32.totalorder %s217, %s218
      %p230 = scmp.eq.s32.totalorder %s35, 1
      %p231 = por %p229, %p230
      %p233 = scmp.ne.s32.totalorder %s218, %s232
      %p234 = scmp.eq.s32.totalorder %s35, 0
      %p235 = por %p233, %p234
      %s237 = sadd.s32 %s236, 1
      %p240 = scmp.eq.s32.totalorder %s29, 1
      %p241 = scmp.ne.s32.totalorder %s236, %s238
      %p242 = scmp.eq.s32.totalorder %s29, 0
      %p243 = por %p241, %p242
      %p244 = scmp.ne.s32.totalorder %s236, %s238
      %p245 = scmp.eq.s32.totalorder %s34, 1
      %p246 = por %p244, %p245
      %p247 = scmp.ne.s32.totalorder %s238, %s239
      %p248 = scmp.eq.s32.totalorder %s34, 0
      %p249 = por %p247, %p248
      %p250 = scmp.ne.s32.totalorder %s238, %s239
      %p251 = scmp.eq.s32.totalorder %s35, 1
      %p252 = por %p250, %p251
      %p254 = scmp.ne.s32.totalorder %s239, %s253
      %p255 = scmp.eq.s32.totalorder %s35, 0
      %p256 = por %p254, %p255
      %s258 = sadd.s32 %s257, 1
      %p261 = scmp.eq.s32.totalorder %s29, 1
      %p262 = scmp.ne.s32.totalorder %s257, %s259
      %p263 = scmp.eq.s32.totalorder %s29, 0
      %p264 = por %p262, %p263
      %p265 = scmp.ne.s32.totalorder %s257, %s259
      %p266 = scmp.eq.s32.totalorder %s34, 1
      %p267 = por %p265, %p266
      %p268 = scmp.ne.s32.totalorder %s259, %s260
      %p269 = scmp.eq.s32.totalorder %s34, 0
      %p270 = por %p268, %p269
      %p271 = scmp.ne.s32.totalorder %s259, %s260
      %p272 = scmp.eq.s32.totalorder %s35, 1
      %p273 = por %p271, %p272
      %p275 = scmp.ne.s32.totalorder %s260, %s274
      %p276 = scmp.eq.s32.totalorder %s35, 0
      %p277 = por %p275, %p276
      %s279 = sadd.s32 %s278, 1
      %p282 = scmp.eq.s32.totalorder %s29, 1
      %p283 = scmp.ne.s32.totalorder %s278, %s280
      %p284 = scmp.eq.s32.totalorder %s29, 0
      %p285 = por %p283, %p284
      %p286 = scmp.ne.s32.totalorder %s278, %s280
      %p287 = scmp.eq.s32.totalorder %s34, 1
      %p288 = por %p286, %p287
      %p289 = scmp.ne.s32.totalorder %s280, %s281
      %p290 = scmp.eq.s32.totalorder %s34, 0
      %p291 = por %p289, %p290
      %p292 = scmp.ne.s32.totalorder %s280, %s281
      %p293 = scmp.eq.s32.totalorder %s35, 1
      %p294 = por %p292, %p293
      %p296 = scmp.ne.s32.totalorder %s281, %s295
      %p297 = scmp.eq.s32.totalorder %s35, 0
      %p298 = por %p296, %p297
      %s299 = ssub.s32 %s29, %s36
      %p300 = scmp.eq.s32.totalorder %s299, 0
      %s302 = sadd.s32 %s301, 1
      %s303 = scalar_select %p300, %s301, %s302
      %p306 = pneg %p300
      %p307 = scmp.eq.s32.totalorder %s29, 1
      %p308 = por %p306, %p307
      %p309 = scmp.ne.s32.totalorder %s301, %s304
      %p310 = scmp.eq.s32.totalorder %s29, 0
      %p311 = por %p309, %p310
      %p312 = scmp.ne.s32.totalorder %s301, %s304
      %p313 = scmp.eq.s32.totalorder %s34, 1
      %p314 = por %p312, %p313
      %p315 = scmp.ne.s32.totalorder %s304, %s305
      %p316 = scmp.eq.s32.totalorder %s34, 0
      %p317 = por %p315, %p316
      %p318 = scmp.ne.s32.totalorder %s304, %s305
      %p319 = scmp.eq.s32.totalorder %s35, 1
      %p320 = por %p318, %p319
      %p322 = scmp.ne.s32.totalorder %s305, %s321
      %p323 = scmp.eq.s32.totalorder %s35, 0
      %p324 = por %p322, %p323
      %p325 = scmp.le.s32.totalorder 1, %s29
      %p326 = scmp.lt.s32.totalorder %s29, 3
      %p327 = pnand %p325, %p326
      %p328 = pneg %p327
      // Predicated region
      $region9: #{tpu_custom_call.1} parent=5 // pred_check
        _
      $region10: #{tpu_custom_call.1} parent=5 // pred_check_branch
        %330 = sbr.rel (%p327) target = $region12
      $region11: #{tpu_custom_call.1} parent=5 // pred_region
        %s331 = ssub.s32 %s29, 1
        // Predicated region
        $region13: #{tpu_custom_call.1} parent=11 // pred_check
          %p332 = pneg %p102
        $region14: #{tpu_custom_call.1} parent=11 // pred_check_branch
          %334 = sbr.rel (%p332) target = $region16
        $region15: #{tpu_custom_call.1} parent=11 // pred_region
          %336 = vsyncadd [#allocation6], 0
          %s337 = sshll.u32 %s2, 4
          %s338 = int_to_ptr.hbm [resolvable:$true] %s337
          %s339 = sshll.u32 [#allocation7], 4
          %s340 = int_to_ptr.vmem [resolvable:$true] %s339
          %345 = dma.hbm_to_vmem [thread:$0]  %s338, 6144, %s340, [#allocation6], 192, 192, 12
        $region16: #{tpu_custom_call.1} parent=11 // pred_fallthru
          _
        // Predicated region
        $region17: #{tpu_custom_call.1} parent=11 // pred_check
          %p346 = pneg %p123
        $region18: #{tpu_custom_call.1} parent=11 // pred_check_branch
          %348 = sbr.rel (%p346) target = $region20
        $region19: #{tpu_custom_call.1} parent=11 // pred_region
          %350 = vsyncadd [#allocation9], 0
          %s351 = sshll.u32 %s3, 4
          %s352 = int_to_ptr.hbm [resolvable:$true] %s351
          %s353 = sshll.u32 [#allocation8], 4
          %s354 = int_to_ptr.vmem [resolvable:$true] %s353
          %359 = dma.hbm_to_vmem [thread:$0]  %s352, 2048, %s354, [#allocation9], 128, 128, 8
        $region20: #{tpu_custom_call.1} parent=11 // pred_fallthru
          _
        // Predicated region
        $region21: #{tpu_custom_call.1} parent=11 // pred_check
          %p360 = pneg %p144
        $region22: #{tpu_custom_call.1} parent=11 // pred_check_branch
          %362 = sbr.rel (%p360) target = $region24
        $region23: #{tpu_custom_call.1} parent=11 // pred_region
          _
        $region24: #{tpu_custom_call.1} parent=11 // pred_fallthru
          _
        // Predicated region
        $region25: #{tpu_custom_call.1} parent=11 // pred_check
          %p363 = pneg %p165
        $region26: #{tpu_custom_call.1} parent=11 // pred_check_branch
          %365 = sbr.rel (%p363) target = $region28
        $region27: #{tpu_custom_call.1} parent=11 // pred_region
          _
        $region28: #{tpu_custom_call.1} parent=11 // pred_fallthru
          _
        // Predicated region
        $region29: #{tpu_custom_call.1} parent=11 // pred_check
          %p366 = pneg %p186
        $region30: #{tpu_custom_call.1} parent=11 // pred_check_branch
          %368 = sbr.rel (%p366) target = $region32
        $region31: #{tpu_custom_call.1} parent=11 // pred_region
          %370 = vsyncadd [#allocation9], 0
          %s371 = sshll.u32 %s6, 4
          %s372 = int_to_ptr.hbm [resolvable:$true] %s371
          %s373 = sshll.u32 [#allocation10], 4
          %s374 = int_to_ptr.vmem [resolvable:$true] %s373
          %379 = dma.hbm_to_vmem [thread:$0]  %s372, 16384, %s374, [#allocation9], 512, 512, 32
        $region32: #{tpu_custom_call.1} parent=11 // pred_fallthru
          _
        // Predicated region
        $region33: #{tpu_custom_call.1} parent=11 // pred_check
          %p380 = pneg %p207
        $region34: #{tpu_custom_call.1} parent=11 // pred_check_branch
          %382 = sbr.rel (%p380) target = $region36
        $region35: #{tpu_custom_call.1} parent=11 // pred_region
          %384 = vsyncadd [#allocation12], 0
          %s386 = sshll.u32 %s7, 4
          %s387 = int_to_ptr.hbm [resolvable:$true] %s386
          %s388 = sshll.u32 [#allocation11], 4
          %s389 = int_to_ptr.vmem [resolvable:$true] %s388
          %391 = dma.hbm_to_vmem [thread:$0]  %s387, 128, %s389, [#allocation12]
        $region36: #{tpu_custom_call.1} parent=11 // pred_fallthru
          _
        // Predicated region
        $region37: #{tpu_custom_call.1} parent=11 // pred_check
          %p392 = pneg %p228
        $region38: #{tpu_custom_call.1} parent=11 // pred_check_branch
          %394 = sbr.rel (%p392) target = $region40
        $region39: #{tpu_custom_call.1} parent=11 // pred_region
          %396 = vsyncadd [#allocation12], 0
          %s397 = sshll.u32 %s8, 4
          %s398 = int_to_ptr.hbm [resolvable:$true] %s397
          %s399 = sshll.u32 [#allocation13], 4
          %s400 = int_to_ptr.vmem [resolvable:$true] %s399
          %405 = dma.hbm_to_vmem [thread:$0]  %s398, 16384, %s400, [#allocation12], 128, 128, 8
        $region40: #{tpu_custom_call.1} parent=11 // pred_fallthru
          _
        // Predicated region
        $region41: #{tpu_custom_call.1} parent=11 // pred_check
          %p406 = pneg %p249
        $region42: #{tpu_custom_call.1} parent=11 // pred_check_branch
          %408 = sbr.rel (%p406) target = $region44
        $region43: #{tpu_custom_call.1} parent=11 // pred_region
          _
        $region44: #{tpu_custom_call.1} parent=11 // pred_fallthru
          _
        // Predicated region
        $region45: #{tpu_custom_call.1} parent=11 // pred_check
          %p409 = pneg %p270
        $region46: #{tpu_custom_call.1} parent=11 // pred_check_branch
          %411 = sbr.rel (%p409) target = $region48
        $region47: #{tpu_custom_call.1} parent=11 // pred_region
          _
        $region48: #{tpu_custom_call.1} parent=11 // pred_fallthru
          _
        // Predicated region
        $region49: #{tpu_custom_call.1} parent=11 // pred_check
          %p412 = pneg %p291
        $region50: #{tpu_custom_call.1} parent=11 // pred_check_branch
          %414 = sbr.rel (%p412) target = $region52
        $region51: #{tpu_custom_call.1} parent=11 // pred_region
          _
        $region52: #{tpu_custom_call.1} parent=11 // pred_fallthru
          _
      $region12: #{tpu_custom_call.1} parent=5 // pred_fallthru
        _
      %p415 = scmp.lt.s32.totalorder %s29, 2
      // Predicated region
      $region53: #{tpu_custom_call.1} parent=5 // pred_check
        %p416 = pneg %p415
      $region54: #{tpu_custom_call.1} parent=5 // pred_check_branch
        %418 = sbr.rel (%p416) target = $region56
      $region55: #{tpu_custom_call.1} parent=5 // pred_region
        // Predicated region
        $region57: #{tpu_custom_call.1} parent=55 // pred_check
          %p419 = pneg %p49
        $region58: #{tpu_custom_call.1} parent=55 // pred_check_branch
          %421 = sbr.rel (%p419) target = $region60
        $region59: #{tpu_custom_call.1} parent=55 // pred_region
          %s422 = sand.u32 %s39, 1
          %s423 = scalar_lea.sflag [#allocation3], %s422
          %s424 = sand.u32 %s39, 1
          %s425 = smul.addr %s424, 32
          %s426 = scalar_lea.vmem [#allocation2], %s425
          %428 = vsyncadd %s423, 0
          %s429 = smul.addr %s29, 4
          %s430 = smul.addr %s429, 8
          %s431 = scalar_lea.hbm %s0, %s430
          %s432 = sshll.u32 %s431, 4
          %s433 = int_to_ptr.hbm [resolvable:$true] %s432
          %s434 = sshll.u32 %s426, 4
          %s435 = int_to_ptr.vmem [resolvable:$true] %s434
          %440 = dma.hbm_to_vmem [thread:$0]  %s433, 512, %s435, %s423, 256, 256, 16
        $region60: #{tpu_custom_call.1} parent=55 // pred_fallthru
          _
        // Predicated region
        $region61: #{tpu_custom_call.1} parent=55 // pred_check
          %p441 = pneg %p75
        $region62: #{tpu_custom_call.1} parent=55 // pred_check_branch
          %443 = sbr.rel (%p441) target = $region64
        $region63: #{tpu_custom_call.1} parent=55 // pred_region
          %s444 = sand.u32 %s29, 1
          %s445 = scalar_lea.sflag [#allocation6], %s444
          %s446 = sand.u32 %s65, 1
          %s447 = scalar_lea.vmem [#allocation5], %s446
          %449 = vsyncadd %s445, 0
          %s450 = scalar_lea.hbm %s1, %s29
          %s452 = sshll.u32 %s450, 4
          %s453 = int_to_ptr.hbm [resolvable:$true] %s452
          %s454 = sshll.u32 %s447, 4
          %s455 = int_to_ptr.vmem [resolvable:$true] %s454
          %457 = dma.hbm_to_vmem [thread:$0]  %s453, 16, %s455, %s445
        $region64: #{tpu_custom_call.1} parent=55 // pred_fallthru
          _
      $region56: #{tpu_custom_call.1} parent=5 // pred_fallthru
        _
      %p458 = scmp.le.s32.totalorder 1, %s29
      %p459 = scmp.lt.s32.totalorder %s29, 3
      %p460 = pnand %p458, %p459
      %p461 = pneg %p460
      // Predicated region
      $region65: #{tpu_custom_call.1} parent=5 // pred_check
        _
      $region66: #{tpu_custom_call.1} parent=5 // pred_check_branch
        %463 = sbr.rel (%p460) target = $region68
      $region67: #{tpu_custom_call.1} parent=5 // pred_region
        %s464 = ssub.s32 %s29, 1
        %s465 = sand.u32 %s42, 1
        %s466 = scalar_lea.sflag [#allocation3], %s465
        %s467 = sand.u32 %s42, 1
        %s468 = smul.addr %s467, 32
        %s469 = scalar_lea.vmem [#allocation2], %s468
        // Predicated region
        $region69: #{tpu_custom_call.1} parent=67 // pred_check
          %p470 = pneg %p55
        $region70: #{tpu_custom_call.1} parent=67 // pred_check_branch
          %472 = sbr.rel (%p470) target = $region72
        $region71: #{tpu_custom_call.1} parent=67 // pred_region
          %474 = dma.done %s466, 512
        $region72: #{tpu_custom_call.1} parent=67 // pred_fallthru
          _
        %s475 = sand.u32 %s34, 1
        %s476 = scalar_lea.sflag [#allocation6], %s475
        %s477 = sand.u32 %s68, 1
        %s478 = scalar_lea.vmem [#allocation5], %s477
        // Predicated region
        $region73: #{tpu_custom_call.1} parent=67 // pred_check
          %p479 = pneg %p81
        $region74: #{tpu_custom_call.1} parent=67 // pred_check_branch
          %481 = sbr.rel (%p479) target = $region76
        $region75: #{tpu_custom_call.1} parent=67 // pred_region
          %483 = dma.done %s476, 16
        $region76: #{tpu_custom_call.1} parent=67 // pred_fallthru
          _
        // Predicated region
        $region77: #{tpu_custom_call.1} parent=67 // pred_check
          %p484 = pneg %p102
        $region78: #{tpu_custom_call.1} parent=67 // pred_check_branch
          %486 = sbr.rel (%p484) target = $region80
        $region79: #{tpu_custom_call.1} parent=67 // pred_region
          %488 = dma.done [#allocation6], 6144
        $region80: #{tpu_custom_call.1} parent=67 // pred_fallthru
          _
        // Predicated region
        $region81: #{tpu_custom_call.1} parent=67 // pred_check
          %p489 = pneg %p123
        $region82: #{tpu_custom_call.1} parent=67 // pred_check_branch
          %491 = sbr.rel (%p489) target = $region84
        $region83: #{tpu_custom_call.1} parent=67 // pred_region
          %493 = dma.done [#allocation9], 2048
        $region84: #{tpu_custom_call.1} parent=67 // pred_fallthru
          _
        // Predicated region
        $region85: #{tpu_custom_call.1} parent=67 // pred_check
          %p494 = pneg %p186
        $region86: #{tpu_custom_call.1} parent=67 // pred_check_branch
          %496 = sbr.rel (%p494) target = $region88
        $region87: #{tpu_custom_call.1} parent=67 // pred_region
          %498 = dma.done [#allocation9], 16384
        $region88: #{tpu_custom_call.1} parent=67 // pred_fallthru
          _
        // Predicated region
        $region89: #{tpu_custom_call.1} parent=67 // pred_check
          %p499 = pneg %p207
        $region90: #{tpu_custom_call.1} parent=67 // pred_check_branch
          %501 = sbr.rel (%p499) target = $region92
        $region91: #{tpu_custom_call.1} parent=67 // pred_region
          %503 = dma.done [#allocation12], 128
        $region92: #{tpu_custom_call.1} parent=67 // pred_fallthru
          _
        // Predicated region
        $region93: #{tpu_custom_call.1} parent=67 // pred_check
          %p504 = pneg %p228
        $region94: #{tpu_custom_call.1} parent=67 // pred_check_branch
          %506 = sbr.rel (%p504) target = $region96
        $region95: #{tpu_custom_call.1} parent=67 // pred_region
          %508 = dma.done [#allocation12], 16384
        $region96: #{tpu_custom_call.1} parent=67 // pred_fallthru
          _
        %s509 = sand.u32 %s42, 1
        %s510 = scalar_lea.sflag [#allocation3], %s509
        %s511 = sand.u32 %s42, 1
        %s512 = smul.addr %s511, 32
        %s513 = scalar_lea.vmem [#allocation2], %s512
        %p514 = pneg %p55
        %p515 = pneg %p52
        %s516 = sand.u32 %s34, 1
        %s517 = scalar_lea.sflag [#allocation6], %s516
        %s518 = sand.u32 %s68, 1
        %s519 = scalar_lea.vmem [#allocation5], %s518
        %p520 = pneg %p81
        %p521 = pneg %p78
        %p522 = pneg %p102
        %p523 = pneg %p99
        %p524 = pneg %p123
        %p525 = pneg %p120
        %p526 = pneg %p144
        %p527 = pneg %p141
        %p528 = pneg %p165
        %p529 = pneg %p162
        %p530 = pneg %p186
        %p531 = pneg %p183
        %p532 = pneg %p207
        %p533 = pneg %p204
        %p534 = pneg %p228
        %p535 = pneg %p225
        %p536 = pneg %p249
        %p537 = pneg %p246
        %p538 = pneg %p270
        %p539 = pneg %p267
        %p540 = pneg %p291
        %p541 = pneg %p288
        %p542 = pneg %p317
        %p543 = pneg %p314
        %s544 = sand.u32 %s304, 1
        %s545 = scalar_lea.sflag [#allocation4], %s544
        %s546 = sand.u32 %s304, 1
        %s547 = smul.addr %s546, 32
        %s548 = scalar_lea.vmem [#allocation14], %s547
        %v550 = vld [vmem:[%s469] sm:$0xff]
        %v551 = vld [vmem:[%s469 + $0x8] sm:$0xff]
        %v552 = vld [vmem:[%s469 + $0x10] sm:$0xff]
        %v553 = vld [vmem:[%s469 + $0x18] sm:$0xff]
        %v554 = vld [vmem:[%s478] sm:$0x1]
        %v556 = vperm.slane %v554, 0
        %v558 = vld [vmem:[#allocation7] sm:$0xff]
        %v559 = vld [vmem:[#allocation7 + $0x8] sm:$0xf]
        %v560 = vld [vmem:[#allocation7 + $0xc] sm:$0xff]
        %v561 = vld [vmem:[#allocation7 + $0x14] sm:$0xf]
        %v562 = vld [vmem:[#allocation7 + $0x18] sm:$0xff]
        %v563 = vld [vmem:[#allocation7 + $0x20] sm:$0xf]
        %v564 = vld [vmem:[#allocation7 + $0x24] sm:$0xff]
        %v565 = vld [vmem:[#allocation7 + $0x2c] sm:$0xf]
        %v566 = vld [vmem:[#allocation7 + $0x30] sm:$0xff]
        %v567 = vld [vmem:[#allocation7 + $0x38] sm:$0xf]
        %v568 = vld [vmem:[#allocation7 + $0x3c] sm:$0xff]
        %v569 = vld [vmem:[#allocation7 + $0x44] sm:$0xf]
        %v570 = vld [vmem:[#allocation7 + $0x48] sm:$0xff]
        %v571 = vld [vmem:[#allocation7 + $0x50] sm:$0xf]
        %v572 = vld [vmem:[#allocation7 + $0x54] sm:$0xff]
        %v573 = vld [vmem:[#allocation7 + $0x5c] sm:$0xf]
        %v574 = vld [vmem:[#allocation7 + $0x60] sm:$0xff]
        %v575 = vld [vmem:[#allocation7 + $0x68] sm:$0xf]
        %v576 = vld [vmem:[#allocation7 + $0x6c] sm:$0xff]
        %v577 = vld [vmem:[#allocation7 + $0x74] sm:$0xf]
        %v578 = vld [vmem:[#allocation7 + $0x78] sm:$0xff]
        %v579 = vld [vmem:[#allocation7 + $0x80] sm:$0xf]
        %v580 = vld [vmem:[#allocation7 + $0x84] sm:$0xff]
        %v581 = vld [vmem:[#allocation7 + $0x8c] sm:$0xf]
        %v582 = vld [vmem:[#allocation7 + $0x90] sm:$0xff]
        %v583 = vld [vmem:[#allocation7 + $0x98] sm:$0xf]
        %v584 = vld [vmem:[#allocation7 + $0x9c] sm:$0xff]
        %v585 = vld [vmem:[#allocation7 + $0xa4] sm:$0xf]
        %v586 = vld [vmem:[#allocation7 + $0xa8] sm:$0xff]
        %v587 = vld [vmem:[#allocation7 + $0xb0] sm:$0xf]
        %v588 = vld [vmem:[#allocation7 + $0xb4] sm:$0xff]
        %v589 = vld [vmem:[#allocation7 + $0xbc] sm:$0xf]
        %v590 = vld [vmem:[#allocation7 + $0xc0] sm:$0xff]
        %v591 = vld [vmem:[#allocation7 + $0xc8] sm:$0xf]
        %v592 = vld [vmem:[#allocation7 + $0xcc] sm:$0xff]
        %v593 = vld [vmem:[#allocation7 + $0xd4] sm:$0xf]
        %v594 = vld [vmem:[#allocation7 + $0xd8] sm:$0xff]
        %v595 = vld [vmem:[#allocation7 + $0xe0] sm:$0xf]
        %v596 = vld [vmem:[#allocation7 + $0xe4] sm:$0xff]
        %v597 = vld [vmem:[#allocation7 + $0xec] sm:$0xf]
        %v598 = vld [vmem:[#allocation7 + $0xf0] sm:$0xff]
        %v599 = vld [vmem:[#allocation7 + $0xf8] sm:$0xf]
        %v600 = vld [vmem:[#allocation7 + $0xfc] sm:$0xff]
        %v601 = vld [vmem:[#allocation7 + $0x104] sm:$0xf]
        %v602 = vld [vmem:[#allocation7 + $0x108] sm:$0xff]
        %v603 = vld [vmem:[#allocation7 + $0x110] sm:$0xf]
        %v604 = vld [vmem:[#allocation7 + $0x114] sm:$0xff]
        %v605 = vld [vmem:[#allocation7 + $0x11c] sm:$0xf]
        %v606 = vld [vmem:[#allocation7 + $0x120] sm:$0xff]
        %v607 = vld [vmem:[#allocation7 + $0x128] sm:$0xf]
        %v608 = vld [vmem:[#allocation7 + $0x12c] sm:$0xff]
        %v609 = vld [vmem:[#allocation7 + $0x134] sm:$0xf]
        %v610 = vld [vmem:[#allocation7 + $0x138] sm:$0xff]
        %v611 = vld [vmem:[#allocation7 + $0x140] sm:$0xf]
        %v612 = vld [vmem:[#allocation7 + $0x144] sm:$0xff]
        %v613 = vld [vmem:[#allocation7 + $0x14c] sm:$0xf]
        %v614 = vld [vmem:[#allocation7 + $0x150] sm:$0xff]
        %v615 = vld [vmem:[#allocation7 + $0x158] sm:$0xf]
        %v616 = vld [vmem:[#allocation7 + $0x15c] sm:$0xff]
        %v617 = vld [vmem:[#allocation7 + $0x164] sm:$0xf]
        %v618 = vld [vmem:[#allocation7 + $0x168] sm:$0xff]
        %v619 = vld [vmem:[#allocation7 + $0x170] sm:$0xf]
        %v620 = vld [vmem:[#allocation7 + $0x174] sm:$0xff]
        %v621 = vld [vmem:[#allocation7 + $0x17c] sm:$0xf]
        %v622 = vld [vmem:[#allocation8] sm:$0xff]
        %v623 = vld [vmem:[#allocation8 + $0x8] sm:$0xff]
        %v624 = vld [vmem:[#allocation8 + $0x10] sm:$0xff]
        %v625 = vld [vmem:[#allocation8 + $0x18] sm:$0xff]
        %v626 = vld [vmem:[#allocation8 + $0x20] sm:$0xff]
        %v627 = vld [vmem:[#allocation8 + $0x28] sm:$0xff]
        %v628 = vld [vmem:[#allocation8 + $0x30] sm:$0xff]
        %v629 = vld [vmem:[#allocation8 + $0x38] sm:$0xff]
        %v630 = vld [vmem:[#allocation8 + $0x40] sm:$0xff]
        %v631 = vld [vmem:[#allocation8 + $0x48] sm:$0xff]
        %v632 = vld [vmem:[#allocation8 + $0x50] sm:$0xff]
        %v633 = vld [vmem:[#allocation8 + $0x58] sm:$0xff]
        %v634 = vld [vmem:[#allocation8 + $0x60] sm:$0xff]
        %v635 = vld [vmem:[#allocation8 + $0x68] sm:$0xff]
        %v636 = vld [vmem:[#allocation8 + $0x70] sm:$0xff]
        %v637 = vld [vmem:[#allocation8 + $0x78] sm:$0xff]
        %v638 = vld [vmem:[#allocation10] sm:$0xff]
        %v639 = vld [vmem:[#allocation10 + $0x8] sm:$0xff]
        %v640 = vld [vmem:[#allocation10 + $0x10] sm:$0xff]
        %v641 = vld [vmem:[#allocation10 + $0x18] sm:$0xff]
        %v642 = vld [vmem:[#allocation10 + $0x20] sm:$0xff]
        %v643 = vld [vmem:[#allocation10 + $0x28] sm:$0xff]
        %v644 = vld [vmem:[#allocation10 + $0x30] sm:$0xff]
        %v645 = vld [vmem:[#allocation10 + $0x38] sm:$0xff]
        %v646 = vld [vmem:[#allocation10 + $0x40] sm:$0xff]
        %v647 = vld [vmem:[#allocation10 + $0x48] sm:$0xff]
        %v648 = vld [vmem:[#allocation10 + $0x50] sm:$0xff]
        %v649 = vld [vmem:[#allocation10 + $0x58] sm:$0xff]
        %v650 = vld [vmem:[#allocation10 + $0x60] sm:$0xff]
        %v651 = vld [vmem:[#allocation10 + $0x68] sm:$0xff]
        %v652 = vld [vmem:[#allocation10 + $0x70] sm:$0xff]
        %v653 = vld [vmem:[#allocation10 + $0x78] sm:$0xff]
        %v654 = vld [vmem:[#allocation10 + $0x80] sm:$0xff]
        %v655 = vld [vmem:[#allocation10 + $0x88] sm:$0xff]
        %v656 = vld [vmem:[#allocation10 + $0x90] sm:$0xff]
        %v657 = vld [vmem:[#allocation10 + $0x98] sm:$0xff]
        %v658 = vld [vmem:[#allocation10 + $0xa0] sm:$0xff]
        %v659 = vld [vmem:[#allocation10 + $0xa8] sm:$0xff]
        %v660 = vld [vmem:[#allocation10 + $0xb0] sm:$0xff]
        %v661 = vld [vmem:[#allocation10 + $0xb8] sm:$0xff]
        %v662 = vld [vmem:[#allocation10 + $0xc0] sm:$0xff]
        %v663 = vld [vmem:[#allocation10 + $0xc8] sm:$0xff]
        %v664 = vld [vmem:[#allocation10 + $0xd0] sm:$0xff]
        %v665 = vld [vmem:[#allocation10 + $0xd8] sm:$0xff]
        %v666 = vld [vmem:[#allocation10 + $0xe0] sm:$0xff]
        %v667 = vld [vmem:[#allocation10 + $0xe8] sm:$0xff]
        %v668 = vld [vmem:[#allocation10 + $0xf0] sm:$0xff]
        %v669 = vld [vmem:[#allocation10 + $0xf8] sm:$0xff]
        %v670 = vld [vmem:[#allocation10 + $0x100] sm:$0xff]
        %v671 = vld [vmem:[#allocation10 + $0x108] sm:$0xff]
        %v672 = vld [vmem:[#allocation10 + $0x110] sm:$0xff]
        %v673 = vld [vmem:[#allocation10 + $0x118] sm:$0xff]
        %v674 = vld [vmem:[#allocation10 + $0x120] sm:$0xff]
        %v675 = vld [vmem:[#allocation10 + $0x128] sm:$0xff]
        %v676 = vld [vmem:[#allocation10 + $0x130] sm:$0xff]
        %v677 = vld [vmem:[#allocation10 + $0x138] sm:$0xff]
        %v678 = vld [vmem:[#allocation10 + $0x140] sm:$0xff]
        %v679 = vld [vmem:[#allocation10 + $0x148] sm:$0xff]
        %v680 = vld [vmem:[#allocation10 + $0x150] sm:$0xff]
        %v681 = vld [vmem:[#allocation10 + $0x158] sm:$0xff]
        %v682 = vld [vmem:[#allocation10 + $0x160] sm:$0xff]
        %v683 = vld [vmem:[#allocation10 + $0x168] sm:$0xff]
        %v684 = vld [vmem:[#allocation10 + $0x170] sm:$0xff]
        %v685 = vld [vmem:[#allocation10 + $0x178] sm:$0xff]
        %v686 = vld [vmem:[#allocation10 + $0x180] sm:$0xff]
        %v687 = vld [vmem:[#allocation10 + $0x188] sm:$0xff]
        %v688 = vld [vmem:[#allocation10 + $0x190] sm:$0xff]
        %v689 = vld [vmem:[#allocation10 + $0x198] sm:$0xff]
        %v690 = vld [vmem:[#allocation10 + $0x1a0] sm:$0xff]
        %v691 = vld [vmem:[#allocation10 + $0x1a8] sm:$0xff]
        %v692 = vld [vmem:[#allocation10 + $0x1b0] sm:$0xff]
        %v693 = vld [vmem:[#allocation10 + $0x1b8] sm:$0xff]
        %v694 = vld [vmem:[#allocation10 + $0x1c0] sm:$0xff]
        %v695 = vld [vmem:[#allocation10 + $0x1c8] sm:$0xff]
        %v696 = vld [vmem:[#allocation10 + $0x1d0] sm:$0xff]
        %v697 = vld [vmem:[#allocation10 + $0x1d8] sm:$0xff]
        %v698 = vld [vmem:[#allocation10 + $0x1e0] sm:$0xff]
        %v699 = vld [vmem:[#allocation10 + $0x1e8] sm:$0xff]
        %v700 = vld [vmem:[#allocation10 + $0x1f0] sm:$0xff]
        %v701 = vld [vmem:[#allocation10 + $0x1f8] sm:$0xff]
        %v702 = vld [vmem:[#allocation10 + $0x200] sm:$0xff]
        %v703 = vld [vmem:[#allocation10 + $0x208] sm:$0xff]
        %v704 = vld [vmem:[#allocation10 + $0x210] sm:$0xff]
        %v705 = vld [vmem:[#allocation10 + $0x218] sm:$0xff]
        %v706 = vld [vmem:[#allocation10 + $0x220] sm:$0xff]
        %v707 = vld [vmem:[#allocation10 + $0x228] sm:$0xff]
        %v708 = vld [vmem:[#allocation10 + $0x230] sm:$0xff]
        %v709 = vld [vmem:[#allocation10 + $0x238] sm:$0xff]
        %v710 = vld [vmem:[#allocation10 + $0x240] sm:$0xff]
        %v711 = vld [vmem:[#allocation10 + $0x248] sm:$0xff]
        %v712 = vld [vmem:[#allocation10 + $0x250] sm:$0xff]
        %v713 = vld [vmem:[#allocation10 + $0x258] sm:$0xff]
        %v714 = vld [vmem:[#allocation10 + $0x260] sm:$0xff]
        %v715 = vld [vmem:[#allocation10 + $0x268] sm:$0xff]
        %v716 = vld [vmem:[#allocation10 + $0x270] sm:$0xff]
        %v717 = vld [vmem:[#allocation10 + $0x278] sm:$0xff]
        %v718 = vld [vmem:[#allocation10 + $0x280] sm:$0xff]
        %v719 = vld [vmem:[#allocation10 + $0x288] sm:$0xff]
        %v720 = vld [vmem:[#allocation10 + $0x290] sm:$0xff]
        %v721 = vld [vmem:[#allocation10 + $0x298] sm:$0xff]
        %v722 = vld [vmem:[#allocation10 + $0x2a0] sm:$0xff]
        %v723 = vld [vmem:[#allocation10 + $0x2a8] sm:$0xff]
        %v724 = vld [vmem:[#allocation10 + $0x2b0] sm:$0xff]
        %v725 = vld [vmem:[#allocation10 + $0x2b8] sm:$0xff]
        %v726 = vld [vmem:[#allocation10 + $0x2c0] sm:$0xff]
        %v727 = vld [vmem:[#allocation10 + $0x2c8] sm:$0xff]
        %v728 = vld [vmem:[#allocation10 + $0x2d0] sm:$0xff]
        %v729 = vld [vmem:[#allocation10 + $0x2d8] sm:$0xff]
        %v730 = vld [vmem:[#allocation10 + $0x2e0] sm:$0xff]
        %v731 = vld [vmem:[#allocation10 + $0x2e8] sm:$0xff]
        %v732 = vld [vmem:[#allocation10 + $0x2f0] sm:$0xff]
        %v733 = vld [vmem:[#allocation10 + $0x2f8] sm:$0xff]
        %v734 = vld [vmem:[#allocation10 + $0x300] sm:$0xff]
        %v735 = vld [vmem:[#allocation10 + $0x308] sm:$0xff]
        %v736 = vld [vmem:[#allocation10 + $0x310] sm:$0xff]
        %v737 = vld [vmem:[#allocation10 + $0x318] sm:$0xff]
        %v738 = vld [vmem:[#allocation10 + $0x320] sm:$0xff]
        %v739 = vld [vmem:[#allocation10 + $0x328] sm:$0xff]
        %v740 = vld [vmem:[#allocation10 + $0x330] sm:$0xff]
        %v741 = vld [vmem:[#allocation10 + $0x338] sm:$0xff]
        %v742 = vld [vmem:[#allocation10 + $0x340] sm:$0xff]
        %v743 = vld [vmem:[#allocation10 + $0x348] sm:$0xff]
        %v744 = vld [vmem:[#allocation10 + $0x350] sm:$0xff]
        %v745 = vld [vmem:[#allocation10 + $0x358] sm:$0xff]
        %v746 = vld [vmem:[#allocation10 + $0x360] sm:$0xff]
        %v747 = vld [vmem:[#allocation10 + $0x368] sm:$0xff]
        %v748 = vld [vmem:[#allocation10 + $0x370] sm:$0xff]
        %v749 = vld [vmem:[#allocation10 + $0x378] sm:$0xff]
        %v750 = vld [vmem:[#allocation10 + $0x380] sm:$0xff]
        %v751 = vld [vmem:[#allocation10 + $0x388] sm:$0xff]
        %v752 = vld [vmem:[#allocation10 + $0x390] sm:$0xff]
        %v753 = vld [vmem:[#allocation10 + $0x398] sm:$0xff]
        %v754 = vld [vmem:[#allocation10 + $0x3a0] sm:$0xff]
        %v755 = vld [vmem:[#allocation10 + $0x3a8] sm:$0xff]
        %v756 = vld [vmem:[#allocation10 + $0x3b0] sm:$0xff]
        %v757 = vld [vmem:[#allocation10 + $0x3b8] sm:$0xff]
        %v758 = vld [vmem:[#allocation10 + $0x3c0] sm:$0xff]
        %v759 = vld [vmem:[#allocation10 + $0x3c8] sm:$0xff]
        %v760 = vld [vmem:[#allocation10 + $0x3d0] sm:$0xff]
        %v761 = vld [vmem:[#allocation10 + $0x3d8] sm:$0xff]
        %v762 = vld [vmem:[#allocation10 + $0x3e0] sm:$0xff]
        %v763 = vld [vmem:[#allocation10 + $0x3e8] sm:$0xff]
        %v764 = vld [vmem:[#allocation10 + $0x3f0] sm:$0xff]
        %v765 = vld [vmem:[#allocation10 + $0x3f8] sm:$0xff]
        %v766 = vld [vmem:[#allocation13] sm:$0xff]
        %v767 = vld [vmem:[#allocation13 + $0x8] sm:$0xff]
        %v768 = vld [vmem:[#allocation13 + $0x10] sm:$0xff]
        %v769 = vld [vmem:[#allocation13 + $0x18] sm:$0xff]
        %v770 = vld [vmem:[#allocation13 + $0x20] sm:$0xff]
        %v771 = vld [vmem:[#allocation13 + $0x28] sm:$0xff]
        %v772 = vld [vmem:[#allocation13 + $0x30] sm:$0xff]
        %v773 = vld [vmem:[#allocation13 + $0x38] sm:$0xff]
        %v774 = vld [vmem:[#allocation13 + $0x40] sm:$0xff]
        %v775 = vld [vmem:[#allocation13 + $0x48] sm:$0xff]
        %v776 = vld [vmem:[#allocation13 + $0x50] sm:$0xff]
        %v777 = vld [vmem:[#allocation13 + $0x58] sm:$0xff]
        %v778 = vld [vmem:[#allocation13 + $0x60] sm:$0xff]
        %v779 = vld [vmem:[#allocation13 + $0x68] sm:$0xff]
        %v780 = vld [vmem:[#allocation13 + $0x70] sm:$0xff]
        %v781 = vld [vmem:[#allocation13 + $0x78] sm:$0xff]
        %v782 = vld [vmem:[#allocation13 + $0x80] sm:$0xff]
        %v783 = vld [vmem:[#allocation13 + $0x88] sm:$0xff]
        %v784 = vld [vmem:[#allocation13 + $0x90] sm:$0xff]
        %v785 = vld [vmem:[#allocation13 + $0x98] sm:$0xff]
        %v786 = vld [vmem:[#allocation13 + $0xa0] sm:$0xff]
        %v787 = vld [vmem:[#allocation13 + $0xa8] sm:$0xff]
        %v788 = vld [vmem:[#allocation13 + $0xb0] sm:$0xff]
        %v789 = vld [vmem:[#allocation13 + $0xb8] sm:$0xff]
        %v790 = vld [vmem:[#allocation13 + $0xc0] sm:$0xff]
        %v791 = vld [vmem:[#allocation13 + $0xc8] sm:$0xff]
        %v792 = vld [vmem:[#allocation13 + $0xd0] sm:$0xff]
        %v793 = vld [vmem:[#allocation13 + $0xd8] sm:$0xff]
        %v794 = vld [vmem:[#allocation13 + $0xe0] sm:$0xff]
        %v795 = vld [vmem:[#allocation13 + $0xe8] sm:$0xff]
        %v796 = vld [vmem:[#allocation13 + $0xf0] sm:$0xff]
        %v797 = vld [vmem:[#allocation13 + $0xf8] sm:$0xff]
        %v798 = vld [vmem:[#allocation13 + $0x100] sm:$0xff]
        %v799 = vld [vmem:[#allocation13 + $0x108] sm:$0xff]
        %v800 = vld [vmem:[#allocation13 + $0x110] sm:$0xff]
        %v801 = vld [vmem:[#allocation13 + $0x118] sm:$0xff]
        %v802 = vld [vmem:[#allocation13 + $0x120] sm:$0xff]
        %v803 = vld [vmem:[#allocation13 + $0x128] sm:$0xff]
        %v804 = vld [vmem:[#allocation13 + $0x130] sm:$0xff]
        %v805 = vld [vmem:[#allocation13 + $0x138] sm:$0xff]
        %v806 = vld [vmem:[#allocation13 + $0x140] sm:$0xff]
        %v807 = vld [vmem:[#allocation13 + $0x148] sm:$0xff]
        %v808 = vld [vmem:[#allocation13 + $0x150] sm:$0xff]
        %v809 = vld [vmem:[#allocation13 + $0x158] sm:$0xff]
        %v810 = vld [vmem:[#allocation13 + $0x160] sm:$0xff]
        %v811 = vld [vmem:[#allocation13 + $0x168] sm:$0xff]
        %v812 = vld [vmem:[#allocation13 + $0x170] sm:$0xff]
        %v813 = vld [vmem:[#allocation13 + $0x178] sm:$0xff]
        %v814 = vld [vmem:[#allocation13 + $0x180] sm:$0xff]
        %v815 = vld [vmem:[#allocation13 + $0x188] sm:$0xff]
        %v816 = vld [vmem:[#allocation13 + $0x190] sm:$0xff]
        %v817 = vld [vmem:[#allocation13 + $0x198] sm:$0xff]
        %v818 = vld [vmem:[#allocation13 + $0x1a0] sm:$0xff]
        %v819 = vld [vmem:[#allocation13 + $0x1a8] sm:$0xff]
        %v820 = vld [vmem:[#allocation13 + $0x1b0] sm:$0xff]
        %v821 = vld [vmem:[#allocation13 + $0x1b8] sm:$0xff]
        %v822 = vld [vmem:[#allocation13 + $0x1c0] sm:$0xff]
        %v823 = vld [vmem:[#allocation13 + $0x1c8] sm:$0xff]
        %v824 = vld [vmem:[#allocation13 + $0x1d0] sm:$0xff]
        %v825 = vld [vmem:[#allocation13 + $0x1d8] sm:$0xff]
        %v826 = vld [vmem:[#allocation13 + $0x1e0] sm:$0xff]
        %v827 = vld [vmem:[#allocation13 + $0x1e8] sm:$0xff]
        %v828 = vld [vmem:[#allocation13 + $0x1f0] sm:$0xff]
        %v829 = vld [vmem:[#allocation13 + $0x1f8] sm:$0xff]
        %v830 = vld [vmem:[#allocation13 + $0x200] sm:$0xff]
        %v831 = vld [vmem:[#allocation13 + $0x208] sm:$0xff]
        %v832 = vld [vmem:[#allocation13 + $0x210] sm:$0xff]
        %v833 = vld [vmem:[#allocation13 + $0x218] sm:$0xff]
        %v834 = vld [vmem:[#allocation13 + $0x220] sm:$0xff]
        %v835 = vld [vmem:[#allocation13 + $0x228] sm:$0xff]
        %v836 = vld [vmem:[#allocation13 + $0x230] sm:$0xff]
        %v837 = vld [vmem:[#allocation13 + $0x238] sm:$0xff]
        %v838 = vld [vmem:[#allocation13 + $0x240] sm:$0xff]
        %v839 = vld [vmem:[#allocation13 + $0x248] sm:$0xff]
        %v840 = vld [vmem:[#allocation13 + $0x250] sm:$0xff]
        %v841 = vld [vmem:[#allocation13 + $0x258] sm:$0xff]
        %v842 = vld [vmem:[#allocation13 + $0x260] sm:$0xff]
        %v843 = vld [vmem:[#allocation13 + $0x268] sm:$0xff]
        %v844 = vld [vmem:[#allocation13 + $0x270] sm:$0xff]
        %v845 = vld [vmem:[#allocation13 + $0x278] sm:$0xff]
        %v846 = vld [vmem:[#allocation13 + $0x280] sm:$0xff]
        %v847 = vld [vmem:[#allocation13 + $0x288] sm:$0xff]
        %v848 = vld [vmem:[#allocation13 + $0x290] sm:$0xff]
        %v849 = vld [vmem:[#allocation13 + $0x298] sm:$0xff]
        %v850 = vld [vmem:[#allocation13 + $0x2a0] sm:$0xff]
        %v851 = vld [vmem:[#allocation13 + $0x2a8] sm:$0xff]
        %v852 = vld [vmem:[#allocation13 + $0x2b0] sm:$0xff]
        %v853 = vld [vmem:[#allocation13 + $0x2b8] sm:$0xff]
        %v854 = vld [vmem:[#allocation13 + $0x2c0] sm:$0xff]
        %v855 = vld [vmem:[#allocation13 + $0x2c8] sm:$0xff]
        %v856 = vld [vmem:[#allocation13 + $0x2d0] sm:$0xff]
        %v857 = vld [vmem:[#allocation13 + $0x2d8] sm:$0xff]
        %v858 = vld [vmem:[#allocation13 + $0x2e0] sm:$0xff]
        %v859 = vld [vmem:[#allocation13 + $0x2e8] sm:$0xff]
        %v860 = vld [vmem:[#allocation13 + $0x2f0] sm:$0xff]
        %v861 = vld [vmem:[#allocation13 + $0x2f8] sm:$0xff]
        %v862 = vld [vmem:[#allocation13 + $0x300] sm:$0xff]
        %v863 = vld [vmem:[#allocation13 + $0x308] sm:$0xff]
        %v864 = vld [vmem:[#allocation13 + $0x310] sm:$0xff]
        %v865 = vld [vmem:[#allocation13 + $0x318] sm:$0xff]
        %v866 = vld [vmem:[#allocation13 + $0x320] sm:$0xff]
        %v867 = vld [vmem:[#allocation13 + $0x328] sm:$0xff]
        %v868 = vld [vmem:[#allocation13 + $0x330] sm:$0xff]
        %v869 = vld [vmem:[#allocation13 + $0x338] sm:$0xff]
        %v870 = vld [vmem:[#allocation13 + $0x340] sm:$0xff]
        %v871 = vld [vmem:[#allocation13 + $0x348] sm:$0xff]
        %v872 = vld [vmem:[#allocation13 + $0x350] sm:$0xff]
        %v873 = vld [vmem:[#allocation13 + $0x358] sm:$0xff]
        %v874 = vld [vmem:[#allocation13 + $0x360] sm:$0xff]
        %v875 = vld [vmem:[#allocation13 + $0x368] sm:$0xff]
        %v876 = vld [vmem:[#allocation13 + $0x370] sm:$0xff]
        %v877 = vld [vmem:[#allocation13 + $0x378] sm:$0xff]
        %v878 = vld [vmem:[#allocation13 + $0x380] sm:$0xff]
        %v879 = vld [vmem:[#allocation13 + $0x388] sm:$0xff]
        %v880 = vld [vmem:[#allocation13 + $0x390] sm:$0xff]
        %v881 = vld [vmem:[#allocation13 + $0x398] sm:$0xff]
        %v882 = vld [vmem:[#allocation13 + $0x3a0] sm:$0xff]
        %v883 = vld [vmem:[#allocation13 + $0x3a8] sm:$0xff]
        %v884 = vld [vmem:[#allocation13 + $0x3b0] sm:$0xff]
        %v885 = vld [vmem:[#allocation13 + $0x3b8] sm:$0xff]
        %v886 = vld [vmem:[#allocation13 + $0x3c0] sm:$0xff]
        %v887 = vld [vmem:[#allocation13 + $0x3c8] sm:$0xff]
        %v888 = vld [vmem:[#allocation13 + $0x3d0] sm:$0xff]
        %v889 = vld [vmem:[#allocation13 + $0x3d8] sm:$0xff]
        %v890 = vld [vmem:[#allocation13 + $0x3e0] sm:$0xff]
        %v891 = vld [vmem:[#allocation13 + $0x3e8] sm:$0xff]
        %v892 = vld [vmem:[#allocation13 + $0x3f0] sm:$0xff]
        %v893 = vld [vmem:[#allocation13 + $0x3f8] sm:$0xff]
        %v894 = vld [vmem:[%s4] sm:$0x3]
        %v895 = vld [vmem:[%s5] sm:$0x3]
        %v896 = vld [vmem:[%s10] sm:$0x3]
        %v897 = vld [vmem:[%s11] sm:$0x3]
        %v898 = vld [vmem:[#allocation11] sm:$0xff]
        %v899 = vld [vmem:[%s9] sm:$0x3]
        %v900 = vpack.c.bf16 %v552, %v550
        %v901 = vpack.c.bf16 %v553, %v551
        %v966 = vunpack.c.l.b16 %v558
        %v967 = vunpack.c.h.b16 %v558
        %v968 = vunpack.c.l.b16 %v559
        %v969 = vunpack.c.l.b16 %v560
        %v970 = vunpack.c.h.b16 %v560
        %v971 = vunpack.c.l.b16 %v561
        %v972 = vunpack.c.l.b16 %v562
        %v973 = vunpack.c.h.b16 %v562
        %v974 = vunpack.c.l.b16 %v563
        %v975 = vunpack.c.l.b16 %v564
        %v976 = vunpack.c.h.b16 %v564
        %v977 = vunpack.c.l.b16 %v565
        %v978 = vunpack.c.l.b16 %v566
        %v979 = vunpack.c.h.b16 %v566
        %v980 = vunpack.c.l.b16 %v567
        %v981 = vunpack.c.l.b16 %v568
        %v982 = vunpack.c.h.b16 %v568
        %v983 = vunpack.c.l.b16 %v569
        %v984 = vunpack.c.l.b16 %v570
        %v985 = vunpack.c.h.b16 %v570
        %v986 = vunpack.c.l.b16 %v571
        %v987 = vunpack.c.l.b16 %v572
        %v988 = vunpack.c.h.b16 %v572
        %v989 = vunpack.c.l.b16 %v573
        %v990 = vunpack.c.l.b16 %v574
        %v991 = vunpack.c.h.b16 %v574
        %v992 = vunpack.c.l.b16 %v575
        %v993 = vunpack.c.l.b16 %v576
        %v994 = vunpack.c.h.b16 %v576
        %v995 = vunpack.c.l.b16 %v577
        %v996 = vunpack.c.l.b16 %v578
        %v997 = vunpack.c.h.b16 %v578
        %v998 = vunpack.c.l.b16 %v579
        %v999 = vunpack.c.l.b16 %v580
        %v1000 = vunpack.c.h.b16 %v580
        %v1001 = vunpack.c.l.b16 %v581
        %v1002 = vunpack.c.l.b16 %v582
        %v1003 = vunpack.c.h.b16 %v582
        %v1004 = vunpack.c.l.b16 %v583
        %v1005 = vunpack.c.l.b16 %v584
        %v1006 = vunpack.c.h.b16 %v584
        %v1007 = vunpack.c.l.b16 %v585
        %v1008 = vunpack.c.l.b16 %v586
        %v1009 = vunpack.c.h.b16 %v586
        %v1010 = vunpack.c.l.b16 %v587
        %v1011 = vunpack.c.l.b16 %v588
        %v1012 = vunpack.c.h.b16 %v588
        %v1013 = vunpack.c.l.b16 %v589
        %v1014 = vunpack.c.l.b16 %v590
        %v1015 = vunpack.c.h.b16 %v590
        %v1016 = vunpack.c.l.b16 %v591
        %v1017 = vunpack.c.l.b16 %v592
        %v1018 = vunpack.c.h.b16 %v592
        %v1019 = vunpack.c.l.b16 %v593
        %v1020 = vunpack.c.l.b16 %v594
        %v1021 = vunpack.c.h.b16 %v594
        %v1022 = vunpack.c.l.b16 %v595
        %v1023 = vunpack.c.l.b16 %v596
        %v1024 = vunpack.c.h.b16 %v596
        %v1025 = vunpack.c.l.b16 %v597
        %v1026 = vunpack.c.l.b16 %v598
        %v1027 = vunpack.c.h.b16 %v598
        %v1028 = vunpack.c.l.b16 %v599
        %v1029 = vunpack.c.l.b16 %v600
        %v1030 = vunpack.c.h.b16 %v600
        %v1031 = vunpack.c.l.b16 %v601
        %v1032 = vunpack.c.l.b16 %v602
        %v1033 = vunpack.c.h.b16 %v602
        %v1034 = vunpack.c.l.b16 %v603
        %v1035 = vunpack.c.l.b16 %v604
        %v1036 = vunpack.c.h.b16 %v604
        %v1037 = vunpack.c.l.b16 %v605
        %v1038 = vunpack.c.l.b16 %v606
        %v1039 = vunpack.c.h.b16 %v606
        %v1040 = vunpack.c.l.b16 %v607
        %v1041 = vunpack.c.l.b16 %v608
        %v1042 = vunpack.c.h.b16 %v608
        %v1043 = vunpack.c.l.b16 %v609
        %v1044 = vunpack.c.l.b16 %v610
        %v1045 = vunpack.c.h.b16 %v610
        %v1046 = vunpack.c.l.b16 %v611
        %v1047 = vunpack.c.l.b16 %v612
        %v1048 = vunpack.c.h.b16 %v612
        %v1049 = vunpack.c.l.b16 %v613
        %v1050 = vunpack.c.l.b16 %v614
        %v1051 = vunpack.c.h.b16 %v614
        %v1052 = vunpack.c.l.b16 %v615
        %v1053 = vunpack.c.l.b16 %v616
        %v1054 = vunpack.c.h.b16 %v616
        %v1055 = vunpack.c.l.b16 %v617
        %v1056 = vunpack.c.l.b16 %v618
        %v1057 = vunpack.c.h.b16 %v618
        %v1058 = vunpack.c.l.b16 %v619
        %v1059 = vunpack.c.l.b16 %v620
        %v1060 = vunpack.c.h.b16 %v620
        %v1061 = vunpack.c.l.b16 %v621
        %v1062 = vpack.c.b16 %v969, %v966
        %v1063 = vpack.c.b16 %v970, %v967
        %v1064 = vpack.c.b16 %v971, %v968
        %v1065 = vpack.c.b16 %v975, %v972
        %v1066 = vpack.c.b16 %v976, %v973
        %v1067 = vpack.c.b16 %v977, %v974
        %v1068 = vpack.c.b16 %v981, %v978
        %v1069 = vpack.c.b16 %v982, %v979
        %v1070 = vpack.c.b16 %v983, %v980
        %v1071 = vpack.c.b16 %v987, %v984
        %v1072 = vpack.c.b16 %v988, %v985
        %v1073 = vpack.c.b16 %v989, %v986
        %v1074 = vpack.c.b16 %v993, %v990
        %v1075 = vpack.c.b16 %v994, %v991
        %v1076 = vpack.c.b16 %v995, %v992
        %v1077 = vpack.c.b16 %v999, %v996
        %v1078 = vpack.c.b16 %v1000, %v997
        %v1079 = vpack.c.b16 %v1001, %v998
        %v1080 = vpack.c.b16 %v1005, %v1002
        %v1081 = vpack.c.b16 %v1006, %v1003
        %v1082 = vpack.c.b16 %v1007, %v1004
        %v1083 = vpack.c.b16 %v1011, %v1008
        %v1084 = vpack.c.b16 %v1012, %v1009
        %v1085 = vpack.c.b16 %v1013, %v1010
        %v1086 = vpack.c.b16 %v1017, %v1014
        %v1087 = vpack.c.b16 %v1018, %v1015
        %v1088 = vpack.c.b16 %v1019, %v1016
        %v1089 = vpack.c.b16 %v1023, %v1020
        %v1090 = vpack.c.b16 %v1024, %v1021
        %v1091 = vpack.c.b16 %v1025, %v1022
        %v1092 = vpack.c.b16 %v1029, %v1026
        %v1093 = vpack.c.b16 %v1030, %v1027
        %v1094 = vpack.c.b16 %v1031, %v1028
        %v1095 = vpack.c.b16 %v1035, %v1032
        %v1096 = vpack.c.b16 %v1036, %v1033
        %v1097 = vpack.c.b16 %v1037, %v1034
        %v1098 = vpack.c.b16 %v1041, %v1038
        %v1099 = vpack.c.b16 %v1042, %v1039
        %v1100 = vpack.c.b16 %v1043, %v1040
        %v1101 = vpack.c.b16 %v1047, %v1044
        %v1102 = vpack.c.b16 %v1048, %v1045
        %v1103 = vpack.c.b16 %v1049, %v1046
        %v1104 = vpack.c.b16 %v1053, %v1050
        %v1105 = vpack.c.b16 %v1054, %v1051
        %v1106 = vpack.c.b16 %v1055, %v1052
        %v1107 = vpack.c.b16 %v1059, %v1056
        %v1108 = vpack.c.b16 %v1060, %v1057
        %v1109 = vpack.c.b16 %v1061, %v1058
        %1158 = vmatpush.bf16.msra.mxu0 %v1083
        %1159 = vmatpush.bf16.msra.mxu0 %v1080
        %1160 = vmatpush.bf16.msra.mxu0 %v1077
        %1161 = vmatpush.bf16.msra.mxu0 %v1074
        %1162 = vmatpush.bf16.msra.mxu0 %v1071
        %1163 = vmatpush.bf16.msra.mxu0 %v1068
        %1164 = vmatpush.bf16.msra.mxu0 %v1065
        %1165 = vmatpush.bf16.msra.mxu0 %v1062
        %1166 = vmatmul.bf16.gmra.mxu0 %v900
        %v1167 = vpop.f32.mrf.mxu0
        %v1168 = vadd.f32 0.0, %v1167
        %v1169 = vpop.f32.mrf.mxu0
        %v1170 = vadd.f32 0.0, %v1169
        %1171 = vdwg.mxu0
        %1172 = vmatpush.bf16.msra.mxu0 %v1107
        %1173 = vmatpush.bf16.msra.mxu0 %v1104
        %1174 = vmatpush.bf16.msra.mxu0 %v1101
        %1175 = vmatpush.bf16.msra.mxu0 %v1098
        %1176 = vmatpush.bf16.msra.mxu0 %v1095
        %1177 = vmatpush.bf16.msra.mxu0 %v1092
        %1178 = vmatpush.bf16.msra.mxu0 %v1089
        %1179 = vmatpush.bf16.msra.mxu0 %v1086
        %1180 = vmatmul.bf16.gmra.mxu0 %v901
        %v1181 = vpop.f32.mrf.mxu0
        %v1182 = vadd.f32 %v1168, %v1181
        %v1183 = vpop.f32.mrf.mxu0
        %v1184 = vadd.f32 %v1170, %v1183
        %1185 = vdwg.mxu0
        %1186 = vmatpush.bf16.msra.mxu0 %v1084
        %1187 = vmatpush.bf16.msra.mxu0 %v1081
        %1188 = vmatpush.bf16.msra.mxu0 %v1078
        %1189 = vmatpush.bf16.msra.mxu0 %v1075
        %1190 = vmatpush.bf16.msra.mxu0 %v1072
        %1191 = vmatpush.bf16.msra.mxu0 %v1069
        %1192 = vmatpush.bf16.msra.mxu0 %v1066
        %1193 = vmatpush.bf16.msra.mxu0 %v1063
        %1194 = vmatmul.bf16.gmra.mxu0 %v900
        %v1195 = vpop.f32.mrf.mxu0
        %v1196 = vadd.f32 0.0, %v1195
        %v1197 = vpop.f32.mrf.mxu0
        %v1198 = vadd.f32 0.0, %v1197
        %1199 = vdwg.mxu0
        %1200 = vmatpush.bf16.msra.mxu0 %v1108
        %1201 = vmatpush.bf16.msra.mxu0 %v1105
        %1202 = vmatpush.bf16.msra.mxu0 %v1102
        %1203 = vmatpush.bf16.msra.mxu0 %v1099
        %1204 = vmatpush.bf16.msra.mxu0 %v1096
        %1205 = vmatpush.bf16.msra.mxu0 %v1093
        %1206 = vmatpush.bf16.msra.mxu0 %v1090
        %1207 = vmatpush.bf16.msra.mxu0 %v1087
        %1208 = vmatmul.bf16.gmra.mxu0 %v901
        %v1209 = vpop.f32.mrf.mxu0
        %v1210 = vadd.f32 %v1196, %v1209
        %v1211 = vpop.f32.mrf.mxu0
        %v1212 = vadd.f32 %v1198, %v1211
        %1213 = vdwg.mxu0
        %1214 = vmatpush.bf16.msra.mxu0 %v1085
        %1215 = vmatpush.bf16.msra.mxu0 %v1082
        %1216 = vmatpush.bf16.msra.mxu0 %v1079
        %1217 = vmatpush.bf16.msra.mxu0 %v1076
        %1218 = vmatpush.bf16.msra.mxu0 %v1073
        %1219 = vmatpush.bf16.msra.mxu0 %v1070
        %1220 = vmatpush.bf16.msra.mxu0 %v1067
        %1221 = vmatpush.bf16.msra.mxu0 %v1064
        %1222 = vmatmul.bf16.gmra.mxu0 %v900
        %v1223 = vpop.f32.mrf.mxu0
        %v1224 = vadd.f32 0.0, %v1223
        %v1225 = vpop.f32.mrf.mxu0
        %v1226 = vadd.f32 0.0, %v1225
        %1227 = vdwg.mxu0
        %1228 = vmatpush.bf16.msra.mxu0 %v1109
        %1229 = vmatpush.bf16.msra.mxu0 %v1106
        %1230 = vmatpush.bf16.msra.mxu0 %v1103
        %1231 = vmatpush.bf16.msra.mxu0 %v1100
        %1232 = vmatpush.bf16.msra.mxu0 %v1097
        %1233 = vmatpush.bf16.msra.mxu0 %v1094
        %1234 = vmatpush.bf16.msra.mxu0 %v1091
        %1235 = vmatpush.bf16.msra.mxu0 %v1088
        %1236 = vmatmul.bf16.gmra.mxu0 %v901
        %v1237 = vpop.f32.mrf.mxu0
        %v1238 = vadd.f32 %v1224, %v1237
        %v1239 = vpop.f32.mrf.mxu0
        %v1240 = vadd.f32 %v1226, %v1239
        %1241 = vdwg.mxu0
        %v1242 = vpack.c.bf16 %v1182, %v1182
        %v1243 = vpack.c.bf16 %v1184, %v1184
        %v1244 = vpack.c.bf16 %v1210, %v1210
        %v1245 = vpack.c.bf16 %v1212, %v1212
        %v1246 = vpack.c.bf16 %v1238, %v1238
        %v1247 = vpack.c.bf16 %v1240, %v1240
        %v1250 = vunpack.c.l.b16 %v1242
        %v1251 = vunpack.c.l.b16 %v1243
        %v1252 = vpack.c.b16 %v1251, %v1250
        %v1255 = vunpack.c.l.b16 %v1244
        %v1256 = vunpack.c.l.b16 %v1245
        %v1257 = vpack.c.b16 %v1256, %v1255
        %vm1258 = vcmask 261120
        %v1260 = vsel %vm1258, %v1252, 0
        %v1263 = vsel %vm1258, %v1257, 0
        %1265 = vmatpush.bf16.xpose.msra.mxu0 0
        %1266 = vmatpush.bf16.xpose.msra.mxu0 0
        %1267 = vmatpush.bf16.xpose.msra.mxu0 0
        %1268 = vmatpush.bf16.xpose.msra.mxu0 0
        %1269 = vmatpush.bf16.xpose.msra.mxu0 0
        %1270 = vmatpush.bf16.xpose.msra.mxu0 0
        %1271 = vmatpush.bf16.xpose.msra.mxu0 0
        %1272 = vmatpush.bf16.xpose.msra.mxu0 %v1263
        %1273 = vmatmul.bf16.gmra.mxu0 %v1260
        %v1274 = vpop.f32.mrf.mxu0
        %v1275 = vadd.f32 %v556, %v1274
        %v1276 = vpop.f32.mrf.mxu0
        %v1277 = vadd.f32 %v556, %v1276
        %1278 = vdwg.mxu0
        %vm1279 = vcmask 130048
        %v1280 = vsel %vm1279, %v1275, -inf
        %1281 = vmax.xlane.f32.xlu0 %v1280
        %v1282 = vpop.xlane.xlu0 %1281
        %v1283 = vsel %vm1279, %v1277, -inf
        %1284 = vmax.xlane.f32.xlu0 %v1283
        %v1285 = vpop.xlane.xlu0 %1284
        %v1286 = vsub.f32 %v1275, %v1282
        %v1287 = vsub.f32 %v1277, %v1285
        %v1288 = vmul.f32 %v1286, 1.442695
        %v1289 = vpow.pop %v1288
        %v1290 = vmul.f32 %v1287, 1.442695
        %v1291 = vpow.pop %v1290
        %v1292 = vsel %vm1279, %v1289, 0.0
        %1293 = vadd.xlane.f32.xlu0 %v1292
        %v1294 = vpop.xlane.xlu0 %1293
        %v1295 = vsel %vm1279, %v1291, 0.0
        %1296 = vadd.xlane.f32.xlu0 %v1295
        %v1297 = vpop.xlane.xlu0 %1296
        %v1298 = vrcp.pop %v1294
        %v1299 = vrcp.pop %v1297
        %v1300 = vmul.f32 %v1289, %v1298
        %v1301 = vmul.f32 %v1291, %v1299
        %v1302 = vpack.c.bf16 %v1301, %v1300
        %v1305 = vunpack.c.l.b16 %v1246
        %v1306 = vunpack.c.l.b16 %v1247
        %v1307 = vpack.c.b16 %v1306, %v1305
        %v1310 = vsel %vm1279, %v1302, 0
        %1312 = vmatpush.bf16.msra.mxu0 0
        %1313 = vmatpush.bf16.msra.mxu0 0
        %1314 = vmatpush.bf16.msra.mxu0 0
        %1315 = vmatpush.bf16.msra.mxu0 0
        %1316 = vmatpush.bf16.msra.mxu0 0
        %1317 = vmatpush.bf16.msra.mxu0 0
        %1318 = vmatpush.bf16.msra.mxu0 0
        %1319 = vmatpush.bf16.msra.mxu0 %v1307
        %1320 = vmatmul.bf16.gmra.mxu0 %v1310
        %v1321 = vpop.f32.mrf.mxu0
        %v1322 = vadd.f32 0.0, %v1321
        %v1323 = vpop.f32.mrf.mxu0
        %v1324 = vadd.f32 0.0, %v1323
        %1325 = vdwg.mxu0
        %1326 = vrot.lane.b32.xlu0 %v1252, 96
        %v1327 = vpop.permute.xlu0 %1326
        %1328 = vrot.lane.b32.xlu0 %v1257, 96
        %v1329 = vpop.permute.xlu0 %1328
        %v1331 = vsel %vm1258, %v1327, 0
        %v1334 = vsel %vm1258, %v1329, 0
        %1336 = vmatpush.bf16.xpose.msra.mxu0 0
        %1337 = vmatpush.bf16.xpose.msra.mxu0 0
        %1338 = vmatpush.bf16.xpose.msra.mxu0 0
        %1339 = vmatpush.bf16.xpose.msra.mxu0 0
        %1340 = vmatpush.bf16.xpose.msra.mxu0 0
        %1341 = vmatpush.bf16.xpose.msra.mxu0 0
        %1342 = vmatpush.bf16.xpose.msra.mxu0 0
        %1343 = vmatpush.bf16.xpose.msra.mxu0 %v1334
        %1344 = vmatmul.bf16.gmra.mxu0 %v1331
        %v1345 = vpop.f32.mrf.mxu0
        %v1346 = vadd.f32 %v556, %v1345
        %v1347 = vpop.f32.mrf.mxu0
        %v1348 = vadd.f32 %v556, %v1347
        %1349 = vdwg.mxu0
        %v1350 = vsel %vm1279, %v1346, -inf
        %1351 = vmax.xlane.f32.xlu0 %v1350
        %v1352 = vpop.xlane.xlu0 %1351
        %v1353 = vsel %vm1279, %v1348, -inf
        %1354 = vmax.xlane.f32.xlu0 %v1353
        %v1355 = vpop.xlane.xlu0 %1354
        %v1356 = vsub.f32 %v1346, %v1352
        %v1357 = vsub.f32 %v1348, %v1355
        %v1358 = vmul.f32 %v1356, 1.442695
        %v1359 = vpow.pop %v1358
        %v1360 = vmul.f32 %v1357, 1.442695
        %v1361 = vpow.pop %v1360
        %v1362 = vsel %vm1279, %v1359, 0.0
        %1363 = vadd.xlane.f32.xlu0 %v1362
        %v1364 = vpop.xlane.xlu0 %1363
        %v1365 = vsel %vm1279, %v1361, 0.0
        %1366 = vadd.xlane.f32.xlu0 %v1365
        %v1367 = vpop.xlane.xlu0 %1366
        %v1368 = vrcp.pop %v1364
        %v1369 = vrcp.pop %v1367
        %v1370 = vmul.f32 %v1359, %v1368
        %v1371 = vmul.f32 %v1361, %v1369
        %v1372 = vpack.c.bf16 %v1371, %v1370
        %1373 = vrot.lane.b32.xlu0 %v1307, 96
        %v1374 = vpop.permute.xlu0 %1373
        %v1377 = vsel %vm1279, %v1372, 0
        %1379 = vmatpush.bf16.msra.mxu0 0
        %1380 = vmatpush.bf16.msra.mxu0 0
        %1381 = vmatpush.bf16.msra.mxu0 0
        %1382 = vmatpush.bf16.msra.mxu0 0
        %1383 = vmatpush.bf16.msra.mxu0 0
        %1384 = vmatpush.bf16.msra.mxu0 0
        %1385 = vmatpush.bf16.msra.mxu0 0
        %1386 = vmatpush.bf16.msra.mxu0 %v1374
        %1387 = vmatmul.bf16.gmra.mxu0 %v1377
        %v1388 = vpop.f32.mrf.mxu0
        %v1389 = vadd.f32 0.0, %v1388
        %v1390 = vpop.f32.mrf.mxu0
        %v1391 = vadd.f32 0.0, %v1390
        %1392 = vdwg.mxu0
        %1393 = vrot.lane.b32.xlu0 %v1252, 64
        %v1394 = vpop.permute.xlu0 %1393
        %1395 = vrot.lane.b32.xlu0 %v1257, 64
        %v1396 = vpop.permute.xlu0 %1395
        %v1398 = vsel %vm1258, %v1394, 0
        %v1401 = vsel %vm1258, %v1396, 0
        %1403 = vmatpush.bf16.xpose.msra.mxu0 0
        %1404 = vmatpush.bf16.xpose.msra.mxu0 0
        %1405 = vmatpush.bf16.xpose.msra.mxu0 0
        %1406 = vmatpush.bf16.xpose.msra.mxu0 0
        %1407 = vmatpush.bf16.xpose.msra.mxu0 0
        %1408 = vmatpush.bf16.xpose.msra.mxu0 0
        %1409 = vmatpush.bf16.xpose.msra.mxu0 0
        %1410 = vmatpush.bf16.xpose.msra.mxu0 %v1401
        %1411 = vmatmul.bf16.gmra.mxu0 %v1398
        %v1412 = vpop.f32.mrf.mxu0
        %v1413 = vadd.f32 %v556, %v1412
        %v1414 = vpop.f32.mrf.mxu0
        %v1415 = vadd.f32 %v556, %v1414
        %1416 = vdwg.mxu0
        %v1417 = vsel %vm1279, %v1413, -inf
        %1418 = vmax.xlane.f32.xlu0 %v1417
        %v1419 = vpop.xlane.xlu0 %1418
        %v1420 = vsel %vm1279, %v1415, -inf
        %1421 = vmax.xlane.f32.xlu0 %v1420
        %v1422 = vpop.xlane.xlu0 %1421
        %v1423 = vsub.f32 %v1413, %v1419
        %v1424 = vsub.f32 %v1415, %v1422
        %v1425 = vmul.f32 %v1423, 1.442695
        %v1426 = vpow.pop %v1425
        %v1427 = vmul.f32 %v1424, 1.442695
        %v1428 = vpow.pop %v1427
        %v1429 = vsel %vm1279, %v1426, 0.0
        %1430 = vadd.xlane.f32.xlu0 %v1429
        %v1431 = vpop.xlane.xlu0 %1430
        %v1432 = vsel %vm1279, %v1428, 0.0
        %1433 = vadd.xlane.f32.xlu0 %v1432
        %v1434 = vpop.xlane.xlu0 %1433
        %v1435 = vrcp.pop %v1431
        %v1436 = vrcp.pop %v1434
        %v1437 = vmul.f32 %v1426, %v1435
        %v1438 = vmul.f32 %v1428, %v1436
        %v1439 = vpack.c.bf16 %v1438, %v1437
        %1440 = vrot.lane.b32.xlu0 %v1307, 64
        %v1441 = vpop.permute.xlu0 %1440
        %v1444 = vsel %vm1279, %v1439, 0
        %1446 = vmatpush.bf16.msra.mxu0 0
        %1447 = vmatpush.bf16.msra.mxu0 0
        %1448 = vmatpush.bf16.msra.mxu0 0
        %1449 = vmatpush.bf16.msra.mxu0 0
        %1450 = vmatpush.bf16.msra.mxu0 0
        %1451 = vmatpush.bf16.msra.mxu0 0
        %1452 = vmatpush.bf16.msra.mxu0 0
        %1453 = vmatpush.bf16.msra.mxu0 %v1441
        %1454 = vmatmul.bf16.gmra.mxu0 %v1444
        %v1455 = vpop.f32.mrf.mxu0
        %v1456 = vadd.f32 0.0, %v1455
        %v1457 = vpop.f32.mrf.mxu0
        %v1458 = vadd.f32 0.0, %v1457
        %1459 = vdwg.mxu0
        %1460 = vrot.lane.b32.xlu0 %v1252, 32
        %v1461 = vpop.permute.xlu0 %1460
        %1462 = vrot.lane.b32.xlu0 %v1257, 32
        %v1463 = vpop.permute.xlu0 %1462
        %v1465 = vsel %vm1258, %v1461, 0
        %v1468 = vsel %vm1258, %v1463, 0
        %1470 = vmatpush.bf16.xpose.msra.mxu0 0
        %1471 = vmatpush.bf16.xpose.msra.mxu0 0
        %1472 = vmatpush.bf16.xpose.msra.mxu0 0
        %1473 = vmatpush.bf16.xpose.msra.mxu0 0
        %1474 = vmatpush.bf16.xpose.msra.mxu0 0
        %1475 = vmatpush.bf16.xpose.msra.mxu0 0
        %1476 = vmatpush.bf16.xpose.msra.mxu0 0
        %1477 = vmatpush.bf16.xpose.msra.mxu0 %v1468
        %1478 = vmatmul.bf16.gmra.mxu0 %v1465
        %v1479 = vpop.f32.mrf.mxu0
        %v1480 = vadd.f32 %v556, %v1479
        %v1481 = vpop.f32.mrf.mxu0
        %v1482 = vadd.f32 %v556, %v1481
        %1483 = vdwg.mxu0
        %v1484 = vsel %vm1279, %v1480, -inf
        %1485 = vmax.xlane.f32.xlu0 %v1484
        %v1486 = vpop.xlane.xlu0 %1485
        %v1487 = vsel %vm1279, %v1482, -inf
        %1488 = vmax.xlane.f32.xlu0 %v1487
        %v1489 = vpop.xlane.xlu0 %1488
        %v1490 = vsub.f32 %v1480, %v1486
        %v1491 = vsub.f32 %v1482, %v1489
        %v1492 = vmul.f32 %v1490, 1.442695
        %v1493 = vpow.pop %v1492
        %v1494 = vmul.f32 %v1491, 1.442695
        %v1495 = vpow.pop %v1494
        %v1496 = vsel %vm1279, %v1493, 0.0
        %1497 = vadd.xlane.f32.xlu0 %v1496
        %v1498 = vpop.xlane.xlu0 %1497
        %v1499 = vsel %vm1279, %v1495, 0.0
        %1500 = vadd.xlane.f32.xlu0 %v1499
        %v1501 = vpop.xlane.xlu0 %1500
        %v1502 = vrcp.pop %v1498
        %v1503 = vrcp.pop %v1501
        %v1504 = vmul.f32 %v1493, %v1502
        %v1505 = vmul.f32 %v1495, %v1503
        %v1506 = vpack.c.bf16 %v1505, %v1504
        %1507 = vrot.lane.b32.xlu0 %v1307, 32
        %v1508 = vpop.permute.xlu0 %1507
        %v1511 = vsel %vm1279, %v1506, 0
        %1513 = vmatpush.bf16.msra.mxu0 0
        %1514 = vmatpush.bf16.msra.mxu0 0
        %1515 = vmatpush.bf16.msra.mxu0 0
        %1516 = vmatpush.bf16.msra.mxu0 0
        %1517 = vmatpush.bf16.msra.mxu0 0
        %1518 = vmatpush.bf16.msra.mxu0 0
        %1519 = vmatpush.bf16.msra.mxu0 0
        %1520 = vmatpush.bf16.msra.mxu0 %v1508
        %1521 = vmatmul.bf16.gmra.mxu0 %v1511
        %v1522 = vpop.f32.mrf.mxu0
        %v1523 = vadd.f32 0.0, %v1522
        %v1524 = vpop.f32.mrf.mxu0
        %v1525 = vadd.f32 0.0, %v1524
        %1526 = vdwg.mxu0
        %1529 = vrot.lane.b32.xlu0 %v1389, 32
        %v1530 = vpop.permute.xlu0 %1529
        %1531 = vrot.lane.b32.xlu0 %v1391, 32
        %v1532 = vpop.permute.xlu0 %1531
        %1537 = vrot.lane.b32.xlu0 %v1456, 64
        %v1538 = vpop.permute.xlu0 %1537
        %1539 = vrot.lane.b32.xlu0 %v1458, 64
        %v1540 = vpop.permute.xlu0 %1539
        %1545 = vrot.lane.b32.xlu0 %v1523, 96
        %v1546 = vpop.permute.xlu0 %1545
        %1547 = vrot.lane.b32.xlu0 %v1525, 96
        %v1548 = vpop.permute.xlu0 %1547
        %v1551 = vsel %vm1258, %v1322, %v1530
        %v1552 = vsel %vm1258, %v1324, %v1532
        %vm1553 = vcmask 523264
        %v1554 = vsel %vm1553, %v1551, %v1538
        %v1555 = vsel %vm1553, %v1552, %v1540
        %vm1556 = vcmask 785408
        %v1557 = vsel %vm1556, %v1554, %v1546
        %v1558 = vsel %vm1556, %v1555, %v1548
        %v1559 = vpack.c.bf16 %v1558, %v1557
        %v1576 = vunpack.c.l.b16 %v622
        %v1577 = vunpack.c.h.b16 %v622
        %v1578 = vunpack.c.l.b16 %v623
        %v1579 = vunpack.c.h.b16 %v623
        %v1580 = vunpack.c.l.b16 %v624
        %v1581 = vunpack.c.h.b16 %v624
        %v1582 = vunpack.c.l.b16 %v625
        %v1583 = vunpack.c.h.b16 %v625
        %v1584 = vunpack.c.l.b16 %v626
        %v1585 = vunpack.c.h.b16 %v626
        %v1586 = vunpack.c.l.b16 %v627
        %v1587 = vunpack.c.h.b16 %v627
        %v1588 = vunpack.c.l.b16 %v628
        %v1589 = vunpack.c.h.b16 %v628
        %v1590 = vunpack.c.l.b16 %v629
        %v1591 = vunpack.c.h.b16 %v629
        %v1592 = vunpack.c.l.b16 %v630
        %v1593 = vunpack.c.h.b16 %v630
        %v1594 = vunpack.c.l.b16 %v631
        %v1595 = vunpack.c.h.b16 %v631
        %v1596 = vunpack.c.l.b16 %v632
        %v1597 = vunpack.c.h.b16 %v632
        %v1598 = vunpack.c.l.b16 %v633
        %v1599 = vunpack.c.h.b16 %v633
        %v1600 = vunpack.c.l.b16 %v634
        %v1601 = vunpack.c.h.b16 %v634
        %v1602 = vunpack.c.l.b16 %v635
        %v1603 = vunpack.c.h.b16 %v635
        %v1604 = vunpack.c.l.b16 %v636
        %v1605 = vunpack.c.h.b16 %v636
        %v1606 = vunpack.c.l.b16 %v637
        %v1607 = vunpack.c.h.b16 %v637
        %v1608 = vpack.c.b16 %v1578, %v1576
        %v1609 = vpack.c.b16 %v1579, %v1577
        %v1610 = vpack.c.b16 %v1582, %v1580
        %v1611 = vpack.c.b16 %v1583, %v1581
        %v1612 = vpack.c.b16 %v1586, %v1584
        %v1613 = vpack.c.b16 %v1587, %v1585
        %v1614 = vpack.c.b16 %v1590, %v1588
        %v1615 = vpack.c.b16 %v1591, %v1589
        %v1616 = vpack.c.b16 %v1594, %v1592
        %v1617 = vpack.c.b16 %v1595, %v1593
        %v1618 = vpack.c.b16 %v1598, %v1596
        %v1619 = vpack.c.b16 %v1599, %v1597
        %v1620 = vpack.c.b16 %v1602, %v1600
        %v1621 = vpack.c.b16 %v1603, %v1601
        %v1622 = vpack.c.b16 %v1606, %v1604
        %v1623 = vpack.c.b16 %v1607, %v1605
        %1640 = vmatpush.bf16.msra.mxu0 %v1622
        %1641 = vmatpush.bf16.msra.mxu0 %v1620
        %1642 = vmatpush.bf16.msra.mxu0 %v1618
        %1643 = vmatpush.bf16.msra.mxu0 %v1616
        %1644 = vmatpush.bf16.msra.mxu0 %v1614
        %1645 = vmatpush.bf16.msra.mxu0 %v1612
        %1646 = vmatpush.bf16.msra.mxu0 %v1610
        %1647 = vmatpush.bf16.msra.mxu0 %v1608
        %1648 = vmatmul.bf16.gmra.mxu0 %v1559
        %v1649 = vpop.f32.mrf.mxu0
        %v1650 = vadd.f32 %v550, %v1649
        %v1651 = vpop.f32.mrf.mxu0
        %v1652 = vadd.f32 %v552, %v1651
        %1653 = vdwg.mxu0
        %1654 = vmatpush.bf16.msra.mxu0 %v1623
        %1655 = vmatpush.bf16.msra.mxu0 %v1621
        %1656 = vmatpush.bf16.msra.mxu0 %v1619
        %1657 = vmatpush.bf16.msra.mxu0 %v1617
        %1658 = vmatpush.bf16.msra.mxu0 %v1615
        %1659 = vmatpush.bf16.msra.mxu0 %v1613
        %1660 = vmatpush.bf16.msra.mxu0 %v1611
        %1661 = vmatpush.bf16.msra.mxu0 %v1609
        %1662 = vmatmul.bf16.gmra.mxu0 %v1559
        %v1663 = vpop.f32.mrf.mxu0
        %v1664 = vadd.f32 %v551, %v1663
        %v1665 = vpop.f32.mrf.mxu0
        %v1666 = vadd.f32 %v553, %v1665
        %1667 = vdwg.mxu0
        %v1668 = vadd.f32 %v1650, %v1664
        %1669 = vadd.xlane.f32.xlu0 %v1668
        %v1670 = vpop.xlane.xlu0 %1669
        %v1671 = vadd.f32 %v1652, %v1666
        %1672 = vadd.xlane.f32.xlu0 %v1671
        %v1673 = vpop.xlane.xlu0 %1672
        %v1674 = vrcp.pop 256.0
        %v1675 = vmul.f32 256.0, %v1674
        %v1676 = vsub.f32 1.0, %v1675
        %v1677 = vmul.f32 %v1674, %v1676
        %v1678 = vadd.f32 %v1674, %v1677
        %vm1679 = vweird.f32 %v1674
        %v1680 = vsel %vm1679, %v1674, %v1678
        %v1681 = vmul.f32 %v1670, %v1680
        %v1682 = vmul.f32 %v1673, %v1680
        %v1683 = vsub.f32 %v1650, %v1681
        %v1684 = vsub.f32 %v1664, %v1681
        %v1685 = vsub.f32 %v1652, %v1682
        %v1686 = vsub.f32 %v1666, %v1682
        %v1687 = vmul.f32 %v1683, %v1683
        %v1688 = vmul.f32 %v1684, %v1684
        %v1689 = vmul.f32 %v1685, %v1685
        %v1690 = vmul.f32 %v1686, %v1686
        %v1691 = vadd.f32 %v1687, %v1688
        %1692 = vadd.xlane.f32.xlu0 %v1691
        %v1693 = vpop.xlane.xlu0 %1692
        %v1694 = vadd.f32 %v1689, %v1690
        %1695 = vadd.xlane.f32.xlu0 %v1694
        %v1696 = vpop.xlane.xlu0 %1695
        %v1697 = vmul.f32 %v1693, %v1680
        %v1698 = vmul.f32 %v1696, %v1680
        %v1699 = vadd.f32 %v1697, 1e-05
        %v1700 = vadd.f32 %v1698, 1e-05
        %v1701 = vrsqrt.pop %v1699
        %v1702 = vmul.f32 %v1701, %v1699
        %v1703 = vmul.f32 %v1702, %v1701
        %v1704 = vmul.f32 0.5, %v1703
        %v1705 = vsub.f32 1.5, %v1704
        %v1706 = vmul.f32 %v1701, %v1705
        %vm1707 = vweird.f32 %v1699
        %vm1708 = vweird.f32 %v1701
        %vm1709 = vmor %vm1707, %vm1708
        %v1710 = vsel %vm1709, %v1701, %v1706
        %v1711 = vrsqrt.pop %v1700
        %v1712 = vmul.f32 %v1711, %v1700
        %v1713 = vmul.f32 %v1712, %v1711
        %v1714 = vmul.f32 0.5, %v1713
        %v1715 = vsub.f32 1.5, %v1714
        %v1716 = vmul.f32 %v1711, %v1715
        %vm1717 = vweird.f32 %v1700
        %vm1718 = vweird.f32 %v1711
        %vm1719 = vmor %vm1717, %vm1718
        %v1720 = vsel %vm1719, %v1711, %v1716
        %v1721 = vmul.f32 %v1683, %v1710
        %v1722 = vmul.f32 %v1684, %v1710
        %v1723 = vmul.f32 %v1685, %v1720
        %v1724 = vmul.f32 %v1686, %v1720
        %v1726 = vperm.slane %v894, 0
        %v1727 = vperm.slane %v894, 1
        %v1730 = vmul.f32 %v1721, %v1726
        %v1731 = vmul.f32 %v1722, %v1727
        %v1732 = vmul.f32 %v1723, %v1726
        %v1733 = vmul.f32 %v1724, %v1727
        %v1735 = vperm.slane %v895, 0
        %v1736 = vperm.slane %v895, 1
        %v1739 = vadd.f32 %v1730, %v1735
        %v1740 = vadd.f32 %v1731, %v1736
        %v1741 = vadd.f32 %v1732, %v1735
        %v1742 = vadd.f32 %v1733, %v1736
        %v1743 = vpack.c.bf16 %v1741, %v1739
        %v1744 = vpack.c.bf16 %v1742, %v1740
        %v1746 = vperm.slane %v898, 0
        %v1747 = vperm.slane %v898, 1
        %v1748 = vperm.slane %v898, 2
        %v1749 = vperm.slane %v898, 3
        %v1750 = vperm.slane %v898, 4
        %v1751 = vperm.slane %v898, 5
        %v1752 = vperm.slane %v898, 6
        %v1753 = vperm.slane %v898, 7
        %v1890 = vunpack.c.l.b16 %v638
        %v1891 = vunpack.c.h.b16 %v638
        %v1892 = vunpack.c.l.b16 %v639
        %v1893 = vunpack.c.h.b16 %v639
        %v1894 = vunpack.c.l.b16 %v640
        %v1895 = vunpack.c.h.b16 %v640
        %v1896 = vunpack.c.l.b16 %v641
        %v1897 = vunpack.c.h.b16 %v641
        %v1898 = vunpack.c.l.b16 %v642
        %v1899 = vunpack.c.h.b16 %v642
        %v1900 = vunpack.c.l.b16 %v643
        %v1901 = vunpack.c.h.b16 %v643
        %v1902 = vunpack.c.l.b16 %v644
        %v1903 = vunpack.c.h.b16 %v644
        %v1904 = vunpack.c.l.b16 %v645
        %v1905 = vunpack.c.h.b16 %v645
        %v1906 = vunpack.c.l.b16 %v646
        %v1907 = vunpack.c.h.b16 %v646
        %v1908 = vunpack.c.l.b16 %v647
        %v1909 = vunpack.c.h.b16 %v647
        %v1910 = vunpack.c.l.b16 %v648
        %v1911 = vunpack.c.h.b16 %v648
        %v1912 = vunpack.c.l.b16 %v649
        %v1913 = vunpack.c.h.b16 %v649
        %v1914 = vunpack.c.l.b16 %v650
        %v1915 = vunpack.c.h.b16 %v650
        %v1916 = vunpack.c.l.b16 %v651
        %v1917 = vunpack.c.h.b16 %v651
        %v1918 = vunpack.c.l.b16 %v652
        %v1919 = vunpack.c.h.b16 %v652
        %v1920 = vunpack.c.l.b16 %v653
        %v1921 = vunpack.c.h.b16 %v653
        %v1922 = vunpack.c.l.b16 %v654
        %v1923 = vunpack.c.h.b16 %v654
        %v1924 = vunpack.c.l.b16 %v655
        %v1925 = vunpack.c.h.b16 %v655
        %v1926 = vunpack.c.l.b16 %v656
        %v1927 = vunpack.c.h.b16 %v656
        %v1928 = vunpack.c.l.b16 %v657
        %v1929 = vunpack.c.h.b16 %v657
        %v1930 = vunpack.c.l.b16 %v658
        %v1931 = vunpack.c.h.b16 %v658
        %v1932 = vunpack.c.l.b16 %v659
        %v1933 = vunpack.c.h.b16 %v659
        %v1934 = vunpack.c.l.b16 %v660
        %v1935 = vunpack.c.h.b16 %v660
        %v1936 = vunpack.c.l.b16 %v661
        %v1937 = vunpack.c.h.b16 %v661
        %v1938 = vunpack.c.l.b16 %v662
        %v1939 = vunpack.c.h.b16 %v662
        %v1940 = vunpack.c.l.b16 %v663
        %v1941 = vunpack.c.h.b16 %v663
        %v1942 = vunpack.c.l.b16 %v664
        %v1943 = vunpack.c.h.b16 %v664
        %v1944 = vunpack.c.l.b16 %v665
        %v1945 = vunpack.c.h.b16 %v665
        %v1946 = vunpack.c.l.b16 %v666
        %v1947 = vunpack.c.h.b16 %v666
        %v1948 = vunpack.c.l.b16 %v667
        %v1949 = vunpack.c.h.b16 %v667
        %v1950 = vunpack.c.l.b16 %v668
        %v1951 = vunpack.c.h.b16 %v668
        %v1952 = vunpack.c.l.b16 %v669
        %v1953 = vunpack.c.h.b16 %v669
        %v1954 = vunpack.c.l.b16 %v670
        %v1955 = vunpack.c.h.b16 %v670
        %v1956 = vunpack.c.l.b16 %v671
        %v1957 = vunpack.c.h.b16 %v671
        %v1958 = vunpack.c.l.b16 %v672
        %v1959 = vunpack.c.h.b16 %v672
        %v1960 = vunpack.c.l.b16 %v673
        %v1961 = vunpack.c.h.b16 %v673
        %v1962 = vunpack.c.l.b16 %v674
        %v1963 = vunpack.c.h.b16 %v674
        %v1964 = vunpack.c.l.b16 %v675
        %v1965 = vunpack.c.h.b16 %v675
        %v1966 = vunpack.c.l.b16 %v676
        %v1967 = vunpack.c.h.b16 %v676
        %v1968 = vunpack.c.l.b16 %v677
        %v1969 = vunpack.c.h.b16 %v677
        %v1970 = vunpack.c.l.b16 %v678
        %v1971 = vunpack.c.h.b16 %v678
        %v1972 = vunpack.c.l.b16 %v679
        %v1973 = vunpack.c.h.b16 %v679
        %v1974 = vunpack.c.l.b16 %v680
        %v1975 = vunpack.c.h.b16 %v680
        %v1976 = vunpack.c.l.b16 %v681
        %v1977 = vunpack.c.h.b16 %v681
        %v1978 = vunpack.c.l.b16 %v682
        %v1979 = vunpack.c.h.b16 %v682
        %v1980 = vunpack.c.l.b16 %v683
        %v1981 = vunpack.c.h.b16 %v683
        %v1982 = vunpack.c.l.b16 %v684
        %v1983 = vunpack.c.h.b16 %v684
        %v1984 = vunpack.c.l.b16 %v685
        %v1985 = vunpack.c.h.b16 %v685
        %v1986 = vunpack.c.l.b16 %v686
        %v1987 = vunpack.c.h.b16 %v686
        %v1988 = vunpack.c.l.b16 %v687
        %v1989 = vunpack.c.h.b16 %v687
        %v1990 = vunpack.c.l.b16 %v688
        %v1991 = vunpack.c.h.b16 %v688
        %v1992 = vunpack.c.l.b16 %v689
        %v1993 = vunpack.c.h.b16 %v689
        %v1994 = vunpack.c.l.b16 %v690
        %v1995 = vunpack.c.h.b16 %v690
        %v1996 = vunpack.c.l.b16 %v691
        %v1997 = vunpack.c.h.b16 %v691
        %v1998 = vunpack.c.l.b16 %v692
        %v1999 = vunpack.c.h.b16 %v692
        %v2000 = vunpack.c.l.b16 %v693
        %v2001 = vunpack.c.h.b16 %v693
        %v2002 = vunpack.c.l.b16 %v694
        %v2003 = vunpack.c.h.b16 %v694
        %v2004 = vunpack.c.l.b16 %v695
        %v2005 = vunpack.c.h.b16 %v695
        %v2006 = vunpack.c.l.b16 %v696
        %v2007 = vunpack.c.h.b16 %v696
        %v2008 = vunpack.c.l.b16 %v697
        %v2009 = vunpack.c.h.b16 %v697
        %v2010 = vunpack.c.l.b16 %v698
        %v2011 = vunpack.c.h.b16 %v698
        %v2012 = vunpack.c.l.b16 %v699
        %v2013 = vunpack.c.h.b16 %v699
        %v2014 = vunpack.c.l.b16 %v700
        %v2015 = vunpack.c.h.b16 %v700
        %v2016 = vunpack.c.l.b16 %v701
        %v2017 = vunpack.c.h.b16 %v701
        %v2018 = vunpack.c.l.b16 %v702
        %v2019 = vunpack.c.h.b16 %v702
        %v2020 = vunpack.c.l.b16 %v703
        %v2021 = vunpack.c.h.b16 %v703
        %v2022 = vunpack.c.l.b16 %v704
        %v2023 = vunpack.c.h.b16 %v704
        %v2024 = vunpack.c.l.b16 %v705
        %v2025 = vunpack.c.h.b16 %v705
        %v2026 = vunpack.c.l.b16 %v706
        %v2027 = vunpack.c.h.b16 %v706
        %v2028 = vunpack.c.l.b16 %v707
        %v2029 = vunpack.c.h.b16 %v707
        %v2030 = vunpack.c.l.b16 %v708
        %v2031 = vunpack.c.h.b16 %v708
        %v2032 = vunpack.c.l.b16 %v709
        %v2033 = vunpack.c.h.b16 %v709
        %v2034 = vunpack.c.l.b16 %v710
        %v2035 = vunpack.c.h.b16 %v710
        %v2036 = vunpack.c.l.b16 %v711
        %v2037 = vunpack.c.h.b16 %v711
        %v2038 = vunpack.c.l.b16 %v712
        %v2039 = vunpack.c.h.b16 %v712
        %v2040 = vunpack.c.l.b16 %v713
        %v2041 = vunpack.c.h.b16 %v713
        %v2042 = vunpack.c.l.b16 %v714
        %v2043 = vunpack.c.h.b16 %v714
        %v2044 = vunpack.c.l.b16 %v715
        %v2045 = vunpack.c.h.b16 %v715
        %v2046 = vunpack.c.l.b16 %v716
        %v2047 = vunpack.c.h.b16 %v716
        %v2048 = vunpack.c.l.b16 %v717
        %v2049 = vunpack.c.h.b16 %v717
        %v2050 = vunpack.c.l.b16 %v718
        %v2051 = vunpack.c.h.b16 %v718
        %v2052 = vunpack.c.l.b16 %v719
        %v2053 = vunpack.c.h.b16 %v719
        %v2054 = vunpack.c.l.b16 %v720
        %v2055 = vunpack.c.h.b16 %v720
        %v2056 = vunpack.c.l.b16 %v721
        %v2057 = vunpack.c.h.b16 %v721
        %v2058 = vunpack.c.l.b16 %v722
        %v2059 = vunpack.c.h.b16 %v722
        %v2060 = vunpack.c.l.b16 %v723
        %v2061 = vunpack.c.h.b16 %v723
        %v2062 = vunpack.c.l.b16 %v724
        %v2063 = vunpack.c.h.b16 %v724
        %v2064 = vunpack.c.l.b16 %v725
        %v2065 = vunpack.c.h.b16 %v725
        %v2066 = vunpack.c.l.b16 %v726
        %v2067 = vunpack.c.h.b16 %v726
        %v2068 = vunpack.c.l.b16 %v727
        %v2069 = vunpack.c.h.b16 %v727
        %v2070 = vunpack.c.l.b16 %v728
        %v2071 = vunpack.c.h.b16 %v728
        %v2072 = vunpack.c.l.b16 %v729
        %v2073 = vunpack.c.h.b16 %v729
        %v2074 = vunpack.c.l.b16 %v730
        %v2075 = vunpack.c.h.b16 %v730
        %v2076 = vunpack.c.l.b16 %v731
        %v2077 = vunpack.c.h.b16 %v731
        %v2078 = vunpack.c.l.b16 %v732
        %v2079 = vunpack.c.h.b16 %v732
        %v2080 = vunpack.c.l.b16 %v733
        %v2081 = vunpack.c.h.b16 %v733
        %v2082 = vunpack.c.l.b16 %v734
        %v2083 = vunpack.c.h.b16 %v734
        %v2084 = vunpack.c.l.b16 %v735
        %v2085 = vunpack.c.h.b16 %v735
        %v2086 = vunpack.c.l.b16 %v736
        %v2087 = vunpack.c.h.b16 %v736
        %v2088 = vunpack.c.l.b16 %v737
        %v2089 = vunpack.c.h.b16 %v737
        %v2090 = vunpack.c.l.b16 %v738
        %v2091 = vunpack.c.h.b16 %v738
        %v2092 = vunpack.c.l.b16 %v739
        %v2093 = vunpack.c.h.b16 %v739
        %v2094 = vunpack.c.l.b16 %v740
        %v2095 = vunpack.c.h.b16 %v740
        %v2096 = vunpack.c.l.b16 %v741
        %v2097 = vunpack.c.h.b16 %v741
        %v2098 = vunpack.c.l.b16 %v742
        %v2099 = vunpack.c.h.b16 %v742
        %v2100 = vunpack.c.l.b16 %v743
        %v2101 = vunpack.c.h.b16 %v743
        %v2102 = vunpack.c.l.b16 %v744
        %v2103 = vunpack.c.h.b16 %v744
        %v2104 = vunpack.c.l.b16 %v745
        %v2105 = vunpack.c.h.b16 %v745
        %v2106 = vunpack.c.l.b16 %v746
        %v2107 = vunpack.c.h.b16 %v746
        %v2108 = vunpack.c.l.b16 %v747
        %v2109 = vunpack.c.h.b16 %v747
        %v2110 = vunpack.c.l.b16 %v748
        %v2111 = vunpack.c.h.b16 %v748
        %v2112 = vunpack.c.l.b16 %v749
        %v2113 = vunpack.c.h.b16 %v749
        %v2114 = vunpack.c.l.b16 %v750
        %v2115 = vunpack.c.h.b16 %v750
        %v2116 = vunpack.c.l.b16 %v751
        %v2117 = vunpack.c.h.b16 %v751
        %v2118 = vunpack.c.l.b16 %v752
        %v2119 = vunpack.c.h.b16 %v752
        %v2120 = vunpack.c.l.b16 %v753
        %v2121 = vunpack.c.h.b16 %v753
        %v2122 = vunpack.c.l.b16 %v754
        %v2123 = vunpack.c.h.b16 %v754
        %v2124 = vunpack.c.l.b16 %v755
        %v2125 = vunpack.c.h.b16 %v755
        %v2126 = vunpack.c.l.b16 %v756
        %v2127 = vunpack.c.h.b16 %v756
        %v2128 = vunpack.c.l.b16 %v757
        %v2129 = vunpack.c.h.b16 %v757
        %v2130 = vunpack.c.l.b16 %v758
        %v2131 = vunpack.c.h.b16 %v758
        %v2132 = vunpack.c.l.b16 %v759
        %v2133 = vunpack.c.h.b16 %v759
        %v2134 = vunpack.c.l.b16 %v760
        %v2135 = vunpack.c.h.b16 %v760
        %v2136 = vunpack.c.l.b16 %v761
        %v2137 = vunpack.c.h.b16 %v761
        %v2138 = vunpack.c.l.b16 %v762
        %v2139 = vunpack.c.h.b16 %v762
        %v2140 = vunpack.c.l.b16 %v763
        %v2141 = vunpack.c.h.b16 %v763
        %v2142 = vunpack.c.l.b16 %v764
        %v2143 = vunpack.c.h.b16 %v764
        %v2144 = vunpack.c.l.b16 %v765
        %v2145 = vunpack.c.h.b16 %v765
        %v2146 = vpack.c.b16 %v1898, %v1890
        %v2147 = vpack.c.b16 %v1899, %v1891
        %v2148 = vpack.c.b16 %v1900, %v1892
        %v2149 = vpack.c.b16 %v1901, %v1893
        %v2150 = vpack.c.b16 %v1902, %v1894
        %v2151 = vpack.c.b16 %v1903, %v1895
        %v2152 = vpack.c.b16 %v1904, %v1896
        %v2153 = vpack.c.b16 %v1905, %v1897
        %v2154 = vpack.c.b16 %v1914, %v1906
        %v2155 = vpack.c.b16 %v1915, %v1907
        %v2156 = vpack.c.b16 %v1916, %v1908
        %v2157 = vpack.c.b16 %v1917, %v1909
        %v2158 = vpack.c.b16 %v1918, %v1910
        %v2159 = vpack.c.b16 %v1919, %v1911
        %v2160 = vpack.c.b16 %v1920, %v1912
        %v2161 = vpack.c.b16 %v1921, %v1913
        %v2162 = vpack.c.b16 %v1930, %v1922
        %v2163 = vpack.c.b16 %v1931, %v1923
        %v2164 = vpack.c.b16 %v1932, %v1924
        %v2165 = vpack.c.b16 %v1933, %v1925
        %v2166 = vpack.c.b16 %v1934, %v1926
        %v2167 = vpack.c.b16 %v1935, %v1927
        %v2168 = vpack.c.b16 %v1936, %v1928
        %v2169 = vpack.c.b16 %v1937, %v1929
        %v2170 = vpack.c.b16 %v1946, %v1938
        %v2171 = vpack.c.b16 %v1947, %v1939
        %v2172 = vpack.c.b16 %v1948, %v1940
        %v2173 = vpack.c.b16 %v1949, %v1941
        %v2174 = vpack.c.b16 %v1950, %v1942
        %v2175 = vpack.c.b16 %v1951, %v1943
        %v2176 = vpack.c.b16 %v1952, %v1944
        %v2177 = vpack.c.b16 %v1953, %v1945
        %v2178 = vpack.c.b16 %v1962, %v1954
        %v2179 = vpack.c.b16 %v1963, %v1955
        %v2180 = vpack.c.b16 %v1964, %v1956
        %v2181 = vpack.c.b16 %v1965, %v1957
        %v2182 = vpack.c.b16 %v1966, %v1958
        %v2183 = vpack.c.b16 %v1967, %v1959
        %v2184 = vpack.c.b16 %v1968, %v1960
        %v2185 = vpack.c.b16 %v1969, %v1961
        %v2186 = vpack.c.b16 %v1978, %v1970
        %v2187 = vpack.c.b16 %v1979, %v1971
        %v2188 = vpack.c.b16 %v1980, %v1972
        %v2189 = vpack.c.b16 %v1981, %v1973
        %v2190 = vpack.c.b16 %v1982, %v1974
        %v2191 = vpack.c.b16 %v1983, %v1975
        %v2192 = vpack.c.b16 %v1984, %v1976
        %v2193 = vpack.c.b16 %v1985, %v1977
        %v2194 = vpack.c.b16 %v1994, %v1986
        %v2195 = vpack.c.b16 %v1995, %v1987
        %v2196 = vpack.c.b16 %v1996, %v1988
        %v2197 = vpack.c.b16 %v1997, %v1989
        %v2198 = vpack.c.b16 %v1998, %v1990
        %v2199 = vpack.c.b16 %v1999, %v1991
        %v2200 = vpack.c.b16 %v2000, %v1992
        %v2201 = vpack.c.b16 %v2001, %v1993
        %v2202 = vpack.c.b16 %v2010, %v2002
        %v2203 = vpack.c.b16 %v2011, %v2003
        %v2204 = vpack.c.b16 %v2012, %v2004
        %v2205 = vpack.c.b16 %v2013, %v2005
        %v2206 = vpack.c.b16 %v2014, %v2006
        %v2207 = vpack.c.b16 %v2015, %v2007
        %v2208 = vpack.c.b16 %v2016, %v2008
        %v2209 = vpack.c.b16 %v2017, %v2009
        %v2210 = vpack.c.b16 %v2026, %v2018
        %v2211 = vpack.c.b16 %v2027, %v2019
        %v2212 = vpack.c.b16 %v2028, %v2020
        %v2213 = vpack.c.b16 %v2029, %v2021
        %v2214 = vpack.c.b16 %v2030, %v2022
        %v2215 = vpack.c.b16 %v2031, %v2023
        %v2216 = vpack.c.b16 %v2032, %v2024
        %v2217 = vpack.c.b16 %v2033, %v2025
        %v2218 = vpack.c.b16 %v2042, %v2034
        %v2219 = vpack.c.b16 %v2043, %v2035
        %v2220 = vpack.c.b16 %v2044, %v2036
        %v2221 = vpack.c.b16 %v2045, %v2037
        %v2222 = vpack.c.b16 %v2046, %v2038
        %v2223 = vpack.c.b16 %v2047, %v2039
        %v2224 = vpack.c.b16 %v2048, %v2040
        %v2225 = vpack.c.b16 %v2049, %v2041
        %v2226 = vpack.c.b16 %v2058, %v2050
        %v2227 = vpack.c.b16 %v2059, %v2051
        %v2228 = vpack.c.b16 %v2060, %v2052
        %v2229 = vpack.c.b16 %v2061, %v2053
        %v2230 = vpack.c.b16 %v2062, %v2054
        %v2231 = vpack.c.b16 %v2063, %v2055
        %v2232 = vpack.c.b16 %v2064, %v2056
        %v2233 = vpack.c.b16 %v2065, %v2057
        %v2234 = vpack.c.b16 %v2074, %v2066
        %v2235 = vpack.c.b16 %v2075, %v2067
        %v2236 = vpack.c.b16 %v2076, %v2068
        %v2237 = vpack.c.b16 %v2077, %v2069
        %v2238 = vpack.c.b16 %v2078, %v2070
        %v2239 = vpack.c.b16 %v2079, %v2071
        %v2240 = vpack.c.b16 %v2080, %v2072
        %v2241 = vpack.c.b16 %v2081, %v2073
        %v2242 = vpack.c.b16 %v2090, %v2082
        %v2243 = vpack.c.b16 %v2091, %v2083
        %v2244 = vpack.c.b16 %v2092, %v2084
        %v2245 = vpack.c.b16 %v2093, %v2085
        %v2246 = vpack.c.b16 %v2094, %v2086
        %v2247 = vpack.c.b16 %v2095, %v2087
        %v2248 = vpack.c.b16 %v2096, %v2088
        %v2249 = vpack.c.b16 %v2097, %v2089
        %v2250 = vpack.c.b16 %v2106, %v2098
        %v2251 = vpack.c.b16 %v2107, %v2099
        %v2252 = vpack.c.b16 %v2108, %v2100
        %v2253 = vpack.c.b16 %v2109, %v2101
        %v2254 = vpack.c.b16 %v2110, %v2102
        %v2255 = vpack.c.b16 %v2111, %v2103
        %v2256 = vpack.c.b16 %v2112, %v2104
        %v2257 = vpack.c.b16 %v2113, %v2105
        %v2258 = vpack.c.b16 %v2122, %v2114
        %v2259 = vpack.c.b16 %v2123, %v2115
        %v2260 = vpack.c.b16 %v2124, %v2116
        %v2261 = vpack.c.b16 %v2125, %v2117
        %v2262 = vpack.c.b16 %v2126, %v2118
        %v2263 = vpack.c.b16 %v2127, %v2119
        %v2264 = vpack.c.b16 %v2128, %v2120
        %v2265 = vpack.c.b16 %v2129, %v2121
        %v2266 = vpack.c.b16 %v2138, %v2130
        %v2267 = vpack.c.b16 %v2139, %v2131
        %v2268 = vpack.c.b16 %v2140, %v2132
        %v2269 = vpack.c.b16 %v2141, %v2133
        %v2270 = vpack.c.b16 %v2142, %v2134
        %v2271 = vpack.c.b16 %v2143, %v2135
        %v2272 = vpack.c.b16 %v2144, %v2136
        %v2273 = vpack.c.b16 %v2145, %v2137
        %2402 = vmatpush.bf16.msra.mxu0 %v2202
        %2403 = vmatpush.bf16.msra.mxu0 %v2194
        %2404 = vmatpush.bf16.msra.mxu0 %v2186
        %2405 = vmatpush.bf16.msra.mxu0 %v2178
        %2406 = vmatpush.bf16.msra.mxu0 %v2170
        %2407 = vmatpush.bf16.msra.mxu0 %v2162
        %2408 = vmatpush.bf16.msra.mxu0 %v2154
        %2409 = vmatpush.bf16.msra.mxu0 %v2146
        %2410 = vmatmul.bf16.gmra.mxu0 %v1743
        %v2411 = vpop.f32.mrf.mxu0
        %v2412 = vadd.f32 %v1746, %v2411
        %v2413 = vpop.f32.mrf.mxu0
        %v2414 = vadd.f32 %v1746, %v2413
        %2415 = vdwg.mxu0
        %2416 = vmatpush.bf16.msra.mxu0 %v2266
        %2417 = vmatpush.bf16.msra.mxu0 %v2258
        %2418 = vmatpush.bf16.msra.mxu0 %v2250
        %2419 = vmatpush.bf16.msra.mxu0 %v2242
        %2420 = vmatpush.bf16.msra.mxu0 %v2234
        %2421 = vmatpush.bf16.msra.mxu0 %v2226
        %2422 = vmatpush.bf16.msra.mxu0 %v2218
        %2423 = vmatpush.bf16.msra.mxu0 %v2210
        %2424 = vmatmul.bf16.gmra.mxu0 %v1744
        %v2425 = vpop.f32.mrf.mxu0
        %v2426 = vadd.f32 %v2412, %v2425
        %v2427 = vpop.f32.mrf.mxu0
        %v2428 = vadd.f32 %v2414, %v2427
        %2429 = vdwg.mxu0
        %2430 = vmatpush.bf16.msra.mxu0 %v2203
        %2431 = vmatpush.bf16.msra.mxu0 %v2195
        %2432 = vmatpush.bf16.msra.mxu0 %v2187
        %2433 = vmatpush.bf16.msra.mxu0 %v2179
        %2434 = vmatpush.bf16.msra.mxu0 %v2171
        %2435 = vmatpush.bf16.msra.mxu0 %v2163
        %2436 = vmatpush.bf16.msra.mxu0 %v2155
        %2437 = vmatpush.bf16.msra.mxu0 %v2147
        %2438 = vmatmul.bf16.gmra.mxu0 %v1743
        %v2439 = vpop.f32.mrf.mxu0
        %v2440 = vadd.f32 %v1747, %v2439
        %v2441 = vpop.f32.mrf.mxu0
        %v2442 = vadd.f32 %v1747, %v2441
        %2443 = vdwg.mxu0
        %2444 = vmatpush.bf16.msra.mxu0 %v2267
        %2445 = vmatpush.bf16.msra.mxu0 %v2259
        %2446 = vmatpush.bf16.msra.mxu0 %v2251
        %2447 = vmatpush.bf16.msra.mxu0 %v2243
        %2448 = vmatpush.bf16.msra.mxu0 %v2235
        %2449 = vmatpush.bf16.msra.mxu0 %v2227
        %2450 = vmatpush.bf16.msra.mxu0 %v2219
        %2451 = vmatpush.bf16.msra.mxu0 %v2211
        %2452 = vmatmul.bf16.gmra.mxu0 %v1744
        %v2453 = vpop.f32.mrf.mxu0
        %v2454 = vadd.f32 %v2440, %v2453
        %v2455 = vpop.f32.mrf.mxu0
        %v2456 = vadd.f32 %v2442, %v2455
        %2457 = vdwg.mxu0
        %2458 = vmatpush.bf16.msra.mxu0 %v2204
        %2459 = vmatpush.bf16.msra.mxu0 %v2196
        %2460 = vmatpush.bf16.msra.mxu0 %v2188
        %2461 = vmatpush.bf16.msra.mxu0 %v2180
        %2462 = vmatpush.bf16.msra.mxu0 %v2172
        %2463 = vmatpush.bf16.msra.mxu0 %v2164
        %2464 = vmatpush.bf16.msra.mxu0 %v2156
        %2465 = vmatpush.bf16.msra.mxu0 %v2148
        %2466 = vmatmul.bf16.gmra.mxu0 %v1743
        %v2467 = vpop.f32.mrf.mxu0
        %v2468 = vadd.f32 %v1748, %v2467
        %v2469 = vpop.f32.mrf.mxu0
        %v2470 = vadd.f32 %v1748, %v2469
        %2471 = vdwg.mxu0
        %2472 = vmatpush.bf16.msra.mxu0 %v2268
        %2473 = vmatpush.bf16.msra.mxu0 %v2260
        %2474 = vmatpush.bf16.msra.mxu0 %v2252
        %2475 = vmatpush.bf16.msra.mxu0 %v2244
        %2476 = vmatpush.bf16.msra.mxu0 %v2236
        %2477 = vmatpush.bf16.msra.mxu0 %v2228
        %2478 = vmatpush.bf16.msra.mxu0 %v2220
        %2479 = vmatpush.bf16.msra.mxu0 %v2212
        %2480 = vmatmul.bf16.gmra.mxu0 %v1744
        %v2481 = vpop.f32.mrf.mxu0
        %v2482 = vadd.f32 %v2468, %v2481
        %v2483 = vpop.f32.mrf.mxu0
        %v2484 = vadd.f32 %v2470, %v2483
        %2485 = vdwg.mxu0
        %2486 = vmatpush.bf16.msra.mxu0 %v2205
        %2487 = vmatpush.bf16.msra.mxu0 %v2197
        %2488 = vmatpush.bf16.msra.mxu0 %v2189
        %2489 = vmatpush.bf16.msra.mxu0 %v2181
        %2490 = vmatpush.bf16.msra.mxu0 %v2173
        %2491 = vmatpush.bf16.msra.mxu0 %v2165
        %2492 = vmatpush.bf16.msra.mxu0 %v2157
        %2493 = vmatpush.bf16.msra.mxu0 %v2149
        %2494 = vmatmul.bf16.gmra.mxu0 %v1743
        %v2495 = vpop.f32.mrf.mxu0
        %v2496 = vadd.f32 %v1749, %v2495
        %v2497 = vpop.f32.mrf.mxu0
        %v2498 = vadd.f32 %v1749, %v2497
        %2499 = vdwg.mxu0
        %2500 = vmatpush.bf16.msra.mxu0 %v2269
        %2501 = vmatpush.bf16.msra.mxu0 %v2261
        %2502 = vmatpush.bf16.msra.mxu0 %v2253
        %2503 = vmatpush.bf16.msra.mxu0 %v2245
        %2504 = vmatpush.bf16.msra.mxu0 %v2237
        %2505 = vmatpush.bf16.msra.mxu0 %v2229
        %2506 = vmatpush.bf16.msra.mxu0 %v2221
        %2507 = vmatpush.bf16.msra.mxu0 %v2213
        %2508 = vmatmul.bf16.gmra.mxu0 %v1744
        %v2509 = vpop.f32.mrf.mxu0
        %v2510 = vadd.f32 %v2496, %v2509
        %v2511 = vpop.f32.mrf.mxu0
        %v2512 = vadd.f32 %v2498, %v2511
        %2513 = vdwg.mxu0
        %2514 = vmatpush.bf16.msra.mxu0 %v2206
        %2515 = vmatpush.bf16.msra.mxu0 %v2198
        %2516 = vmatpush.bf16.msra.mxu0 %v2190
        %2517 = vmatpush.bf16.msra.mxu0 %v2182
        %2518 = vmatpush.bf16.msra.mxu0 %v2174
        %2519 = vmatpush.bf16.msra.mxu0 %v2166
        %2520 = vmatpush.bf16.msra.mxu0 %v2158
        %2521 = vmatpush.bf16.msra.mxu0 %v2150
        %2522 = vmatmul.bf16.gmra.mxu0 %v1743
        %v2523 = vpop.f32.mrf.mxu0
        %v2524 = vadd.f32 %v1750, %v2523
        %v2525 = vpop.f32.mrf.mxu0
        %v2526 = vadd.f32 %v1750, %v2525
        %2527 = vdwg.mxu0
        %2528 = vmatpush.bf16.msra.mxu0 %v2270
        %2529 = vmatpush.bf16.msra.mxu0 %v2262
        %2530 = vmatpush.bf16.msra.mxu0 %v2254
        %2531 = vmatpush.bf16.msra.mxu0 %v2246
        %2532 = vmatpush.bf16.msra.mxu0 %v2238
        %2533 = vmatpush.bf16.msra.mxu0 %v2230
        %2534 = vmatpush.bf16.msra.mxu0 %v2222
        %2535 = vmatpush.bf16.msra.mxu0 %v2214
        %2536 = vmatmul.bf16.gmra.mxu0 %v1744
        %v2537 = vpop.f32.mrf.mxu0
        %v2538 = vadd.f32 %v2524, %v2537
        %v2539 = vpop.f32.mrf.mxu0
        %v2540 = vadd.f32 %v2526, %v2539
        %2541 = vdwg.mxu0
        %2542 = vmatpush.bf16.msra.mxu0 %v2207
        %2543 = vmatpush.bf16.msra.mxu0 %v2199
        %2544 = vmatpush.bf16.msra.mxu0 %v2191
        %2545 = vmatpush.bf16.msra.mxu0 %v2183
        %2546 = vmatpush.bf16.msra.mxu0 %v2175
        %2547 = vmatpush.bf16.msra.mxu0 %v2167
        %2548 = vmatpush.bf16.msra.mxu0 %v2159
        %2549 = vmatpush.bf16.msra.mxu0 %v2151
        %2550 = vmatmul.bf16.gmra.mxu0 %v1743
        %v2551 = vpop.f32.mrf.mxu0
        %v2552 = vadd.f32 %v1751, %v2551
        %v2553 = vpop.f32.mrf.mxu0
        %v2554 = vadd.f32 %v1751, %v2553
        %2555 = vdwg.mxu0
        %2556 = vmatpush.bf16.msra.mxu0 %v2271
        %2557 = vmatpush.bf16.msra.mxu0 %v2263
        %2558 = vmatpush.bf16.msra.mxu0 %v2255
        %2559 = vmatpush.bf16.msra.mxu0 %v2247
        %2560 = vmatpush.bf16.msra.mxu0 %v2239
        %2561 = vmatpush.bf16.msra.mxu0 %v2231
        %2562 = vmatpush.bf16.msra.mxu0 %v2223
        %2563 = vmatpush.bf16.msra.mxu0 %v2215
        %2564 = vmatmul.bf16.gmra.mxu0 %v1744
        %v2565 = vpop.f32.mrf.mxu0
        %v2566 = vadd.f32 %v2552, %v2565
        %v2567 = vpop.f32.mrf.mxu0
        %v2568 = vadd.f32 %v2554, %v2567
        %2569 = vdwg.mxu0
        %2570 = vmatpush.bf16.msra.mxu0 %v2208
        %2571 = vmatpush.bf16.msra.mxu0 %v2200
        %2572 = vmatpush.bf16.msra.mxu0 %v2192
        %2573 = vmatpush.bf16.msra.mxu0 %v2184
        %2574 = vmatpush.bf16.msra.mxu0 %v2176
        %2575 = vmatpush.bf16.msra.mxu0 %v2168
        %2576 = vmatpush.bf16.msra.mxu0 %v2160
        %2577 = vmatpush.bf16.msra.mxu0 %v2152
        %2578 = vmatmul.bf16.gmra.mxu0 %v1743
        %v2579 = vpop.f32.mrf.mxu0
        %v2580 = vadd.f32 %v1752, %v2579
        %v2581 = vpop.f32.mrf.mxu0
        %v2582 = vadd.f32 %v1752, %v2581
        %2583 = vdwg.mxu0
        %2584 = vmatpush.bf16.msra.mxu0 %v2272
        %2585 = vmatpush.bf16.msra.mxu0 %v2264
        %2586 = vmatpush.bf16.msra.mxu0 %v2256
        %2587 = vmatpush.bf16.msra.mxu0 %v2248
        %2588 = vmatpush.bf16.msra.mxu0 %v2240
        %2589 = vmatpush.bf16.msra.mxu0 %v2232
        %2590 = vmatpush.bf16.msra.mxu0 %v2224
        %2591 = vmatpush.bf16.msra.mxu0 %v2216
        %2592 = vmatmul.bf16.gmra.mxu0 %v1744
        %v2593 = vpop.f32.mrf.mxu0
        %v2594 = vadd.f32 %v2580, %v2593
        %v2595 = vpop.f32.mrf.mxu0
        %v2596 = vadd.f32 %v2582, %v2595
        %2597 = vdwg.mxu0
        %2598 = vmatpush.bf16.msra.mxu0 %v2209
        %2599 = vmatpush.bf16.msra.mxu0 %v2201
        %2600 = vmatpush.bf16.msra.mxu0 %v2193
        %2601 = vmatpush.bf16.msra.mxu0 %v2185
        %2602 = vmatpush.bf16.msra.mxu0 %v2177
        %2603 = vmatpush.bf16.msra.mxu0 %v2169
        %2604 = vmatpush.bf16.msra.mxu0 %v2161
        %2605 = vmatpush.bf16.msra.mxu0 %v2153
        %2606 = vmatmul.bf16.gmra.mxu0 %v1743
        %v2607 = vpop.f32.mrf.mxu0
        %v2608 = vadd.f32 %v1753, %v2607
        %v2609 = vpop.f32.mrf.mxu0
        %v2610 = vadd.f32 %v1753, %v2609
        %2611 = vdwg.mxu0
        %2612 = vmatpush.bf16.msra.mxu0 %v2273
        %2613 = vmatpush.bf16.msra.mxu0 %v2265
        %2614 = vmatpush.bf16.msra.mxu0 %v2257
        %2615 = vmatpush.bf16.msra.mxu0 %v2249
        %2616 = vmatpush.bf16.msra.mxu0 %v2241
        %2617 = vmatpush.bf16.msra.mxu0 %v2233
        %2618 = vmatpush.bf16.msra.mxu0 %v2225
        %2619 = vmatpush.bf16.msra.mxu0 %v2217
        %2620 = vmatmul.bf16.gmra.mxu0 %v1744
        %v2621 = vpop.f32.mrf.mxu0
        %v2622 = vadd.f32 %v2608, %v2621
        %v2623 = vpop.f32.mrf.mxu0
        %v2624 = vadd.f32 %v2610, %v2623
        %2625 = vdwg.mxu0
        %v2626 = vmax.f32 %v2426, 0.0
        %v2627 = vmax.f32 %v2454, 0.0
        %v2628 = vmax.f32 %v2482, 0.0
        %v2629 = vmax.f32 %v2510, 0.0
        %v2630 = vmax.f32 %v2538, 0.0
        %v2631 = vmax.f32 %v2566, 0.0
        %v2632 = vmax.f32 %v2594, 0.0
        %v2633 = vmax.f32 %v2622, 0.0
        %v2634 = vmax.f32 %v2428, 0.0
        %v2635 = vmax.f32 %v2456, 0.0
        %v2636 = vmax.f32 %v2484, 0.0
        %v2637 = vmax.f32 %v2512, 0.0
        %v2638 = vmax.f32 %v2540, 0.0
        %v2639 = vmax.f32 %v2568, 0.0
        %v2640 = vmax.f32 %v2596, 0.0
        %v2641 = vmax.f32 %v2624, 0.0
        %v2642 = vpack.c.bf16 %v2634, %v2626
        %v2643 = vpack.c.bf16 %v2635, %v2627
        %v2644 = vpack.c.bf16 %v2636, %v2628
        %v2645 = vpack.c.bf16 %v2637, %v2629
        %v2646 = vpack.c.bf16 %v2638, %v2630
        %v2647 = vpack.c.bf16 %v2639, %v2631
        %v2648 = vpack.c.bf16 %v2640, %v2632
        %v2649 = vpack.c.bf16 %v2641, %v2633
        %v2651 = vperm.slane %v899, 0
        %v2652 = vperm.slane %v899, 1
        %v2783 = vunpack.c.l.b16 %v766
        %v2784 = vunpack.c.h.b16 %v766
        %v2785 = vunpack.c.l.b16 %v767
        %v2786 = vunpack.c.h.b16 %v767
        %v2787 = vunpack.c.l.b16 %v768
        %v2788 = vunpack.c.h.b16 %v768
        %v2789 = vunpack.c.l.b16 %v769
        %v2790 = vunpack.c.h.b16 %v769
        %v2791 = vunpack.c.l.b16 %v770
        %v2792 = vunpack.c.h.b16 %v770
        %v2793 = vunpack.c.l.b16 %v771
        %v2794 = vunpack.c.h.b16 %v771
        %v2795 = vunpack.c.l.b16 %v772
        %v2796 = vunpack.c.h.b16 %v772
        %v2797 = vunpack.c.l.b16 %v773
        %v2798 = vunpack.c.h.b16 %v773
        %v2799 = vunpack.c.l.b16 %v774
        %v2800 = vunpack.c.h.b16 %v774
        %v2801 = vunpack.c.l.b16 %v775
        %v2802 = vunpack.c.h.b16 %v775
        %v2803 = vunpack.c.l.b16 %v776
        %v2804 = vunpack.c.h.b16 %v776
        %v2805 = vunpack.c.l.b16 %v777
        %v2806 = vunpack.c.h.b16 %v777
        %v2807 = vunpack.c.l.b16 %v778
        %v2808 = vunpack.c.h.b16 %v778
        %v2809 = vunpack.c.l.b16 %v779
        %v2810 = vunpack.c.h.b16 %v779
        %v2811 = vunpack.c.l.b16 %v780
        %v2812 = vunpack.c.h.b16 %v780
        %v2813 = vunpack.c.l.b16 %v781
        %v2814 = vunpack.c.h.b16 %v781
        %v2815 = vunpack.c.l.b16 %v782
        %v2816 = vunpack.c.h.b16 %v782
        %v2817 = vunpack.c.l.b16 %v783
        %v2818 = vunpack.c.h.b16 %v783
        %v2819 = vunpack.c.l.b16 %v784
        %v2820 = vunpack.c.h.b16 %v784
        %v2821 = vunpack.c.l.b16 %v785
        %v2822 = vunpack.c.h.b16 %v785
        %v2823 = vunpack.c.l.b16 %v786
        %v2824 = vunpack.c.h.b16 %v786
        %v2825 = vunpack.c.l.b16 %v787
        %v2826 = vunpack.c.h.b16 %v787
        %v2827 = vunpack.c.l.b16 %v788
        %v2828 = vunpack.c.h.b16 %v788
        %v2829 = vunpack.c.l.b16 %v789
        %v2830 = vunpack.c.h.b16 %v789
        %v2831 = vunpack.c.l.b16 %v790
        %v2832 = vunpack.c.h.b16 %v790
        %v2833 = vunpack.c.l.b16 %v791
        %v2834 = vunpack.c.h.b16 %v791
        %v2835 = vunpack.c.l.b16 %v792
        %v2836 = vunpack.c.h.b16 %v792
        %v2837 = vunpack.c.l.b16 %v793
        %v2838 = vunpack.c.h.b16 %v793
        %v2839 = vunpack.c.l.b16 %v794
        %v2840 = vunpack.c.h.b16 %v794
        %v2841 = vunpack.c.l.b16 %v795
        %v2842 = vunpack.c.h.b16 %v795
        %v2843 = vunpack.c.l.b16 %v796
        %v2844 = vunpack.c.h.b16 %v796
        %v2845 = vunpack.c.l.b16 %v797
        %v2846 = vunpack.c.h.b16 %v797
        %v2847 = vunpack.c.l.b16 %v798
        %v2848 = vunpack.c.h.b16 %v798
        %v2849 = vunpack.c.l.b16 %v799
        %v2850 = vunpack.c.h.b16 %v799
        %v2851 = vunpack.c.l.b16 %v800
        %v2852 = vunpack.c.h.b16 %v800
        %v2853 = vunpack.c.l.b16 %v801
        %v2854 = vunpack.c.h.b16 %v801
        %v2855 = vunpack.c.l.b16 %v802
        %v2856 = vunpack.c.h.b16 %v802
        %v2857 = vunpack.c.l.b16 %v803
        %v2858 = vunpack.c.h.b16 %v803
        %v2859 = vunpack.c.l.b16 %v804
        %v2860 = vunpack.c.h.b16 %v804
        %v2861 = vunpack.c.l.b16 %v805
        %v2862 = vunpack.c.h.b16 %v805
        %v2863 = vunpack.c.l.b16 %v806
        %v2864 = vunpack.c.h.b16 %v806
        %v2865 = vunpack.c.l.b16 %v807
        %v2866 = vunpack.c.h.b16 %v807
        %v2867 = vunpack.c.l.b16 %v808
        %v2868 = vunpack.c.h.b16 %v808
        %v2869 = vunpack.c.l.b16 %v809
        %v2870 = vunpack.c.h.b16 %v809
        %v2871 = vunpack.c.l.b16 %v810
        %v2872 = vunpack.c.h.b16 %v810
        %v2873 = vunpack.c.l.b16 %v811
        %v2874 = vunpack.c.h.b16 %v811
        %v2875 = vunpack.c.l.b16 %v812
        %v2876 = vunpack.c.h.b16 %v812
        %v2877 = vunpack.c.l.b16 %v813
        %v2878 = vunpack.c.h.b16 %v813
        %v2879 = vunpack.c.l.b16 %v814
        %v2880 = vunpack.c.h.b16 %v814
        %v2881 = vunpack.c.l.b16 %v815
        %v2882 = vunpack.c.h.b16 %v815
        %v2883 = vunpack.c.l.b16 %v816
        %v2884 = vunpack.c.h.b16 %v816
        %v2885 = vunpack.c.l.b16 %v817
        %v2886 = vunpack.c.h.b16 %v817
        %v2887 = vunpack.c.l.b16 %v818
        %v2888 = vunpack.c.h.b16 %v818
        %v2889 = vunpack.c.l.b16 %v819
        %v2890 = vunpack.c.h.b16 %v819
        %v2891 = vunpack.c.l.b16 %v820
        %v2892 = vunpack.c.h.b16 %v820
        %v2893 = vunpack.c.l.b16 %v821
        %v2894 = vunpack.c.h.b16 %v821
        %v2895 = vunpack.c.l.b16 %v822
        %v2896 = vunpack.c.h.b16 %v822
        %v2897 = vunpack.c.l.b16 %v823
        %v2898 = vunpack.c.h.b16 %v823
        %v2899 = vunpack.c.l.b16 %v824
        %v2900 = vunpack.c.h.b16 %v824
        %v2901 = vunpack.c.l.b16 %v825
        %v2902 = vunpack.c.h.b16 %v825
        %v2903 = vunpack.c.l.b16 %v826
        %v2904 = vunpack.c.h.b16 %v826
        %v2905 = vunpack.c.l.b16 %v827
        %v2906 = vunpack.c.h.b16 %v827
        %v2907 = vunpack.c.l.b16 %v828
        %v2908 = vunpack.c.h.b16 %v828
        %v2909 = vunpack.c.l.b16 %v829
        %v2910 = vunpack.c.h.b16 %v829
        %v2911 = vunpack.c.l.b16 %v830
        %v2912 = vunpack.c.h.b16 %v830
        %v2913 = vunpack.c.l.b16 %v831
        %v2914 = vunpack.c.h.b16 %v831
        %v2915 = vunpack.c.l.b16 %v832
        %v2916 = vunpack.c.h.b16 %v832
        %v2917 = vunpack.c.l.b16 %v833
        %v2918 = vunpack.c.h.b16 %v833
        %v2919 = vunpack.c.l.b16 %v834
        %v2920 = vunpack.c.h.b16 %v834
        %v2921 = vunpack.c.l.b16 %v835
        %v2922 = vunpack.c.h.b16 %v835
        %v2923 = vunpack.c.l.b16 %v836
        %v2924 = vunpack.c.h.b16 %v836
        %v2925 = vunpack.c.l.b16 %v837
        %v2926 = vunpack.c.h.b16 %v837
        %v2927 = vunpack.c.l.b16 %v838
        %v2928 = vunpack.c.h.b16 %v838
        %v2929 = vunpack.c.l.b16 %v839
        %v2930 = vunpack.c.h.b16 %v839
        %v2931 = vunpack.c.l.b16 %v840
        %v2932 = vunpack.c.h.b16 %v840
        %v2933 = vunpack.c.l.b16 %v841
        %v2934 = vunpack.c.h.b16 %v841
        %v2935 = vunpack.c.l.b16 %v842
        %v2936 = vunpack.c.h.b16 %v842
        %v2937 = vunpack.c.l.b16 %v843
        %v2938 = vunpack.c.h.b16 %v843
        %v2939 = vunpack.c.l.b16 %v844
        %v2940 = vunpack.c.h.b16 %v844
        %v2941 = vunpack.c.l.b16 %v845
        %v2942 = vunpack.c.h.b16 %v845
        %v2943 = vunpack.c.l.b16 %v846
        %v2944 = vunpack.c.h.b16 %v846
        %v2945 = vunpack.c.l.b16 %v847
        %v2946 = vunpack.c.h.b16 %v847
        %v2947 = vunpack.c.l.b16 %v848
        %v2948 = vunpack.c.h.b16 %v848
        %v2949 = vunpack.c.l.b16 %v849
        %v2950 = vunpack.c.h.b16 %v849
        %v2951 = vunpack.c.l.b16 %v850
        %v2952 = vunpack.c.h.b16 %v850
        %v2953 = vunpack.c.l.b16 %v851
        %v2954 = vunpack.c.h.b16 %v851
        %v2955 = vunpack.c.l.b16 %v852
        %v2956 = vunpack.c.h.b16 %v852
        %v2957 = vunpack.c.l.b16 %v853
        %v2958 = vunpack.c.h.b16 %v853
        %v2959 = vunpack.c.l.b16 %v854
        %v2960 = vunpack.c.h.b16 %v854
        %v2961 = vunpack.c.l.b16 %v855
        %v2962 = vunpack.c.h.b16 %v855
        %v2963 = vunpack.c.l.b16 %v856
        %v2964 = vunpack.c.h.b16 %v856
        %v2965 = vunpack.c.l.b16 %v857
        %v2966 = vunpack.c.h.b16 %v857
        %v2967 = vunpack.c.l.b16 %v858
        %v2968 = vunpack.c.h.b16 %v858
        %v2969 = vunpack.c.l.b16 %v859
        %v2970 = vunpack.c.h.b16 %v859
        %v2971 = vunpack.c.l.b16 %v860
        %v2972 = vunpack.c.h.b16 %v860
        %v2973 = vunpack.c.l.b16 %v861
        %v2974 = vunpack.c.h.b16 %v861
        %v2975 = vunpack.c.l.b16 %v862
        %v2976 = vunpack.c.h.b16 %v862
        %v2977 = vunpack.c.l.b16 %v863
        %v2978 = vunpack.c.h.b16 %v863
        %v2979 = vunpack.c.l.b16 %v864
        %v2980 = vunpack.c.h.b16 %v864
        %v2981 = vunpack.c.l.b16 %v865
        %v2982 = vunpack.c.h.b16 %v865
        %v2983 = vunpack.c.l.b16 %v866
        %v2984 = vunpack.c.h.b16 %v866
        %v2985 = vunpack.c.l.b16 %v867
        %v2986 = vunpack.c.h.b16 %v867
        %v2987 = vunpack.c.l.b16 %v868
        %v2988 = vunpack.c.h.b16 %v868
        %v2989 = vunpack.c.l.b16 %v869
        %v2990 = vunpack.c.h.b16 %v869
        %v2991 = vunpack.c.l.b16 %v870
        %v2992 = vunpack.c.h.b16 %v870
        %v2993 = vunpack.c.l.b16 %v871
        %v2994 = vunpack.c.h.b16 %v871
        %v2995 = vunpack.c.l.b16 %v872
        %v2996 = vunpack.c.h.b16 %v872
        %v2997 = vunpack.c.l.b16 %v873
        %v2998 = vunpack.c.h.b16 %v873
        %v2999 = vunpack.c.l.b16 %v874
        %v3000 = vunpack.c.h.b16 %v874
        %v3001 = vunpack.c.l.b16 %v875
        %v3002 = vunpack.c.h.b16 %v875
        %v3003 = vunpack.c.l.b16 %v876
        %v3004 = vunpack.c.h.b16 %v876
        %v3005 = vunpack.c.l.b16 %v877
        %v3006 = vunpack.c.h.b16 %v877
        %v3007 = vunpack.c.l.b16 %v878
        %v3008 = vunpack.c.h.b16 %v878
        %v3009 = vunpack.c.l.b16 %v879
        %v3010 = vunpack.c.h.b16 %v879
        %v3011 = vunpack.c.l.b16 %v880
        %v3012 = vunpack.c.h.b16 %v880
        %v3013 = vunpack.c.l.b16 %v881
        %v3014 = vunpack.c.h.b16 %v881
        %v3015 = vunpack.c.l.b16 %v882
        %v3016 = vunpack.c.h.b16 %v882
        %v3017 = vunpack.c.l.b16 %v883
        %v3018 = vunpack.c.h.b16 %v883
        %v3019 = vunpack.c.l.b16 %v884
        %v3020 = vunpack.c.h.b16 %v884
        %v3021 = vunpack.c.l.b16 %v885
        %v3022 = vunpack.c.h.b16 %v885
        %v3023 = vunpack.c.l.b16 %v886
        %v3024 = vunpack.c.h.b16 %v886
        %v3025 = vunpack.c.l.b16 %v887
        %v3026 = vunpack.c.h.b16 %v887
        %v3027 = vunpack.c.l.b16 %v888
        %v3028 = vunpack.c.h.b16 %v888
        %v3029 = vunpack.c.l.b16 %v889
        %v3030 = vunpack.c.h.b16 %v889
        %v3031 = vunpack.c.l.b16 %v890
        %v3032 = vunpack.c.h.b16 %v890
        %v3033 = vunpack.c.l.b16 %v891
        %v3034 = vunpack.c.h.b16 %v891
        %v3035 = vunpack.c.l.b16 %v892
        %v3036 = vunpack.c.h.b16 %v892
        %v3037 = vunpack.c.l.b16 %v893
        %v3038 = vunpack.c.h.b16 %v893
        %v3039 = vpack.c.b16 %v2785, %v2783
        %v3040 = vpack.c.b16 %v2786, %v2784
        %v3041 = vpack.c.b16 %v2789, %v2787
        %v3042 = vpack.c.b16 %v2790, %v2788
        %v3043 = vpack.c.b16 %v2793, %v2791
        %v3044 = vpack.c.b16 %v2794, %v2792
        %v3045 = vpack.c.b16 %v2797, %v2795
        %v3046 = vpack.c.b16 %v2798, %v2796
        %v3047 = vpack.c.b16 %v2801, %v2799
        %v3048 = vpack.c.b16 %v2802, %v2800
        %v3049 = vpack.c.b16 %v2805, %v2803
        %v3050 = vpack.c.b16 %v2806, %v2804
        %v3051 = vpack.c.b16 %v2809, %v2807
        %v3052 = vpack.c.b16 %v2810, %v2808
        %v3053 = vpack.c.b16 %v2813, %v2811
        %v3054 = vpack.c.b16 %v2814, %v2812
        %v3055 = vpack.c.b16 %v2817, %v2815
        %v3056 = vpack.c.b16 %v2818, %v2816
        %v3057 = vpack.c.b16 %v2821, %v2819
        %v3058 = vpack.c.b16 %v2822, %v2820
        %v3059 = vpack.c.b16 %v2825, %v2823
        %v3060 = vpack.c.b16 %v2826, %v2824
        %v3061 = vpack.c.b16 %v2829, %v2827
        %v3062 = vpack.c.b16 %v2830, %v2828
        %v3063 = vpack.c.b16 %v2833, %v2831
        %v3064 = vpack.c.b16 %v2834, %v2832
        %v3065 = vpack.c.b16 %v2837, %v2835
        %v3066 = vpack.c.b16 %v2838, %v2836
        %v3067 = vpack.c.b16 %v2841, %v2839
        %v3068 = vpack.c.b16 %v2842, %v2840
        %v3069 = vpack.c.b16 %v2845, %v2843
        %v3070 = vpack.c.b16 %v2846, %v2844
        %v3071 = vpack.c.b16 %v2849, %v2847
        %v3072 = vpack.c.b16 %v2850, %v2848
        %v3073 = vpack.c.b16 %v2853, %v2851
        %v3074 = vpack.c.b16 %v2854, %v2852
        %v3075 = vpack.c.b16 %v2857, %v2855
        %v3076 = vpack.c.b16 %v2858, %v2856
        %v3077 = vpack.c.b16 %v2861, %v2859
        %v3078 = vpack.c.b16 %v2862, %v2860
        %v3079 = vpack.c.b16 %v2865, %v2863
        %v3080 = vpack.c.b16 %v2866, %v2864
        %v3081 = vpack.c.b16 %v2869, %v2867
        %v3082 = vpack.c.b16 %v2870, %v2868
        %v3083 = vpack.c.b16 %v2873, %v2871
        %v3084 = vpack.c.b16 %v2874, %v2872
        %v3085 = vpack.c.b16 %v2877, %v2875
        %v3086 = vpack.c.b16 %v2878, %v2876
        %v3087 = vpack.c.b16 %v2881, %v2879
        %v3088 = vpack.c.b16 %v2882, %v2880
        %v3089 = vpack.c.b16 %v2885, %v2883
        %v3090 = vpack.c.b16 %v2886, %v2884
        %v3091 = vpack.c.b16 %v2889, %v2887
        %v3092 = vpack.c.b16 %v2890, %v2888
        %v3093 = vpack.c.b16 %v2893, %v2891
        %v3094 = vpack.c.b16 %v2894, %v2892
        %v3095 = vpack.c.b16 %v2897, %v2895
        %v3096 = vpack.c.b16 %v2898, %v2896
        %v3097 = vpack.c.b16 %v2901, %v2899
        %v3098 = vpack.c.b16 %v2902, %v2900
        %v3099 = vpack.c.b16 %v2905, %v2903
        %v3100 = vpack.c.b16 %v2906, %v2904
        %v3101 = vpack.c.b16 %v2909, %v2907
        %v3102 = vpack.c.b16 %v2910, %v2908
        %v3103 = vpack.c.b16 %v2913, %v2911
        %v3104 = vpack.c.b16 %v2914, %v2912
        %v3105 = vpack.c.b16 %v2917, %v2915
        %v3106 = vpack.c.b16 %v2918, %v2916
        %v3107 = vpack.c.b16 %v2921, %v2919
        %v3108 = vpack.c.b16 %v2922, %v2920
        %v3109 = vpack.c.b16 %v2925, %v2923
        %v3110 = vpack.c.b16 %v2926, %v2924
        %v3111 = vpack.c.b16 %v2929, %v2927
        %v3112 = vpack.c.b16 %v2930, %v2928
        %v3113 = vpack.c.b16 %v2933, %v2931
        %v3114 = vpack.c.b16 %v2934, %v2932
        %v3115 = vpack.c.b16 %v2937, %v2935
        %v3116 = vpack.c.b16 %v2938, %v2936
        %v3117 = vpack.c.b16 %v2941, %v2939
        %v3118 = vpack.c.b16 %v2942, %v2940
        %v3119 = vpack.c.b16 %v2945, %v2943
        %v3120 = vpack.c.b16 %v2946, %v2944
        %v3121 = vpack.c.b16 %v2949, %v2947
        %v3122 = vpack.c.b16 %v2950, %v2948
        %v3123 = vpack.c.b16 %v2953, %v2951
        %v3124 = vpack.c.b16 %v2954, %v2952
        %v3125 = vpack.c.b16 %v2957, %v2955
        %v3126 = vpack.c.b16 %v2958, %v2956
        %v3127 = vpack.c.b16 %v2961, %v2959
        %v3128 = vpack.c.b16 %v2962, %v2960
        %v3129 = vpack.c.b16 %v2965, %v2963
        %v3130 = vpack.c.b16 %v2966, %v2964
        %v3131 = vpack.c.b16 %v2969, %v2967
        %v3132 = vpack.c.b16 %v2970, %v2968
        %v3133 = vpack.c.b16 %v2973, %v2971
        %v3134 = vpack.c.b16 %v2974, %v2972
        %v3135 = vpack.c.b16 %v2977, %v2975
        %v3136 = vpack.c.b16 %v2978, %v2976
        %v3137 = vpack.c.b16 %v2981, %v2979
        %v3138 = vpack.c.b16 %v2982, %v2980
        %v3139 = vpack.c.b16 %v2985, %v2983
        %v3140 = vpack.c.b16 %v2986, %v2984
        %v3141 = vpack.c.b16 %v2989, %v2987
        %v3142 = vpack.c.b16 %v2990, %v2988
        %v3143 = vpack.c.b16 %v2993, %v2991
        %v3144 = vpack.c.b16 %v2994, %v2992
        %v3145 = vpack.c.b16 %v2997, %v2995
        %v3146 = vpack.c.b16 %v2998, %v2996
        %v3147 = vpack.c.b16 %v3001, %v2999
        %v3148 = vpack.c.b16 %v3002, %v3000
        %v3149 = vpack.c.b16 %v3005, %v3003
        %v3150 = vpack.c.b16 %v3006, %v3004
        %v3151 = vpack.c.b16 %v3009, %v3007
        %v3152 = vpack.c.b16 %v3010, %v3008
        %v3153 = vpack.c.b16 %v3013, %v3011
        %v3154 = vpack.c.b16 %v3014, %v3012
        %v3155 = vpack.c.b16 %v3017, %v3015
        %v3156 = vpack.c.b16 %v3018, %v3016
        %v3157 = vpack.c.b16 %v3021, %v3019
        %v3158 = vpack.c.b16 %v3022, %v3020
        %v3159 = vpack.c.b16 %v3025, %v3023
        %v3160 = vpack.c.b16 %v3026, %v3024
        %v3161 = vpack.c.b16 %v3029, %v3027
        %v3162 = vpack.c.b16 %v3030, %v3028
        %v3163 = vpack.c.b16 %v3033, %v3031
        %v3164 = vpack.c.b16 %v3034, %v3032
        %v3165 = vpack.c.b16 %v3037, %v3035
        %v3166 = vpack.c.b16 %v3038, %v3036
        %3295 = vmatpush.bf16.msra.mxu0 %v3053
        %3296 = vmatpush.bf16.msra.mxu0 %v3051
        %3297 = vmatpush.bf16.msra.mxu0 %v3049
        %3298 = vmatpush.bf16.msra.mxu0 %v3047
        %3299 = vmatpush.bf16.msra.mxu0 %v3045
        %3300 = vmatpush.bf16.msra.mxu0 %v3043
        %3301 = vmatpush.bf16.msra.mxu0 %v3041
        %3302 = vmatpush.bf16.msra.mxu0 %v3039
        %3303 = vmatmul.bf16.gmra.mxu0 %v2642
        %v3304 = vpop.f32.mrf.mxu0
        %v3305 = vadd.f32 %v2651, %v3304
        %v3306 = vpop.f32.mrf.mxu0
        %v3307 = vadd.f32 %v2651, %v3306
        %3308 = vdwg.mxu0
        %3309 = vmatpush.bf16.msra.mxu0 %v3069
        %3310 = vmatpush.bf16.msra.mxu0 %v3067
        %3311 = vmatpush.bf16.msra.mxu0 %v3065
        %3312 = vmatpush.bf16.msra.mxu0 %v3063
        %3313 = vmatpush.bf16.msra.mxu0 %v3061
        %3314 = vmatpush.bf16.msra.mxu0 %v3059
        %3315 = vmatpush.bf16.msra.mxu0 %v3057
        %3316 = vmatpush.bf16.msra.mxu0 %v3055
        %3317 = vmatmul.bf16.gmra.mxu0 %v2643
        %v3318 = vpop.f32.mrf.mxu0
        %v3319 = vadd.f32 %v3305, %v3318
        %v3320 = vpop.f32.mrf.mxu0
        %v3321 = vadd.f32 %v3307, %v3320
        %3322 = vdwg.mxu0
        %3323 = vmatpush.bf16.msra.mxu0 %v3085
        %3324 = vmatpush.bf16.msra.mxu0 %v3083
        %3325 = vmatpush.bf16.msra.mxu0 %v3081
        %3326 = vmatpush.bf16.msra.mxu0 %v3079
        %3327 = vmatpush.bf16.msra.mxu0 %v3077
        %3328 = vmatpush.bf16.msra.mxu0 %v3075
        %3329 = vmatpush.bf16.msra.mxu0 %v3073
        %3330 = vmatpush.bf16.msra.mxu0 %v3071
        %3331 = vmatmul.bf16.gmra.mxu0 %v2644
        %v3332 = vpop.f32.mrf.mxu0
        %v3333 = vadd.f32 %v3319, %v3332
        %v3334 = vpop.f32.mrf.mxu0
        %v3335 = vadd.f32 %v3321, %v3334
        %3336 = vdwg.mxu0
        %3337 = vmatpush.bf16.msra.mxu0 %v3101
        %3338 = vmatpush.bf16.msra.mxu0 %v3099
        %3339 = vmatpush.bf16.msra.mxu0 %v3097
        %3340 = vmatpush.bf16.msra.mxu0 %v3095
        %3341 = vmatpush.bf16.msra.mxu0 %v3093
        %3342 = vmatpush.bf16.msra.mxu0 %v3091
        %3343 = vmatpush.bf16.msra.mxu0 %v3089
        %3344 = vmatpush.bf16.msra.mxu0 %v3087
        %3345 = vmatmul.bf16.gmra.mxu0 %v2645
        %v3346 = vpop.f32.mrf.mxu0
        %v3347 = vadd.f32 %v3333, %v3346
        %v3348 = vpop.f32.mrf.mxu0
        %v3349 = vadd.f32 %v3335, %v3348
        %3350 = vdwg.mxu0
        %3351 = vmatpush.bf16.msra.mxu0 %v3117
        %3352 = vmatpush.bf16.msra.mxu0 %v3115
        %3353 = vmatpush.bf16.msra.mxu0 %v3113
        %3354 = vmatpush.bf16.msra.mxu0 %v3111
        %3355 = vmatpush.bf16.msra.mxu0 %v3109
        %3356 = vmatpush.bf16.msra.mxu0 %v3107
        %3357 = vmatpush.bf16.msra.mxu0 %v3105
        %3358 = vmatpush.bf16.msra.mxu0 %v3103
        %3359 = vmatmul.bf16.gmra.mxu0 %v2646
        %v3360 = vpop.f32.mrf.mxu0
        %v3361 = vadd.f32 %v3347, %v3360
        %v3362 = vpop.f32.mrf.mxu0
        %v3363 = vadd.f32 %v3349, %v3362
        %3364 = vdwg.mxu0
        %3365 = vmatpush.bf16.msra.mxu0 %v3133
        %3366 = vmatpush.bf16.msra.mxu0 %v3131
        %3367 = vmatpush.bf16.msra.mxu0 %v3129
        %3368 = vmatpush.bf16.msra.mxu0 %v3127
        %3369 = vmatpush.bf16.msra.mxu0 %v3125
        %3370 = vmatpush.bf16.msra.mxu0 %v3123
        %3371 = vmatpush.bf16.msra.mxu0 %v3121
        %3372 = vmatpush.bf16.msra.mxu0 %v3119
        %3373 = vmatmul.bf16.gmra.mxu0 %v2647
        %v3374 = vpop.f32.mrf.mxu0
        %v3375 = vadd.f32 %v3361, %v3374
        %v3376 = vpop.f32.mrf.mxu0
        %v3377 = vadd.f32 %v3363, %v3376
        %3378 = vdwg.mxu0
        %3379 = vmatpush.bf16.msra.mxu0 %v3149
        %3380 = vmatpush.bf16.msra.mxu0 %v3147
        %3381 = vmatpush.bf16.msra.mxu0 %v3145
        %3382 = vmatpush.bf16.msra.mxu0 %v3143
        %3383 = vmatpush.bf16.msra.mxu0 %v3141
        %3384 = vmatpush.bf16.msra.mxu0 %v3139
        %3385 = vmatpush.bf16.msra.mxu0 %v3137
        %3386 = vmatpush.bf16.msra.mxu0 %v3135
        %3387 = vmatmul.bf16.gmra.mxu0 %v2648
        %v3388 = vpop.f32.mrf.mxu0
        %v3389 = vadd.f32 %v3375, %v3388
        %v3390 = vpop.f32.mrf.mxu0
        %v3391 = vadd.f32 %v3377, %v3390
        %3392 = vdwg.mxu0
        %3393 = vmatpush.bf16.msra.mxu0 %v3165
        %3394 = vmatpush.bf16.msra.mxu0 %v3163
        %3395 = vmatpush.bf16.msra.mxu0 %v3161
        %3396 = vmatpush.bf16.msra.mxu0 %v3159
        %3397 = vmatpush.bf16.msra.mxu0 %v3157
        %3398 = vmatpush.bf16.msra.mxu0 %v3155
        %3399 = vmatpush.bf16.msra.mxu0 %v3153
        %3400 = vmatpush.bf16.msra.mxu0 %v3151
        %3401 = vmatmul.bf16.gmra.mxu0 %v2649
        %v3402 = vpop.f32.mrf.mxu0
        %v3403 = vadd.f32 %v3389, %v3402
        %v3404 = vpop.f32.mrf.mxu0
        %v3405 = vadd.f32 %v3391, %v3404
        %3406 = vdwg.mxu0
        %3407 = vmatpush.bf16.msra.mxu0 %v3054
        %3408 = vmatpush.bf16.msra.mxu0 %v3052
        %3409 = vmatpush.bf16.msra.mxu0 %v3050
        %3410 = vmatpush.bf16.msra.mxu0 %v3048
        %3411 = vmatpush.bf16.msra.mxu0 %v3046
        %3412 = vmatpush.bf16.msra.mxu0 %v3044
        %3413 = vmatpush.bf16.msra.mxu0 %v3042
        %3414 = vmatpush.bf16.msra.mxu0 %v3040
        %3415 = vmatmul.bf16.gmra.mxu0 %v2642
        %v3416 = vpop.f32.mrf.mxu0
        %v3417 = vadd.f32 %v2652, %v3416
        %v3418 = vpop.f32.mrf.mxu0
        %v3419 = vadd.f32 %v2652, %v3418
        %3420 = vdwg.mxu0
        %3421 = vmatpush.bf16.msra.mxu0 %v3070
        %3422 = vmatpush.bf16.msra.mxu0 %v3068
        %3423 = vmatpush.bf16.msra.mxu0 %v3066
        %3424 = vmatpush.bf16.msra.mxu0 %v3064
        %3425 = vmatpush.bf16.msra.mxu0 %v3062
        %3426 = vmatpush.bf16.msra.mxu0 %v3060
        %3427 = vmatpush.bf16.msra.mxu0 %v3058
        %3428 = vmatpush.bf16.msra.mxu0 %v3056
        %3429 = vmatmul.bf16.gmra.mxu0 %v2643
        %v3430 = vpop.f32.mrf.mxu0
        %v3431 = vadd.f32 %v3417, %v3430
        %v3432 = vpop.f32.mrf.mxu0
        %v3433 = vadd.f32 %v3419, %v3432
        %3434 = vdwg.mxu0
        %3435 = vmatpush.bf16.msra.mxu0 %v3086
        %3436 = vmatpush.bf16.msra.mxu0 %v3084
        %3437 = vmatpush.bf16.msra.mxu0 %v3082
        %3438 = vmatpush.bf16.msra.mxu0 %v3080
        %3439 = vmatpush.bf16.msra.mxu0 %v3078
        %3440 = vmatpush.bf16.msra.mxu0 %v3076
        %3441 = vmatpush.bf16.msra.mxu0 %v3074
        %3442 = vmatpush.bf16.msra.mxu0 %v3072
        %3443 = vmatmul.bf16.gmra.mxu0 %v2644
        %v3444 = vpop.f32.mrf.mxu0
        %v3445 = vadd.f32 %v3431, %v3444
        %v3446 = vpop.f32.mrf.mxu0
        %v3447 = vadd.f32 %v3433, %v3446
        %3448 = vdwg.mxu0
        %3449 = vmatpush.bf16.msra.mxu0 %v3102
        %3450 = vmatpush.bf16.msra.mxu0 %v3100
        %3451 = vmatpush.bf16.msra.mxu0 %v3098
        %3452 = vmatpush.bf16.msra.mxu0 %v3096
        %3453 = vmatpush.bf16.msra.mxu0 %v3094
        %3454 = vmatpush.bf16.msra.mxu0 %v3092
        %3455 = vmatpush.bf16.msra.mxu0 %v3090
        %3456 = vmatpush.bf16.msra.mxu0 %v3088
        %3457 = vmatmul.bf16.gmra.mxu0 %v2645
        %v3458 = vpop.f32.mrf.mxu0
        %v3459 = vadd.f32 %v3445, %v3458
        %v3460 = vpop.f32.mrf.mxu0
        %v3461 = vadd.f32 %v3447, %v3460
        %3462 = vdwg.mxu0
        %3463 = vmatpush.bf16.msra.mxu0 %v3118
        %3464 = vmatpush.bf16.msra.mxu0 %v3116
        %3465 = vmatpush.bf16.msra.mxu0 %v3114
        %3466 = vmatpush.bf16.msra.mxu0 %v3112
        %3467 = vmatpush.bf16.msra.mxu0 %v3110
        %3468 = vmatpush.bf16.msra.mxu0 %v3108
        %3469 = vmatpush.bf16.msra.mxu0 %v3106
        %3470 = vmatpush.bf16.msra.mxu0 %v3104
        %3471 = vmatmul.bf16.gmra.mxu0 %v2646
        %v3472 = vpop.f32.mrf.mxu0
        %v3473 = vadd.f32 %v3459, %v3472
        %v3474 = vpop.f32.mrf.mxu0
        %v3475 = vadd.f32 %v3461, %v3474
        %3476 = vdwg.mxu0
        %3477 = vmatpush.bf16.msra.mxu0 %v3134
        %3478 = vmatpush.bf16.msra.mxu0 %v3132
        %3479 = vmatpush.bf16.msra.mxu0 %v3130
        %3480 = vmatpush.bf16.msra.mxu0 %v3128
        %3481 = vmatpush.bf16.msra.mxu0 %v3126
        %3482 = vmatpush.bf16.msra.mxu0 %v3124
        %3483 = vmatpush.bf16.msra.mxu0 %v3122
        %3484 = vmatpush.bf16.msra.mxu0 %v3120
        %3485 = vmatmul.bf16.gmra.mxu0 %v2647
        %v3486 = vpop.f32.mrf.mxu0
        %v3487 = vadd.f32 %v3473, %v3486
        %v3488 = vpop.f32.mrf.mxu0
        %v3489 = vadd.f32 %v3475, %v3488
        %3490 = vdwg.mxu0
        %3491 = vmatpush.bf16.msra.mxu0 %v3150
        %3492 = vmatpush.bf16.msra.mxu0 %v3148
        %3493 = vmatpush.bf16.msra.mxu0 %v3146
        %3494 = vmatpush.bf16.msra.mxu0 %v3144
        %3495 = vmatpush.bf16.msra.mxu0 %v3142
        %3496 = vmatpush.bf16.msra.mxu0 %v3140
        %3497 = vmatpush.bf16.msra.mxu0 %v3138
        %3498 = vmatpush.bf16.msra.mxu0 %v3136
        %3499 = vmatmul.bf16.gmra.mxu0 %v2648
        %v3500 = vpop.f32.mrf.mxu0
        %v3501 = vadd.f32 %v3487, %v3500
        %v3502 = vpop.f32.mrf.mxu0
        %v3503 = vadd.f32 %v3489, %v3502
        %3504 = vdwg.mxu0
        %3505 = vmatpush.bf16.msra.mxu0 %v3166
        %3506 = vmatpush.bf16.msra.mxu0 %v3164
        %3507 = vmatpush.bf16.msra.mxu0 %v3162
        %3508 = vmatpush.bf16.msra.mxu0 %v3160
        %3509 = vmatpush.bf16.msra.mxu0 %v3158
        %3510 = vmatpush.bf16.msra.mxu0 %v3156
        %3511 = vmatpush.bf16.msra.mxu0 %v3154
        %3512 = vmatpush.bf16.msra.mxu0 %v3152
        %3513 = vmatmul.bf16.gmra.mxu0 %v2649
        %v3514 = vpop.f32.mrf.mxu0
        %v3515 = vadd.f32 %v3501, %v3514
        %v3516 = vpop.f32.mrf.mxu0
        %v3517 = vadd.f32 %v3503, %v3516
        %3518 = vdwg.mxu0
        %v3519 = vadd.f32 %v3403, %v1739
        %v3520 = vadd.f32 %v3515, %v1740
        %v3521 = vadd.f32 %v3405, %v1741
        %v3522 = vadd.f32 %v3517, %v1742
        %v3523 = vadd.f32 %v3519, %v3520
        %3524 = vadd.xlane.f32.xlu0 %v3523
        %v3525 = vpop.xlane.xlu0 %3524
        %v3526 = vadd.f32 %v3521, %v3522
        %3527 = vadd.xlane.f32.xlu0 %v3526
        %v3528 = vpop.xlane.xlu0 %3527
        %v3529 = vmul.f32 %v3525, %v1680
        %v3530 = vmul.f32 %v3528, %v1680
        %v3531 = vsub.f32 %v3519, %v3529
        %v3532 = vsub.f32 %v3520, %v3529
        %v3533 = vsub.f32 %v3521, %v3530
        %v3534 = vsub.f32 %v3522, %v3530
        %v3535 = vmul.f32 %v3531, %v3531
        %v3536 = vmul.f32 %v3532, %v3532
        %v3537 = vmul.f32 %v3533, %v3533
        %v3538 = vmul.f32 %v3534, %v3534
        %v3539 = vadd.f32 %v3535, %v3536
        %3540 = vadd.xlane.f32.xlu0 %v3539
        %v3541 = vpop.xlane.xlu0 %3540
        %v3542 = vadd.f32 %v3537, %v3538
        %3543 = vadd.xlane.f32.xlu0 %v3542
        %v3544 = vpop.xlane.xlu0 %3543
        %v3545 = vmul.f32 %v3541, %v1680
        %v3546 = vmul.f32 %v3544, %v1680
        %v3547 = vadd.f32 %v3545, 1e-06
        %v3548 = vadd.f32 %v3546, 1e-06
        %v3549 = vrsqrt.pop %v3547
        %v3550 = vmul.f32 %v3549, %v3547
        %v3551 = vmul.f32 %v3550, %v3549
        %v3552 = vmul.f32 0.5, %v3551
        %v3553 = vsub.f32 1.5, %v3552
        %v3554 = vmul.f32 %v3549, %v3553
        %vm3555 = vweird.f32 %v3547
        %vm3556 = vweird.f32 %v3549
        %vm3557 = vmor %vm3555, %vm3556
        %v3558 = vsel %vm3557, %v3549, %v3554
        %v3559 = vrsqrt.pop %v3548
        %v3560 = vmul.f32 %v3559, %v3548
        %v3561 = vmul.f32 %v3560, %v3559
        %v3562 = vmul.f32 0.5, %v3561
        %v3563 = vsub.f32 1.5, %v3562
        %v3564 = vmul.f32 %v3559, %v3563
        %vm3565 = vweird.f32 %v3548
        %vm3566 = vweird.f32 %v3559
        %vm3567 = vmor %vm3565, %vm3566
        %v3568 = vsel %vm3567, %v3559, %v3564
        %v3569 = vmul.f32 %v3531, %v3558
        %v3570 = vmul.f32 %v3532, %v3558
        %v3571 = vmul.f32 %v3533, %v3568
        %v3572 = vmul.f32 %v3534, %v3568
        %v3574 = vperm.slane %v896, 0
        %v3575 = vperm.slane %v896, 1
        %v3578 = vmul.f32 %v3569, %v3574
        %v3579 = vmul.f32 %v3570, %v3575
        %v3580 = vmul.f32 %v3571, %v3574
        %v3581 = vmul.f32 %v3572, %v3575
        %v3583 = vperm.slane %v897, 0
        %v3584 = vperm.slane %v897, 1
        %v3587 = vadd.f32 %v3578, %v3583
        %v3588 = vadd.f32 %v3579, %v3584
        %v3589 = vadd.f32 %v3580, %v3583
        %v3590 = vadd.f32 %v3581, %v3584
        %v3591 = vpack.c.bf16 %v3589, %v3587
        %v3592 = vpack.c.bf16 %v3590, %v3588
        %3593 = vmatpush.bf16.msra.mxu0 %v1083
        %3594 = vmatpush.bf16.msra.mxu0 %v1080
        %3595 = vmatpush.bf16.msra.mxu0 %v1077
        %3596 = vmatpush.bf16.msra.mxu0 %v1074
        %3597 = vmatpush.bf16.msra.mxu0 %v1071
        %3598 = vmatpush.bf16.msra.mxu0 %v1068
        %3599 = vmatpush.bf16.msra.mxu0 %v1065
        %3600 = vmatpush.bf16.msra.mxu0 %v1062
        %3601 = vmatmul.bf16.gmra.mxu0 %v3591
        %v3602 = vpop.f32.mrf.mxu0
        %v3603 = vadd.f32 0.0, %v3602
        %v3604 = vpop.f32.mrf.mxu0
        %v3605 = vadd.f32 0.0, %v3604
        %3606 = vdwg.mxu0
        %3607 = vmatpush.bf16.msra.mxu0 %v1107
        %3608 = vmatpush.bf16.msra.mxu0 %v1104
        %3609 = vmatpush.bf16.msra.mxu0 %v1101
        %3610 = vmatpush.bf16.msra.mxu0 %v1098
        %3611 = vmatpush.bf16.msra.mxu0 %v1095
        %3612 = vmatpush.bf16.msra.mxu0 %v1092
        %3613 = vmatpush.bf16.msra.mxu0 %v1089
        %3614 = vmatpush.bf16.msra.mxu0 %v1086
        %3615 = vmatmul.bf16.gmra.mxu0 %v3592
        %v3616 = vpop.f32.mrf.mxu0
        %v3617 = vadd.f32 %v3603, %v3616
        %v3618 = vpop.f32.mrf.mxu0
        %v3619 = vadd.f32 %v3605, %v3618
        %3620 = vdwg.mxu0
        %3621 = vmatpush.bf16.msra.mxu0 %v1084
        %3622 = vmatpush.bf16.msra.mxu0 %v1081
        %3623 = vmatpush.bf16.msra.mxu0 %v1078
        %3624 = vmatpush.bf16.msra.mxu0 %v1075
        %3625 = vmatpush.bf16.msra.mxu0 %v1072
        %3626 = vmatpush.bf16.msra.mxu0 %v1069
        %3627 = vmatpush.bf16.msra.mxu0 %v1066
        %3628 = vmatpush.bf16.msra.mxu0 %v1063
        %3629 = vmatmul.bf16.gmra.mxu0 %v3591
        %v3630 = vpop.f32.mrf.mxu0
        %v3631 = vadd.f32 0.0, %v3630
        %v3632 = vpop.f32.mrf.mxu0
        %v3633 = vadd.f32 0.0, %v3632
        %3634 = vdwg.mxu0
        %3635 = vmatpush.bf16.msra.mxu0 %v1108
        %3636 = vmatpush.bf16.msra.mxu0 %v1105
        %3637 = vmatpush.bf16.msra.mxu0 %v1102
        %3638 = vmatpush.bf16.msra.mxu0 %v1099
        %3639 = vmatpush.bf16.msra.mxu0 %v1096
        %3640 = vmatpush.bf16.msra.mxu0 %v1093
        %3641 = vmatpush.bf16.msra.mxu0 %v1090
        %3642 = vmatpush.bf16.msra.mxu0 %v1087
        %3643 = vmatmul.bf16.gmra.mxu0 %v3592
        %v3644 = vpop.f32.mrf.mxu0
        %v3645 = vadd.f32 %v3631, %v3644
        %v3646 = vpop.f32.mrf.mxu0
        %v3647 = vadd.f32 %v3633, %v3646
        %3648 = vdwg.mxu0
        %3649 = vmatpush.bf16.msra.mxu0 %v1085
        %3650 = vmatpush.bf16.msra.mxu0 %v1082
        %3651 = vmatpush.bf16.msra.mxu0 %v1079
        %3652 = vmatpush.bf16.msra.mxu0 %v1076
        %3653 = vmatpush.bf16.msra.mxu0 %v1073
        %3654 = vmatpush.bf16.msra.mxu0 %v1070
        %3655 = vmatpush.bf16.msra.mxu0 %v1067
        %3656 = vmatpush.bf16.msra.mxu0 %v1064
        %3657 = vmatmul.bf16.gmra.mxu0 %v3591
        %v3658 = vpop.f32.mrf.mxu0
        %v3659 = vadd.f32 0.0, %v3658
        %v3660 = vpop.f32.mrf.mxu0
        %v3661 = vadd.f32 0.0, %v3660
        %3662 = vdwg.mxu0
        %3663 = vmatpush.bf16.msra.mxu0 %v1109
        %3664 = vmatpush.bf16.msra.mxu0 %v1106
        %3665 = vmatpush.bf16.msra.mxu0 %v1103
        %3666 = vmatpush.bf16.msra.mxu0 %v1100
        %3667 = vmatpush.bf16.msra.mxu0 %v1097
        %3668 = vmatpush.bf16.msra.mxu0 %v1094
        %3669 = vmatpush.bf16.msra.mxu0 %v1091
        %3670 = vmatpush.bf16.msra.mxu0 %v1088
        %3671 = vmatmul.bf16.gmra.mxu0 %v3592
        %v3672 = vpop.f32.mrf.mxu0
        %v3673 = vadd.f32 %v3659, %v3672
        %v3674 = vpop.f32.mrf.mxu0
        %v3675 = vadd.f32 %v3661, %v3674
        %3676 = vdwg.mxu0
        %v3677 = vpack.c.bf16 %v3617, %v3617
        %v3678 = vpack.c.bf16 %v3619, %v3619
        %v3679 = vpack.c.bf16 %v3645, %v3645
        %v3680 = vpack.c.bf16 %v3647, %v3647
        %v3681 = vpack.c.bf16 %v3673, %v3673
        %v3682 = vpack.c.bf16 %v3675, %v3675
        %v3685 = vunpack.c.l.b16 %v3677
        %v3686 = vunpack.c.l.b16 %v3678
        %v3687 = vpack.c.b16 %v3686, %v3685
        %v3690 = vunpack.c.l.b16 %v3679
        %v3691 = vunpack.c.l.b16 %v3680
        %v3692 = vpack.c.b16 %v3691, %v3690
        %v3694 = vsel %vm1258, %v3687, 0
        %v3697 = vsel %vm1258, %v3692, 0
        %3699 = vmatpush.bf16.xpose.msra.mxu0 0
        %3700 = vmatpush.bf16.xpose.msra.mxu0 0
        %3701 = vmatpush.bf16.xpose.msra.mxu0 0
        %3702 = vmatpush.bf16.xpose.msra.mxu0 0
        %3703 = vmatpush.bf16.xpose.msra.mxu0 0
        %3704 = vmatpush.bf16.xpose.msra.mxu0 0
        %3705 = vmatpush.bf16.xpose.msra.mxu0 0
        %3706 = vmatpush.bf16.xpose.msra.mxu0 %v3697
        %3707 = vmatmul.bf16.gmra.mxu0 %v3694
        %v3708 = vpop.f32.mrf.mxu0
        %v3709 = vadd.f32 %v556, %v3708
        %v3710 = vpop.f32.mrf.mxu0
        %v3711 = vadd.f32 %v556, %v3710
        %3712 = vdwg.mxu0
        %v3713 = vsel %vm1279, %v3709, -inf
        %3714 = vmax.xlane.f32.xlu0 %v3713
        %v3715 = vpop.xlane.xlu0 %3714
        %v3716 = vsel %vm1279, %v3711, -inf
        %3717 = vmax.xlane.f32.xlu0 %v3716
        %v3718 = vpop.xlane.xlu0 %3717
        %v3719 = vsub.f32 %v3709, %v3715
        %v3720 = vsub.f32 %v3711, %v3718
        %v3721 = vmul.f32 %v3719, 1.442695
        %v3722 = vpow.pop %v3721
        %v3723 = vmul.f32 %v3720, 1.442695
        %v3724 = vpow.pop %v3723
        %v3725 = vsel %vm1279, %v3722, 0.0
        %3726 = vadd.xlane.f32.xlu0 %v3725
        %v3727 = vpop.xlane.xlu0 %3726
        %v3728 = vsel %vm1279, %v3724, 0.0
        %3729 = vadd.xlane.f32.xlu0 %v3728
        %v3730 = vpop.xlane.xlu0 %3729
        %v3731 = vrcp.pop %v3727
        %v3732 = vrcp.pop %v3730
        %v3733 = vmul.f32 %v3722, %v3731
        %v3734 = vmul.f32 %v3724, %v3732
        %v3735 = vpack.c.bf16 %v3734, %v3733
        %v3738 = vunpack.c.l.b16 %v3681
        %v3739 = vunpack.c.l.b16 %v3682
        %v3740 = vpack.c.b16 %v3739, %v3738
        %v3743 = vsel %vm1279, %v3735, 0
        %3745 = vmatpush.bf16.msra.mxu0 0
        %3746 = vmatpush.bf16.msra.mxu0 0
        %3747 = vmatpush.bf16.msra.mxu0 0
        %3748 = vmatpush.bf16.msra.mxu0 0
        %3749 = vmatpush.bf16.msra.mxu0 0
        %3750 = vmatpush.bf16.msra.mxu0 0
        %3751 = vmatpush.bf16.msra.mxu0 0
        %3752 = vmatpush.bf16.msra.mxu0 %v3740
        %3753 = vmatmul.bf16.gmra.mxu0 %v3743
        %v3754 = vpop.f32.mrf.mxu0
        %v3755 = vadd.f32 0.0, %v3754
        %v3756 = vpop.f32.mrf.mxu0
        %v3757 = vadd.f32 0.0, %v3756
        %3758 = vdwg.mxu0
        %3759 = vrot.lane.b32.xlu0 %v3687, 96
        %v3760 = vpop.permute.xlu0 %3759
        %3761 = vrot.lane.b32.xlu0 %v3692, 96
        %v3762 = vpop.permute.xlu0 %3761
        %v3764 = vsel %vm1258, %v3760, 0
        %v3767 = vsel %vm1258, %v3762, 0
        %3769 = vmatpush.bf16.xpose.msra.mxu0 0
        %3770 = vmatpush.bf16.xpose.msra.mxu0 0
        %3771 = vmatpush.bf16.xpose.msra.mxu0 0
        %3772 = vmatpush.bf16.xpose.msra.mxu0 0
        %3773 = vmatpush.bf16.xpose.msra.mxu0 0
        %3774 = vmatpush.bf16.xpose.msra.mxu0 0
        %3775 = vmatpush.bf16.xpose.msra.mxu0 0
        %3776 = vmatpush.bf16.xpose.msra.mxu0 %v3767
        %3777 = vmatmul.bf16.gmra.mxu0 %v3764
        %v3778 = vpop.f32.mrf.mxu0
        %v3779 = vadd.f32 %v556, %v3778
        %v3780 = vpop.f32.mrf.mxu0
        %v3781 = vadd.f32 %v556, %v3780
        %3782 = vdwg.mxu0
        %v3783 = vsel %vm1279, %v3779, -inf
        %3784 = vmax.xlane.f32.xlu0 %v3783
        %v3785 = vpop.xlane.xlu0 %3784
        %v3786 = vsel %vm1279, %v3781, -inf
        %3787 = vmax.xlane.f32.xlu0 %v3786
        %v3788 = vpop.xlane.xlu0 %3787
        %v3789 = vsub.f32 %v3779, %v3785
        %v3790 = vsub.f32 %v3781, %v3788
        %v3791 = vmul.f32 %v3789, 1.442695
        %v3792 = vpow.pop %v3791
        %v3793 = vmul.f32 %v3790, 1.442695
        %v3794 = vpow.pop %v3793
        %v3795 = vsel %vm1279, %v3792, 0.0
        %3796 = vadd.xlane.f32.xlu0 %v3795
        %v3797 = vpop.xlane.xlu0 %3796
        %v3798 = vsel %vm1279, %v3794, 0.0
        %3799 = vadd.xlane.f32.xlu0 %v3798
        %v3800 = vpop.xlane.xlu0 %3799
        %v3801 = vrcp.pop %v3797
        %v3802 = vrcp.pop %v3800
        %v3803 = vmul.f32 %v3792, %v3801
        %v3804 = vmul.f32 %v3794, %v3802
        %v3805 = vpack.c.bf16 %v3804, %v3803
        %3806 = vrot.lane.b32.xlu0 %v3740, 96
        %v3807 = vpop.permute.xlu0 %3806
        %v3810 = vsel %vm1279, %v3805, 0
        %3812 = vmatpush.bf16.msra.mxu0 0
        %3813 = vmatpush.bf16.msra.mxu0 0
        %3814 = vmatpush.bf16.msra.mxu0 0
        %3815 = vmatpush.bf16.msra.mxu0 0
        %3816 = vmatpush.bf16.msra.mxu0 0
        %3817 = vmatpush.bf16.msra.mxu0 0
        %3818 = vmatpush.bf16.msra.mxu0 0
        %3819 = vmatpush.bf16.msra.mxu0 %v3807
        %3820 = vmatmul.bf16.gmra.mxu0 %v3810
        %v3821 = vpop.f32.mrf.mxu0
        %v3822 = vadd.f32 0.0, %v3821
        %v3823 = vpop.f32.mrf.mxu0
        %v3824 = vadd.f32 0.0, %v3823
        %3825 = vdwg.mxu0
        %3826 = vrot.lane.b32.xlu0 %v3687, 64
        %v3827 = vpop.permute.xlu0 %3826
        %3828 = vrot.lane.b32.xlu0 %v3692, 64
        %v3829 = vpop.permute.xlu0 %3828
        %v3831 = vsel %vm1258, %v3827, 0
        %v3834 = vsel %vm1258, %v3829, 0
        %3836 = vmatpush.bf16.xpose.msra.mxu0 0
        %3837 = vmatpush.bf16.xpose.msra.mxu0 0
        %3838 = vmatpush.bf16.xpose.msra.mxu0 0
        %3839 = vmatpush.bf16.xpose.msra.mxu0 0
        %3840 = vmatpush.bf16.xpose.msra.mxu0 0
        %3841 = vmatpush.bf16.xpose.msra.mxu0 0
        %3842 = vmatpush.bf16.xpose.msra.mxu0 0
        %3843 = vmatpush.bf16.xpose.msra.mxu0 %v3834
        %3844 = vmatmul.bf16.gmra.mxu0 %v3831
        %v3845 = vpop.f32.mrf.mxu0
        %v3846 = vadd.f32 %v556, %v3845
        %v3847 = vpop.f32.mrf.mxu0
        %v3848 = vadd.f32 %v556, %v3847
        %3849 = vdwg.mxu0
        %v3850 = vsel %vm1279, %v3846, -inf
        %3851 = vmax.xlane.f32.xlu0 %v3850
        %v3852 = vpop.xlane.xlu0 %3851
        %v3853 = vsel %vm1279, %v3848, -inf
        %3854 = vmax.xlane.f32.xlu0 %v3853
        %v3855 = vpop.xlane.xlu0 %3854
        %v3856 = vsub.f32 %v3846, %v3852
        %v3857 = vsub.f32 %v3848, %v3855
        %v3858 = vmul.f32 %v3856, 1.442695
        %v3859 = vpow.pop %v3858
        %v3860 = vmul.f32 %v3857, 1.442695
        %v3861 = vpow.pop %v3860
        %v3862 = vsel %vm1279, %v3859, 0.0
        %3863 = vadd.xlane.f32.xlu0 %v3862
        %v3864 = vpop.xlane.xlu0 %3863
        %v3865 = vsel %vm1279, %v3861, 0.0
        %3866 = vadd.xlane.f32.xlu0 %v3865
        %v3867 = vpop.xlane.xlu0 %3866
        %v3868 = vrcp.pop %v3864
        %v3869 = vrcp.pop %v3867
        %v3870 = vmul.f32 %v3859, %v3868
        %v3871 = vmul.f32 %v3861, %v3869
        %v3872 = vpack.c.bf16 %v3871, %v3870
        %3873 = vrot.lane.b32.xlu0 %v3740, 64
        %v3874 = vpop.permute.xlu0 %3873
        %v3877 = vsel %vm1279, %v3872, 0
        %3879 = vmatpush.bf16.msra.mxu0 0
        %3880 = vmatpush.bf16.msra.mxu0 0
        %3881 = vmatpush.bf16.msra.mxu0 0
        %3882 = vmatpush.bf16.msra.mxu0 0
        %3883 = vmatpush.bf16.msra.mxu0 0
        %3884 = vmatpush.bf16.msra.mxu0 0
        %3885 = vmatpush.bf16.msra.mxu0 0
        %3886 = vmatpush.bf16.msra.mxu0 %v3874
        %3887 = vmatmul.bf16.gmra.mxu0 %v3877
        %v3888 = vpop.f32.mrf.mxu0
        %v3889 = vadd.f32 0.0, %v3888
        %v3890 = vpop.f32.mrf.mxu0
        %v3891 = vadd.f32 0.0, %v3890
        %3892 = vdwg.mxu0
        %3893 = vrot.lane.b32.xlu0 %v3687, 32
        %v3894 = vpop.permute.xlu0 %3893
        %3895 = vrot.lane.b32.xlu0 %v3692, 32
        %v3896 = vpop.permute.xlu0 %3895
        %v3898 = vsel %vm1258, %v3894, 0
        %v3901 = vsel %vm1258, %v3896, 0
        %3903 = vmatpush.bf16.xpose.msra.mxu0 0
        %3904 = vmatpush.bf16.xpose.msra.mxu0 0
        %3905 = vmatpush.bf16.xpose.msra.mxu0 0
        %3906 = vmatpush.bf16.xpose.msra.mxu0 0
        %3907 = vmatpush.bf16.xpose.msra.mxu0 0
        %3908 = vmatpush.bf16.xpose.msra.mxu0 0
        %3909 = vmatpush.bf16.xpose.msra.mxu0 0
        %3910 = vmatpush.bf16.xpose.msra.mxu0 %v3901
        %3911 = vmatmul.bf16.gmra.mxu0 %v3898
        %v3912 = vpop.f32.mrf.mxu0
        %v3913 = vadd.f32 %v556, %v3912
        %v3914 = vpop.f32.mrf.mxu0
        %v3915 = vadd.f32 %v556, %v3914
        %3916 = vdwg.mxu0
        %v3917 = vsel %vm1279, %v3913, -inf
        %3918 = vmax.xlane.f32.xlu0 %v3917
        %v3919 = vpop.xlane.xlu0 %3918
        %v3920 = vsel %vm1279, %v3915, -inf
        %3921 = vmax.xlane.f32.xlu0 %v3920
        %v3922 = vpop.xlane.xlu0 %3921
        %v3923 = vsub.f32 %v3913, %v3919
        %v3924 = vsub.f32 %v3915, %v3922
        %v3925 = vmul.f32 %v3923, 1.442695
        %v3926 = vpow.pop %v3925
        %v3927 = vmul.f32 %v3924, 1.442695
        %v3928 = vpow.pop %v3927
        %v3929 = vsel %vm1279, %v3926, 0.0
        %3930 = vadd.xlane.f32.xlu0 %v3929
        %v3931 = vpop.xlane.xlu0 %3930
        %v3932 = vsel %vm1279, %v3928, 0.0
        %3933 = vadd.xlane.f32.xlu0 %v3932
        %v3934 = vpop.xlane.xlu0 %3933
        %v3935 = vrcp.pop %v3931
        %v3936 = vrcp.pop %v3934
        %v3937 = vmul.f32 %v3926, %v3935
        %v3938 = vmul.f32 %v3928, %v3936
        %v3939 = vpack.c.bf16 %v3938, %v3937
        %3940 = vrot.lane.b32.xlu0 %v3740, 32
        %v3941 = vpop.permute.xlu0 %3940
        %v3944 = vsel %vm1279, %v3939, 0
        %3946 = vmatpush.bf16.msra.mxu0 0
        %3947 = vmatpush.bf16.msra.mxu0 0
        %3948 = vmatpush.bf16.msra.mxu0 0
        %3949 = vmatpush.bf16.msra.mxu0 0
        %3950 = vmatpush.bf16.msra.mxu0 0
        %3951 = vmatpush.bf16.msra.mxu0 0
        %3952 = vmatpush.bf16.msra.mxu0 0
        %3953 = vmatpush.bf16.msra.mxu0 %v3941
        %3954 = vmatmul.bf16.gmra.mxu0 %v3944
        %v3955 = vpop.f32.mrf.mxu0
        %v3956 = vadd.f32 0.0, %v3955
        %v3957 = vpop.f32.mrf.mxu0
        %v3958 = vadd.f32 0.0, %v3957
        %3959 = vdwg.mxu0
        %3962 = vrot.lane.b32.xlu0 %v3822, 32
        %v3963 = vpop.permute.xlu0 %3962
        %3964 = vrot.lane.b32.xlu0 %v3824, 32
        %v3965 = vpop.permute.xlu0 %3964
        %3970 = vrot.lane.b32.xlu0 %v3889, 64
        %v3971 = vpop.permute.xlu0 %3970
        %3972 = vrot.lane.b32.xlu0 %v3891, 64
        %v3973 = vpop.permute.xlu0 %3972
        %3978 = vrot.lane.b32.xlu0 %v3956, 96
        %v3979 = vpop.permute.xlu0 %3978
        %3980 = vrot.lane.b32.xlu0 %v3958, 96
        %v3981 = vpop.permute.xlu0 %3980
        %v3984 = vsel %vm1258, %v3755, %v3963
        %v3985 = vsel %vm1258, %v3757, %v3965
        %v3986 = vsel %vm1553, %v3984, %v3971
        %v3987 = vsel %vm1553, %v3985, %v3973
        %v3988 = vsel %vm1556, %v3986, %v3979
        %v3989 = vsel %vm1556, %v3987, %v3981
        %v3990 = vpack.c.bf16 %v3989, %v3988
        %3991 = vmatpush.bf16.msra.mxu0 %v1622
        %3992 = vmatpush.bf16.msra.mxu0 %v1620
        %3993 = vmatpush.bf16.msra.mxu0 %v1618
        %3994 = vmatpush.bf16.msra.mxu0 %v1616
        %3995 = vmatpush.bf16.msra.mxu0 %v1614
        %3996 = vmatpush.bf16.msra.mxu0 %v1612
        %3997 = vmatpush.bf16.msra.mxu0 %v1610
        %3998 = vmatpush.bf16.msra.mxu0 %v1608
        %3999 = vmatmul.bf16.gmra.mxu0 %v3990
        %v4000 = vpop.f32.mrf.mxu0
        %v4001 = vadd.f32 %v3587, %v4000
        %v4002 = vpop.f32.mrf.mxu0
        %v4003 = vadd.f32 %v3589, %v4002
        %4004 = vdwg.mxu0
        %4005 = vmatpush.bf16.msra.mxu0 %v1623
        %4006 = vmatpush.bf16.msra.mxu0 %v1621
        %4007 = vmatpush.bf16.msra.mxu0 %v1619
        %4008 = vmatpush.bf16.msra.mxu0 %v1617
        %4009 = vmatpush.bf16.msra.mxu0 %v1615
        %4010 = vmatpush.bf16.msra.mxu0 %v1613
        %4011 = vmatpush.bf16.msra.mxu0 %v1611
        %4012 = vmatpush.bf16.msra.mxu0 %v1609
        %4013 = vmatmul.bf16.gmra.mxu0 %v3990
        %v4014 = vpop.f32.mrf.mxu0
        %v4015 = vadd.f32 %v3588, %v4014
        %v4016 = vpop.f32.mrf.mxu0
        %v4017 = vadd.f32 %v3590, %v4016
        %4018 = vdwg.mxu0
        %v4019 = vadd.f32 %v4001, %v4015
        %4020 = vadd.xlane.f32.xlu0 %v4019
        %v4021 = vpop.xlane.xlu0 %4020
        %v4022 = vadd.f32 %v4003, %v4017
        %4023 = vadd.xlane.f32.xlu0 %v4022
        %v4024 = vpop.xlane.xlu0 %4023
        %v4025 = vmul.f32 %v4021, %v1680
        %v4026 = vmul.f32 %v4024, %v1680
        %v4027 = vsub.f32 %v4001, %v4025
        %v4028 = vsub.f32 %v4015, %v4025
        %v4029 = vsub.f32 %v4003, %v4026
        %v4030 = vsub.f32 %v4017, %v4026
        %v4031 = vmul.f32 %v4027, %v4027
        %v4032 = vmul.f32 %v4028, %v4028
        %v4033 = vmul.f32 %v4029, %v4029
        %v4034 = vmul.f32 %v4030, %v4030
        %v4035 = vadd.f32 %v4031, %v4032
        %4036 = vadd.xlane.f32.xlu0 %v4035
        %v4037 = vpop.xlane.xlu0 %4036
        %v4038 = vadd.f32 %v4033, %v4034
        %4039 = vadd.xlane.f32.xlu0 %v4038
        %v4040 = vpop.xlane.xlu0 %4039
        %v4041 = vmul.f32 %v4037, %v1680
        %v4042 = vmul.f32 %v4040, %v1680
        %v4043 = vadd.f32 %v4041, 1e-05
        %v4044 = vadd.f32 %v4042, 1e-05
        %v4045 = vrsqrt.pop %v4043
        %v4046 = vmul.f32 %v4045, %v4043
        %v4047 = vmul.f32 %v4046, %v4045
        %v4048 = vmul.f32 0.5, %v4047
        %v4049 = vsub.f32 1.5, %v4048
        %v4050 = vmul.f32 %v4045, %v4049
        %vm4051 = vweird.f32 %v4043
        %vm4052 = vweird.f32 %v4045
        %vm4053 = vmor %vm4051, %vm4052
        %v4054 = vsel %vm4053, %v4045, %v4050
        %v4055 = vrsqrt.pop %v4044
        %v4056 = vmul.f32 %v4055, %v4044
        %v4057 = vmul.f32 %v4056, %v4055
        %v4058 = vmul.f32 0.5, %v4057
        %v4059 = vsub.f32 1.5, %v4058
        %v4060 = vmul.f32 %v4055, %v4059
        %vm4061 = vweird.f32 %v4044
        %vm4062 = vweird.f32 %v4055
        %vm4063 = vmor %vm4061, %vm4062
        %v4064 = vsel %vm4063, %v4055, %v4060
        %v4065 = vmul.f32 %v4027, %v4054
        %v4066 = vmul.f32 %v4028, %v4054
        %v4067 = vmul.f32 %v4029, %v4064
        %v4068 = vmul.f32 %v4030, %v4064
        %v4069 = vmul.f32 %v4065, %v1726
        %v4070 = vmul.f32 %v4066, %v1727
        %v4071 = vmul.f32 %v4067, %v1726
        %v4072 = vmul.f32 %v4068, %v1727
        %v4073 = vadd.f32 %v4069, %v1735
        %v4074 = vadd.f32 %v4070, %v1736
        %v4075 = vadd.f32 %v4071, %v1735
        %v4076 = vadd.f32 %v4072, %v1736
        %v4077 = vpack.c.bf16 %v4075, %v4073
        %v4078 = vpack.c.bf16 %v4076, %v4074
        %4079 = vmatpush.bf16.msra.mxu0 %v2202
        %4080 = vmatpush.bf16.msra.mxu0 %v2194
        %4081 = vmatpush.bf16.msra.mxu0 %v2186
        %4082 = vmatpush.bf16.msra.mxu0 %v2178
        %4083 = vmatpush.bf16.msra.mxu0 %v2170
        %4084 = vmatpush.bf16.msra.mxu0 %v2162
        %4085 = vmatpush.bf16.msra.mxu0 %v2154
        %4086 = vmatpush.bf16.msra.mxu0 %v2146
        %4087 = vmatmul.bf16.gmra.mxu0 %v4077
        %v4088 = vpop.f32.mrf.mxu0
        %v4089 = vadd.f32 %v1746, %v4088
        %v4090 = vpop.f32.mrf.mxu0
        %v4091 = vadd.f32 %v1746, %v4090
        %4092 = vdwg.mxu0
        %4093 = vmatpush.bf16.msra.mxu0 %v2266
        %4094 = vmatpush.bf16.msra.mxu0 %v2258
        %4095 = vmatpush.bf16.msra.mxu0 %v2250
        %4096 = vmatpush.bf16.msra.mxu0 %v2242
        %4097 = vmatpush.bf16.msra.mxu0 %v2234
        %4098 = vmatpush.bf16.msra.mxu0 %v2226
        %4099 = vmatpush.bf16.msra.mxu0 %v2218
        %4100 = vmatpush.bf16.msra.mxu0 %v2210
        %4101 = vmatmul.bf16.gmra.mxu0 %v4078
        %v4102 = vpop.f32.mrf.mxu0
        %v4103 = vadd.f32 %v4089, %v4102
        %v4104 = vpop.f32.mrf.mxu0
        %v4105 = vadd.f32 %v4091, %v4104
        %4106 = vdwg.mxu0
        %4107 = vmatpush.bf16.msra.mxu0 %v2203
        %4108 = vmatpush.bf16.msra.mxu0 %v2195
        %4109 = vmatpush.bf16.msra.mxu0 %v2187
        %4110 = vmatpush.bf16.msra.mxu0 %v2179
        %4111 = vmatpush.bf16.msra.mxu0 %v2171
        %4112 = vmatpush.bf16.msra.mxu0 %v2163
        %4113 = vmatpush.bf16.msra.mxu0 %v2155
        %4114 = vmatpush.bf16.msra.mxu0 %v2147
        %4115 = vmatmul.bf16.gmra.mxu0 %v4077
        %v4116 = vpop.f32.mrf.mxu0
        %v4117 = vadd.f32 %v1747, %v4116
        %v4118 = vpop.f32.mrf.mxu0
        %v4119 = vadd.f32 %v1747, %v4118
        %4120 = vdwg.mxu0
        %4121 = vmatpush.bf16.msra.mxu0 %v2267
        %4122 = vmatpush.bf16.msra.mxu0 %v2259
        %4123 = vmatpush.bf16.msra.mxu0 %v2251
        %4124 = vmatpush.bf16.msra.mxu0 %v2243
        %4125 = vmatpush.bf16.msra.mxu0 %v2235
        %4126 = vmatpush.bf16.msra.mxu0 %v2227
        %4127 = vmatpush.bf16.msra.mxu0 %v2219
        %4128 = vmatpush.bf16.msra.mxu0 %v2211
        %4129 = vmatmul.bf16.gmra.mxu0 %v4078
        %v4130 = vpop.f32.mrf.mxu0
        %v4131 = vadd.f32 %v4117, %v4130
        %v4132 = vpop.f32.mrf.mxu0
        %v4133 = vadd.f32 %v4119, %v4132
        %4134 = vdwg.mxu0
        %4135 = vmatpush.bf16.msra.mxu0 %v2204
        %4136 = vmatpush.bf16.msra.mxu0 %v2196
        %4137 = vmatpush.bf16.msra.mxu0 %v2188
        %4138 = vmatpush.bf16.msra.mxu0 %v2180
        %4139 = vmatpush.bf16.msra.mxu0 %v2172
        %4140 = vmatpush.bf16.msra.mxu0 %v2164
        %4141 = vmatpush.bf16.msra.mxu0 %v2156
        %4142 = vmatpush.bf16.msra.mxu0 %v2148
        %4143 = vmatmul.bf16.gmra.mxu0 %v4077
        %v4144 = vpop.f32.mrf.mxu0
        %v4145 = vadd.f32 %v1748, %v4144
        %v4146 = vpop.f32.mrf.mxu0
        %v4147 = vadd.f32 %v1748, %v4146
        %4148 = vdwg.mxu0
        %4149 = vmatpush.bf16.msra.mxu0 %v2268
        %4150 = vmatpush.bf16.msra.mxu0 %v2260
        %4151 = vmatpush.bf16.msra.mxu0 %v2252
        %4152 = vmatpush.bf16.msra.mxu0 %v2244
        %4153 = vmatpush.bf16.msra.mxu0 %v2236
        %4154 = vmatpush.bf16.msra.mxu0 %v2228
        %4155 = vmatpush.bf16.msra.mxu0 %v2220
        %4156 = vmatpush.bf16.msra.mxu0 %v2212
        %4157 = vmatmul.bf16.gmra.mxu0 %v4078
        %v4158 = vpop.f32.mrf.mxu0
        %v4159 = vadd.f32 %v4145, %v4158
        %v4160 = vpop.f32.mrf.mxu0
        %v4161 = vadd.f32 %v4147, %v4160
        %4162 = vdwg.mxu0
        %4163 = vmatpush.bf16.msra.mxu0 %v2205
        %4164 = vmatpush.bf16.msra.mxu0 %v2197
        %4165 = vmatpush.bf16.msra.mxu0 %v2189
        %4166 = vmatpush.bf16.msra.mxu0 %v2181
        %4167 = vmatpush.bf16.msra.mxu0 %v2173
        %4168 = vmatpush.bf16.msra.mxu0 %v2165
        %4169 = vmatpush.bf16.msra.mxu0 %v2157
        %4170 = vmatpush.bf16.msra.mxu0 %v2149
        %4171 = vmatmul.bf16.gmra.mxu0 %v4077
        %v4172 = vpop.f32.mrf.mxu0
        %v4173 = vadd.f32 %v1749, %v4172
        %v4174 = vpop.f32.mrf.mxu0
        %v4175 = vadd.f32 %v1749, %v4174
        %4176 = vdwg.mxu0
        %4177 = vmatpush.bf16.msra.mxu0 %v2269
        %4178 = vmatpush.bf16.msra.mxu0 %v2261
        %4179 = vmatpush.bf16.msra.mxu0 %v2253
        %4180 = vmatpush.bf16.msra.mxu0 %v2245
        %4181 = vmatpush.bf16.msra.mxu0 %v2237
        %4182 = vmatpush.bf16.msra.mxu0 %v2229
        %4183 = vmatpush.bf16.msra.mxu0 %v2221
        %4184 = vmatpush.bf16.msra.mxu0 %v2213
        %4185 = vmatmul.bf16.gmra.mxu0 %v4078
        %v4186 = vpop.f32.mrf.mxu0
        %v4187 = vadd.f32 %v4173, %v4186
        %v4188 = vpop.f32.mrf.mxu0
        %v4189 = vadd.f32 %v4175, %v4188
        %4190 = vdwg.mxu0
        %4191 = vmatpush.bf16.msra.mxu0 %v2206
        %4192 = vmatpush.bf16.msra.mxu0 %v2198
        %4193 = vmatpush.bf16.msra.mxu0 %v2190
        %4194 = vmatpush.bf16.msra.mxu0 %v2182
        %4195 = vmatpush.bf16.msra.mxu0 %v2174
        %4196 = vmatpush.bf16.msra.mxu0 %v2166
        %4197 = vmatpush.bf16.msra.mxu0 %v2158
        %4198 = vmatpush.bf16.msra.mxu0 %v2150
        %4199 = vmatmul.bf16.gmra.mxu0 %v4077
        %v4200 = vpop.f32.mrf.mxu0
        %v4201 = vadd.f32 %v1750, %v4200
        %v4202 = vpop.f32.mrf.mxu0
        %v4203 = vadd.f32 %v1750, %v4202
        %4204 = vdwg.mxu0
        %4205 = vmatpush.bf16.msra.mxu0 %v2270
        %4206 = vmatpush.bf16.msra.mxu0 %v2262
        %4207 = vmatpush.bf16.msra.mxu0 %v2254
        %4208 = vmatpush.bf16.msra.mxu0 %v2246
        %4209 = vmatpush.bf16.msra.mxu0 %v2238
        %4210 = vmatpush.bf16.msra.mxu0 %v2230
        %4211 = vmatpush.bf16.msra.mxu0 %v2222
        %4212 = vmatpush.bf16.msra.mxu0 %v2214
        %4213 = vmatmul.bf16.gmra.mxu0 %v4078
        %v4214 = vpop.f32.mrf.mxu0
        %v4215 = vadd.f32 %v4201, %v4214
        %v4216 = vpop.f32.mrf.mxu0
        %v4217 = vadd.f32 %v4203, %v4216
        %4218 = vdwg.mxu0
        %4219 = vmatpush.bf16.msra.mxu0 %v2207
        %4220 = vmatpush.bf16.msra.mxu0 %v2199
        %4221 = vmatpush.bf16.msra.mxu0 %v2191
        %4222 = vmatpush.bf16.msra.mxu0 %v2183
        %4223 = vmatpush.bf16.msra.mxu0 %v2175
        %4224 = vmatpush.bf16.msra.mxu0 %v2167
        %4225 = vmatpush.bf16.msra.mxu0 %v2159
        %4226 = vmatpush.bf16.msra.mxu0 %v2151
        %4227 = vmatmul.bf16.gmra.mxu0 %v4077
        %v4228 = vpop.f32.mrf.mxu0
        %v4229 = vadd.f32 %v1751, %v4228
        %v4230 = vpop.f32.mrf.mxu0
        %v4231 = vadd.f32 %v1751, %v4230
        %4232 = vdwg.mxu0
        %4233 = vmatpush.bf16.msra.mxu0 %v2271
        %4234 = vmatpush.bf16.msra.mxu0 %v2263
        %4235 = vmatpush.bf16.msra.mxu0 %v2255
        %4236 = vmatpush.bf16.msra.mxu0 %v2247
        %4237 = vmatpush.bf16.msra.mxu0 %v2239
        %4238 = vmatpush.bf16.msra.mxu0 %v2231
        %4239 = vmatpush.bf16.msra.mxu0 %v2223
        %4240 = vmatpush.bf16.msra.mxu0 %v2215
        %4241 = vmatmul.bf16.gmra.mxu0 %v4078
        %v4242 = vpop.f32.mrf.mxu0
        %v4243 = vadd.f32 %v4229, %v4242
        %v4244 = vpop.f32.mrf.mxu0
        %v4245 = vadd.f32 %v4231, %v4244
        %4246 = vdwg.mxu0
        %4247 = vmatpush.bf16.msra.mxu0 %v2208
        %4248 = vmatpush.bf16.msra.mxu0 %v2200
        %4249 = vmatpush.bf16.msra.mxu0 %v2192
        %4250 = vmatpush.bf16.msra.mxu0 %v2184
        %4251 = vmatpush.bf16.msra.mxu0 %v2176
        %4252 = vmatpush.bf16.msra.mxu0 %v2168
        %4253 = vmatpush.bf16.msra.mxu0 %v2160
        %4254 = vmatpush.bf16.msra.mxu0 %v2152
        %4255 = vmatmul.bf16.gmra.mxu0 %v4077
        %v4256 = vpop.f32.mrf.mxu0
        %v4257 = vadd.f32 %v1752, %v4256
        %v4258 = vpop.f32.mrf.mxu0
        %v4259 = vadd.f32 %v1752, %v4258
        %4260 = vdwg.mxu0
        %4261 = vmatpush.bf16.msra.mxu0 %v2272
        %4262 = vmatpush.bf16.msra.mxu0 %v2264
        %4263 = vmatpush.bf16.msra.mxu0 %v2256
        %4264 = vmatpush.bf16.msra.mxu0 %v2248
        %4265 = vmatpush.bf16.msra.mxu0 %v2240
        %4266 = vmatpush.bf16.msra.mxu0 %v2232
        %4267 = vmatpush.bf16.msra.mxu0 %v2224
        %4268 = vmatpush.bf16.msra.mxu0 %v2216
        %4269 = vmatmul.bf16.gmra.mxu0 %v4078
        %v4270 = vpop.f32.mrf.mxu0
        %v4271 = vadd.f32 %v4257, %v4270
        %v4272 = vpop.f32.mrf.mxu0
        %v4273 = vadd.f32 %v4259, %v4272
        %4274 = vdwg.mxu0
        %4275 = vmatpush.bf16.msra.mxu0 %v2209
        %4276 = vmatpush.bf16.msra.mxu0 %v2201
        %4277 = vmatpush.bf16.msra.mxu0 %v2193
        %4278 = vmatpush.bf16.msra.mxu0 %v2185
        %4279 = vmatpush.bf16.msra.mxu0 %v2177
        %4280 = vmatpush.bf16.msra.mxu0 %v2169
        %4281 = vmatpush.bf16.msra.mxu0 %v2161
        %4282 = vmatpush.bf16.msra.mxu0 %v2153
        %4283 = vmatmul.bf16.gmra.mxu0 %v4077
        %v4284 = vpop.f32.mrf.mxu0
        %v4285 = vadd.f32 %v1753, %v4284
        %v4286 = vpop.f32.mrf.mxu0
        %v4287 = vadd.f32 %v1753, %v4286
        %4288 = vdwg.mxu0
        %4289 = vmatpush.bf16.msra.mxu0 %v2273
        %4290 = vmatpush.bf16.msra.mxu0 %v2265
        %4291 = vmatpush.bf16.msra.mxu0 %v2257
        %4292 = vmatpush.bf16.msra.mxu0 %v2249
        %4293 = vmatpush.bf16.msra.mxu0 %v2241
        %4294 = vmatpush.bf16.msra.mxu0 %v2233
        %4295 = vmatpush.bf16.msra.mxu0 %v2225
        %4296 = vmatpush.bf16.msra.mxu0 %v2217
        %4297 = vmatmul.bf16.gmra.mxu0 %v4078
        %v4298 = vpop.f32.mrf.mxu0
        %v4299 = vadd.f32 %v4285, %v4298
        %v4300 = vpop.f32.mrf.mxu0
        %v4301 = vadd.f32 %v4287, %v4300
        %4302 = vdwg.mxu0
        %v4303 = vmax.f32 %v4103, 0.0
        %v4304 = vmax.f32 %v4131, 0.0
        %v4305 = vmax.f32 %v4159, 0.0
        %v4306 = vmax.f32 %v4187, 0.0
        %v4307 = vmax.f32 %v4215, 0.0
        %v4308 = vmax.f32 %v4243, 0.0
        %v4309 = vmax.f32 %v4271, 0.0
        %v4310 = vmax.f32 %v4299, 0.0
        %v4311 = vmax.f32 %v4105, 0.0
        %v4312 = vmax.f32 %v4133, 0.0
        %v4313 = vmax.f32 %v4161, 0.0
        %v4314 = vmax.f32 %v4189, 0.0
        %v4315 = vmax.f32 %v4217, 0.0
        %v4316 = vmax.f32 %v4245, 0.0
        %v4317 = vmax.f32 %v4273, 0.0
        %v4318 = vmax.f32 %v4301, 0.0
        %v4319 = vpack.c.bf16 %v4311, %v4303
        %v4320 = vpack.c.bf16 %v4312, %v4304
        %v4321 = vpack.c.bf16 %v4313, %v4305
        %v4322 = vpack.c.bf16 %v4314, %v4306
        %v4323 = vpack.c.bf16 %v4315, %v4307
        %v4324 = vpack.c.bf16 %v4316, %v4308
        %v4325 = vpack.c.bf16 %v4317, %v4309
        %v4326 = vpack.c.bf16 %v4318, %v4310
        %4327 = vmatpush.bf16.msra.mxu0 %v3053
        %4328 = vmatpush.bf16.msra.mxu0 %v3051
        %4329 = vmatpush.bf16.msra.mxu0 %v3049
        %4330 = vmatpush.bf16.msra.mxu0 %v3047
        %4331 = vmatpush.bf16.msra.mxu0 %v3045
        %4332 = vmatpush.bf16.msra.mxu0 %v3043
        %4333 = vmatpush.bf16.msra.mxu0 %v3041
        %4334 = vmatpush.bf16.msra.mxu0 %v3039
        %4335 = vmatmul.bf16.gmra.mxu0 %v4319
        %v4336 = vpop.f32.mrf.mxu0
        %v4337 = vadd.f32 %v2651, %v4336
        %v4338 = vpop.f32.mrf.mxu0
        %v4339 = vadd.f32 %v2651, %v4338
        %4340 = vdwg.mxu0
        %4341 = vmatpush.bf16.msra.mxu0 %v3069
        %4342 = vmatpush.bf16.msra.mxu0 %v3067
        %4343 = vmatpush.bf16.msra.mxu0 %v3065
        %4344 = vmatpush.bf16.msra.mxu0 %v3063
        %4345 = vmatpush.bf16.msra.mxu0 %v3061
        %4346 = vmatpush.bf16.msra.mxu0 %v3059
        %4347 = vmatpush.bf16.msra.mxu0 %v3057
        %4348 = vmatpush.bf16.msra.mxu0 %v3055
        %4349 = vmatmul.bf16.gmra.mxu0 %v4320
        %v4350 = vpop.f32.mrf.mxu0
        %v4351 = vadd.f32 %v4337, %v4350
        %v4352 = vpop.f32.mrf.mxu0
        %v4353 = vadd.f32 %v4339, %v4352
        %4354 = vdwg.mxu0
        %4355 = vmatpush.bf16.msra.mxu0 %v3085
        %4356 = vmatpush.bf16.msra.mxu0 %v3083
        %4357 = vmatpush.bf16.msra.mxu0 %v3081
        %4358 = vmatpush.bf16.msra.mxu0 %v3079
        %4359 = vmatpush.bf16.msra.mxu0 %v3077
        %4360 = vmatpush.bf16.msra.mxu0 %v3075
        %4361 = vmatpush.bf16.msra.mxu0 %v3073
        %4362 = vmatpush.bf16.msra.mxu0 %v3071
        %4363 = vmatmul.bf16.gmra.mxu0 %v4321
        %v4364 = vpop.f32.mrf.mxu0
        %v4365 = vadd.f32 %v4351, %v4364
        %v4366 = vpop.f32.mrf.mxu0
        %v4367 = vadd.f32 %v4353, %v4366
        %4368 = vdwg.mxu0
        %4369 = vmatpush.bf16.msra.mxu0 %v3101
        %4370 = vmatpush.bf16.msra.mxu0 %v3099
        %4371 = vmatpush.bf16.msra.mxu0 %v3097
        %4372 = vmatpush.bf16.msra.mxu0 %v3095
        %4373 = vmatpush.bf16.msra.mxu0 %v3093
        %4374 = vmatpush.bf16.msra.mxu0 %v3091
        %4375 = vmatpush.bf16.msra.mxu0 %v3089
        %4376 = vmatpush.bf16.msra.mxu0 %v3087
        %4377 = vmatmul.bf16.gmra.mxu0 %v4322
        %v4378 = vpop.f32.mrf.mxu0
        %v4379 = vadd.f32 %v4365, %v4378
        %v4380 = vpop.f32.mrf.mxu0
        %v4381 = vadd.f32 %v4367, %v4380
        %4382 = vdwg.mxu0
        %4383 = vmatpush.bf16.msra.mxu0 %v3117
        %4384 = vmatpush.bf16.msra.mxu0 %v3115
        %4385 = vmatpush.bf16.msra.mxu0 %v3113
        %4386 = vmatpush.bf16.msra.mxu0 %v3111
        %4387 = vmatpush.bf16.msra.mxu0 %v3109
        %4388 = vmatpush.bf16.msra.mxu0 %v3107
        %4389 = vmatpush.bf16.msra.mxu0 %v3105
        %4390 = vmatpush.bf16.msra.mxu0 %v3103
        %4391 = vmatmul.bf16.gmra.mxu0 %v4323
        %v4392 = vpop.f32.mrf.mxu0
        %v4393 = vadd.f32 %v4379, %v4392
        %v4394 = vpop.f32.mrf.mxu0
        %v4395 = vadd.f32 %v4381, %v4394
        %4396 = vdwg.mxu0
        %4397 = vmatpush.bf16.msra.mxu0 %v3133
        %4398 = vmatpush.bf16.msra.mxu0 %v3131
        %4399 = vmatpush.bf16.msra.mxu0 %v3129
        %4400 = vmatpush.bf16.msra.mxu0 %v3127
        %4401 = vmatpush.bf16.msra.mxu0 %v3125
        %4402 = vmatpush.bf16.msra.mxu0 %v3123
        %4403 = vmatpush.bf16.msra.mxu0 %v3121
        %4404 = vmatpush.bf16.msra.mxu0 %v3119
        %4405 = vmatmul.bf16.gmra.mxu0 %v4324
        %v4406 = vpop.f32.mrf.mxu0
        %v4407 = vadd.f32 %v4393, %v4406
        %v4408 = vpop.f32.mrf.mxu0
        %v4409 = vadd.f32 %v4395, %v4408
        %4410 = vdwg.mxu0
        %4411 = vmatpush.bf16.msra.mxu0 %v3149
        %4412 = vmatpush.bf16.msra.mxu0 %v3147
        %4413 = vmatpush.bf16.msra.mxu0 %v3145
        %4414 = vmatpush.bf16.msra.mxu0 %v3143
        %4415 = vmatpush.bf16.msra.mxu0 %v3141
        %4416 = vmatpush.bf16.msra.mxu0 %v3139
        %4417 = vmatpush.bf16.msra.mxu0 %v3137
        %4418 = vmatpush.bf16.msra.mxu0 %v3135
        %4419 = vmatmul.bf16.gmra.mxu0 %v4325
        %v4420 = vpop.f32.mrf.mxu0
        %v4421 = vadd.f32 %v4407, %v4420
        %v4422 = vpop.f32.mrf.mxu0
        %v4423 = vadd.f32 %v4409, %v4422
        %4424 = vdwg.mxu0
        %4425 = vmatpush.bf16.msra.mxu0 %v3165
        %4426 = vmatpush.bf16.msra.mxu0 %v3163
        %4427 = vmatpush.bf16.msra.mxu0 %v3161
        %4428 = vmatpush.bf16.msra.mxu0 %v3159
        %4429 = vmatpush.bf16.msra.mxu0 %v3157
        %4430 = vmatpush.bf16.msra.mxu0 %v3155
        %4431 = vmatpush.bf16.msra.mxu0 %v3153
        %4432 = vmatpush.bf16.msra.mxu0 %v3151
        %4433 = vmatmul.bf16.gmra.mxu0 %v4326
        %v4434 = vpop.f32.mrf.mxu0
        %v4435 = vadd.f32 %v4421, %v4434
        %v4436 = vpop.f32.mrf.mxu0
        %v4437 = vadd.f32 %v4423, %v4436
        %4438 = vdwg.mxu0
        %4439 = vmatpush.bf16.msra.mxu0 %v3054
        %4440 = vmatpush.bf16.msra.mxu0 %v3052
        %4441 = vmatpush.bf16.msra.mxu0 %v3050
        %4442 = vmatpush.bf16.msra.mxu0 %v3048
        %4443 = vmatpush.bf16.msra.mxu0 %v3046
        %4444 = vmatpush.bf16.msra.mxu0 %v3044
        %4445 = vmatpush.bf16.msra.mxu0 %v3042
        %4446 = vmatpush.bf16.msra.mxu0 %v3040
        %4447 = vmatmul.bf16.gmra.mxu0 %v4319
        %v4448 = vpop.f32.mrf.mxu0
        %v4449 = vadd.f32 %v2652, %v4448
        %v4450 = vpop.f32.mrf.mxu0
        %v4451 = vadd.f32 %v2652, %v4450
        %4452 = vdwg.mxu0
        %4453 = vmatpush.bf16.msra.mxu0 %v3070
        %4454 = vmatpush.bf16.msra.mxu0 %v3068
        %4455 = vmatpush.bf16.msra.mxu0 %v3066
        %4456 = vmatpush.bf16.msra.mxu0 %v3064
        %4457 = vmatpush.bf16.msra.mxu0 %v3062
        %4458 = vmatpush.bf16.msra.mxu0 %v3060
        %4459 = vmatpush.bf16.msra.mxu0 %v3058
        %4460 = vmatpush.bf16.msra.mxu0 %v3056
        %4461 = vmatmul.bf16.gmra.mxu0 %v4320
        %v4462 = vpop.f32.mrf.mxu0
        %v4463 = vadd.f32 %v4449, %v4462
        %v4464 = vpop.f32.mrf.mxu0
        %v4465 = vadd.f32 %v4451, %v4464
        %4466 = vdwg.mxu0
        %4467 = vmatpush.bf16.msra.mxu0 %v3086
        %4468 = vmatpush.bf16.msra.mxu0 %v3084
        %4469 = vmatpush.bf16.msra.mxu0 %v3082
        %4470 = vmatpush.bf16.msra.mxu0 %v3080
        %4471 = vmatpush.bf16.msra.mxu0 %v3078
        %4472 = vmatpush.bf16.msra.mxu0 %v3076
        %4473 = vmatpush.bf16.msra.mxu0 %v3074
        %4474 = vmatpush.bf16.msra.mxu0 %v3072
        %4475 = vmatmul.bf16.gmra.mxu0 %v4321
        %v4476 = vpop.f32.mrf.mxu0
        %v4477 = vadd.f32 %v4463, %v4476
        %v4478 = vpop.f32.mrf.mxu0
        %v4479 = vadd.f32 %v4465, %v4478
        %4480 = vdwg.mxu0
        %4481 = vmatpush.bf16.msra.mxu0 %v3102
        %4482 = vmatpush.bf16.msra.mxu0 %v3100
        %4483 = vmatpush.bf16.msra.mxu0 %v3098
        %4484 = vmatpush.bf16.msra.mxu0 %v3096
        %4485 = vmatpush.bf16.msra.mxu0 %v3094
        %4486 = vmatpush.bf16.msra.mxu0 %v3092
        %4487 = vmatpush.bf16.msra.mxu0 %v3090
        %4488 = vmatpush.bf16.msra.mxu0 %v3088
        %4489 = vmatmul.bf16.gmra.mxu0 %v4322
        %v4490 = vpop.f32.mrf.mxu0
        %v4491 = vadd.f32 %v4477, %v4490
        %v4492 = vpop.f32.mrf.mxu0
        %v4493 = vadd.f32 %v4479, %v4492
        %4494 = vdwg.mxu0
        %4495 = vmatpush.bf16.msra.mxu0 %v3118
        %4496 = vmatpush.bf16.msra.mxu0 %v3116
        %4497 = vmatpush.bf16.msra.mxu0 %v3114
        %4498 = vmatpush.bf16.msra.mxu0 %v3112
        %4499 = vmatpush.bf16.msra.mxu0 %v3110
        %4500 = vmatpush.bf16.msra.mxu0 %v3108
        %4501 = vmatpush.bf16.msra.mxu0 %v3106
        %4502 = vmatpush.bf16.msra.mxu0 %v3104
        %4503 = vmatmul.bf16.gmra.mxu0 %v4323
        %v4504 = vpop.f32.mrf.mxu0
        %v4505 = vadd.f32 %v4491, %v4504
        %v4506 = vpop.f32.mrf.mxu0
        %v4507 = vadd.f32 %v4493, %v4506
        %4508 = vdwg.mxu0
        %4509 = vmatpush.bf16.msra.mxu0 %v3134
        %4510 = vmatpush.bf16.msra.mxu0 %v3132
        %4511 = vmatpush.bf16.msra.mxu0 %v3130
        %4512 = vmatpush.bf16.msra.mxu0 %v3128
        %4513 = vmatpush.bf16.msra.mxu0 %v3126
        %4514 = vmatpush.bf16.msra.mxu0 %v3124
        %4515 = vmatpush.bf16.msra.mxu0 %v3122
        %4516 = vmatpush.bf16.msra.mxu0 %v3120
        %4517 = vmatmul.bf16.gmra.mxu0 %v4324
        %v4518 = vpop.f32.mrf.mxu0
        %v4519 = vadd.f32 %v4505, %v4518
        %v4520 = vpop.f32.mrf.mxu0
        %v4521 = vadd.f32 %v4507, %v4520
        %4522 = vdwg.mxu0
        %4523 = vmatpush.bf16.msra.mxu0 %v3150
        %4524 = vmatpush.bf16.msra.mxu0 %v3148
        %4525 = vmatpush.bf16.msra.mxu0 %v3146
        %4526 = vmatpush.bf16.msra.mxu0 %v3144
        %4527 = vmatpush.bf16.msra.mxu0 %v3142
        %4528 = vmatpush.bf16.msra.mxu0 %v3140
        %4529 = vmatpush.bf16.msra.mxu0 %v3138
        %4530 = vmatpush.bf16.msra.mxu0 %v3136
        %4531 = vmatmul.bf16.gmra.mxu0 %v4325
        %v4532 = vpop.f32.mrf.mxu0
        %v4533 = vadd.f32 %v4519, %v4532
        %v4534 = vpop.f32.mrf.mxu0
        %v4535 = vadd.f32 %v4521, %v4534
        %4536 = vdwg.mxu0
        %4537 = vmatpush.bf16.msra.mxu0 %v3166
        %4538 = vmatpush.bf16.msra.mxu0 %v3164
        %4539 = vmatpush.bf16.msra.mxu0 %v3162
        %4540 = vmatpush.bf16.msra.mxu0 %v3160
        %4541 = vmatpush.bf16.msra.mxu0 %v3158
        %4542 = vmatpush.bf16.msra.mxu0 %v3156
        %4543 = vmatpush.bf16.msra.mxu0 %v3154
        %4544 = vmatpush.bf16.msra.mxu0 %v3152
        %4545 = vmatmul.bf16.gmra.mxu0 %v4326
        %v4546 = vpop.f32.mrf.mxu0
        %v4547 = vadd.f32 %v4533, %v4546
        %v4548 = vpop.f32.mrf.mxu0
        %v4549 = vadd.f32 %v4535, %v4548
        %4550 = vdwg.mxu0
        %v4551 = vadd.f32 %v4435, %v4073
        %v4552 = vadd.f32 %v4547, %v4074
        %v4553 = vadd.f32 %v4437, %v4075
        %v4554 = vadd.f32 %v4549, %v4076
        %v4555 = vadd.f32 %v4551, %v4552
        %4556 = vadd.xlane.f32.xlu0 %v4555
        %v4557 = vpop.xlane.xlu0 %4556
        %v4558 = vadd.f32 %v4553, %v4554
        %4559 = vadd.xlane.f32.xlu0 %v4558
        %v4560 = vpop.xlane.xlu0 %4559
        %v4561 = vmul.f32 %v4557, %v1680
        %v4562 = vmul.f32 %v4560, %v1680
        %v4563 = vsub.f32 %v4551, %v4561
        %v4564 = vsub.f32 %v4552, %v4561
        %v4565 = vsub.f32 %v4553, %v4562
        %v4566 = vsub.f32 %v4554, %v4562
        %v4567 = vmul.f32 %v4563, %v4563
        %v4568 = vmul.f32 %v4564, %v4564
        %v4569 = vmul.f32 %v4565, %v4565
        %v4570 = vmul.f32 %v4566, %v4566
        %v4571 = vadd.f32 %v4567, %v4568
        %4572 = vadd.xlane.f32.xlu0 %v4571
        %v4573 = vpop.xlane.xlu0 %4572
        %v4574 = vadd.f32 %v4569, %v4570
        %4575 = vadd.xlane.f32.xlu0 %v4574
        %v4576 = vpop.xlane.xlu0 %4575
        %v4577 = vmul.f32 %v4573, %v1680
        %v4578 = vmul.f32 %v4576, %v1680
        %v4579 = vadd.f32 %v4577, 1e-06
        %v4580 = vadd.f32 %v4578, 1e-06
        %v4581 = vrsqrt.pop %v4579
        %v4582 = vmul.f32 %v4581, %v4579
        %v4583 = vmul.f32 %v4582, %v4581
        %v4584 = vmul.f32 0.5, %v4583
        %v4585 = vsub.f32 1.5, %v4584
        %v4586 = vmul.f32 %v4581, %v4585
        %vm4587 = vweird.f32 %v4579
        %vm4588 = vweird.f32 %v4581
        %vm4589 = vmor %vm4587, %vm4588
        %v4590 = vsel %vm4589, %v4581, %v4586
        %v4591 = vrsqrt.pop %v4580
        %v4592 = vmul.f32 %v4591, %v4580
        %v4593 = vmul.f32 %v4592, %v4591
        %v4594 = vmul.f32 0.5, %v4593
        %v4595 = vsub.f32 1.5, %v4594
        %v4596 = vmul.f32 %v4591, %v4595
        %vm4597 = vweird.f32 %v4580
        %vm4598 = vweird.f32 %v4591
        %vm4599 = vmor %vm4597, %vm4598
        %v4600 = vsel %vm4599, %v4591, %v4596
        %v4601 = vmul.f32 %v4563, %v4590
        %v4602 = vmul.f32 %v4564, %v4590
        %v4603 = vmul.f32 %v4565, %v4600
        %v4604 = vmul.f32 %v4566, %v4600
        %v4605 = vmul.f32 %v4601, %v3574
        %v4606 = vmul.f32 %v4602, %v3575
        %v4607 = vmul.f32 %v4603, %v3574
        %v4608 = vmul.f32 %v4604, %v3575
        %v4609 = vadd.f32 %v4605, %v3583
        %v4610 = vadd.f32 %v4606, %v3584
        %v4611 = vadd.f32 %v4607, %v3583
        %v4612 = vadd.f32 %v4608, %v3584
        %4613 = vst [vmem:[%s548] sm:$0xff] %v4609
        %4614 = vst [vmem:[%s548 + $0x8] sm:$0xff] %v4610
        %4615 = vst [vmem:[%s548 + $0x10] sm:$0xff] %v4611
        %4616 = vst [vmem:[%s548 + $0x18] sm:$0xff] %v4612
        %s4617 = sand.u32 %s304, 1
        %s4618 = scalar_lea.sflag [#allocation4], %s4617
        %s4619 = sand.u32 %s304, 1
        %s4620 = smul.addr %s4619, 32
        %s4621 = scalar_lea.vmem [#allocation14], %s4620
        // Predicated region
        $region97: #{tpu_custom_call.1} parent=67 // pred_check
          %p4622 = pneg %p314
        $region98: #{tpu_custom_call.1} parent=67 // pred_check_branch
          %4624 = sbr.rel (%p4622) target = $region100
        $region99: #{tpu_custom_call.1} parent=67 // pred_region
          %4626 = vsyncadd %s4618, 0
          %s4627 = smul.addr %s34, 4
          %s4628 = smul.addr %s4627, 8
          %s4629 = scalar_lea.hbm %s12, %s4628
          %s4630 = sshll.u32 %s4621, 4
          %s4631 = int_to_ptr.vmem [resolvable:$true] %s4630
          %s4632 = sshll.u32 %s4629, 4
          %s4633 = int_to_ptr.hbm [resolvable:$true] %s4632
          %4638 = dma.vmem_to_hbm [thread:$0]  %s4631, 512, %s4633, %s4618, 256, 256, 16
        $region100: #{tpu_custom_call.1} parent=67 // pred_fallthru
          _
      $region68: #{tpu_custom_call.1} parent=5 // pred_fallthru
        _
      %p4639 = scmp.le.s32.totalorder 2, %s29
      // Predicated region
      $region101: #{tpu_custom_call.1} parent=5 // pred_check
        %p4640 = pneg %p4639
      $region102: #{tpu_custom_call.1} parent=5 // pred_check_branch
        %4642 = sbr.rel (%p4640) target = $region104
      $region103: #{tpu_custom_call.1} parent=5 // pred_region
        %s4643 = ssub.s32 %s29, 2
        // Predicated region
        $region105: #{tpu_custom_call.1} parent=103 // pred_check
          %p4644 = pneg %p320
        $region106: #{tpu_custom_call.1} parent=103 // pred_check_branch
          %4646 = sbr.rel (%p4644) target = $region108
        $region107: #{tpu_custom_call.1} parent=103 // pred_region
          %s4647 = sand.u32 %s305, 1
          %s4648 = scalar_lea.sflag [#allocation4], %s4647
          %s4649 = sand.u32 %s305, 1
          %s4650 = smul.addr %s4649, 32
          %s4651 = scalar_lea.vmem [#allocation14], %s4650
          %4653 = dma.done %s4648, 512
        $region108: #{tpu_custom_call.1} parent=103 // pred_fallthru
          _
      $region104: #{tpu_custom_call.1} parent=5 // pred_fallthru
        _
    $region6: #{tpu_custom_call.1} parent=1 // loop_footer
      %s33 = sadd.s32 1, %s29
    $region7: #{tpu_custom_call.1} parent=1 // loop_footer_branch
      %28 = sbr.rel target = $region3
    $region8: #{tpu_custom_call.1} parent=1 // loop_exit
      _
    %4654 = vsyncpa [#allocation3], 1
    %s4655 = scalar_lea.sflag [#allocation3], 1
    %4656 = vsyncpa %s4655, 1
    %4657 = vsyncpa [#allocation6], 1
    %s4658 = scalar_lea.sflag [#allocation6], 1
    %4659 = vsyncpa %s4658, 1
    %4660 = vsyncpa [#allocation9], 1
    %4661 = vsyncpa [#allocation12], 1
    %4662 = vsyncpa [#allocation4], 1
    %s4663 = scalar_lea.sflag [#allocation4], 1
    %4664 = vsyncpa %s4663, 1

</llo_original>
